<compile_context>
chip_gen: v6e
topology: v6e:2x2x1
jax: 0.10.0
libtpu: 0.0.40
codegen_flags: <defaults>
</compile_context>

<pallas_src>
import jax
import jax.numpy as jnp
from jax.experimental import pallas as pl
from jax.experimental.pallas import tpu as pltpu

H_RAW = 750          # PyTorch hidden width
H = 768              # lane-padded hidden width (multiple of 128)
LAT_PAD = 128        # lane-aligned width of latent / mean / std / action lanes


def _round_up(x, m):
    return ((x + m - 1) // m) * m


# ----------------------------------------------------------------------------
# Kernel
# ----------------------------------------------------------------------------
def vae_kernel(s_ref, a_ref, eps_ref, amax_ref,
               we1s_ref, we1a_ref, be1_ref,
               we2_ref, be2_ref,
               wml_ref, bml_ref,
               wd1s_ref, wd1z_ref, bd1_ref,
               wd2_ref, bd2_ref,
               wd3_ref, bd3_ref,
               out_ref):
    f32 = jnp.float32
    bf16 = jnp.bfloat16

    s = s_ref[...]          # (tb, S)        f32
    a = a_ref[...]          # (tb, A)        f32
    eps = eps_ref[...]      # (tb, LAT_PAD)  f32, lanes >= L are zero

    # ---------------- encoder ----------------
    h = (jnp.dot(s.astype(bf16), we1s_ref[...], preferred_element_type=f32)
         + jnp.dot(a.astype(bf16), we1a_ref[...], preferred_element_type=f32)
         + be1_ref[...])
    h = jnp.maximum(h, 0.0)
    h = jnp.dot(h.astype(bf16), we2_ref[...], preferred_element_type=f32) + be2_ref[...]
    h = jnp.maximum(h, 0.0)

    # fused mean || log_std head (lane-aligned halves, LAT_PAD lanes each)
    ml = jnp.dot(h.astype(bf16), wml_ref[...], preferred_element_type=f32) + bml_ref[...]
    mean_full = ml[:, :LAT_PAD]                               # (tb, 128)
    std_full = jnp.exp(jnp.clip(ml[:, LAT_PAD:], -4.0, 15.0))  # (tb, 128)

    # padded lanes: mean=0, std=1, eps=0 -> z stays exactly 0 there
    z = mean_full + std_full * eps                             # (tb, 128)

    # ---------------- decoder ----------------
    d = (jnp.dot(s.astype(bf16), wd1s_ref[...], preferred_element_type=f32)
         + jnp.dot(z.astype(bf16), wd1z_ref[...], preferred_element_type=f32)
         + bd1_ref[...])
    d = jnp.maximum(d, 0.0)
    d = jnp.dot(d.astype(bf16), wd2_ref[...], preferred_element_type=f32) + bd2_ref[...]
    d = jnp.maximum(d, 0.0)
    u = jnp.dot(d.astype(bf16), wd3_ref[...], preferred_element_type=f32) + bd3_ref[...]
    u = amax_ref[...] * jnp.tanh(u)                            # (tb, 128)

    # single lane-dense output slab: [u | mean | std]  -> (tb, 384)
    out_ref[...] = jnp.concatenate([u, mean_full, std_full], axis=-1)


# ----------------------------------------------------------------------------
# Parameters (PyTorch nn.Linear default init, then padded + bf16 weights)
# ----------------------------------------------------------------------------
def _linear_init(key, fan_in, fan_out):
    kw, kb = jax.random.split(key)
    bound = float(fan_in) ** -0.5
    w = jax.random.uniform(kw, (fan_in, fan_out), jnp.float32, -bound, bound)
    b = jax.random.uniform(kb, (fan_out,), jnp.float32, -bound, bound)
    return w, b


def init_vae_params(key, state_dim, action_dim, latent_dim):
    assert latent_dim <= LAT_PAD and action_dim <= LAT_PAD
    keys = jax.random.split(key, 7)
    bf = jnp.bfloat16

    def pad_cols(w, cols):
        return jnp.pad(w, ((0, 0), (0, cols - w.shape[1])))

    def pad_rows(w, rows):
        return jnp.pad(w, ((0, rows - w.shape[0]), (0, 0)))

    def pad_bias(b, cols):
        return jnp.pad(b, (0, cols - b.shape[0]))[None, :]

    w_e1, b_e1 = _linear_init(keys[0], state_dim + action_dim, H_RAW)
    w_e2, b_e2 = _linear_init(keys[1], H_RAW, H_RAW)
    w_mu, b_mu = _linear_init(keys[2], H_RAW, latent_dim)
    w_ls, b_ls = _linear_init(keys[3], H_RAW, latent_dim)
    w_d1, b_d1 = _linear_init(keys[4], state_dim + latent_dim, H_RAW)
    w_d2, b_d2 = _linear_init(keys[5], H_RAW, H_RAW)
    w_d3, b_d3 = _linear_init(keys[6], H_RAW, action_dim)

    # encoder layer 1: split rows so state / action enter separately (no concat)
    we1s = pad_cols(w_e1[:state_dim], H).astype(bf)
    we1a = pad_cols(w_e1[state_dim:], H).astype(bf)
    be1 = pad_bias(b_e1, H)
    we2 = pad_cols(pad_rows(w_e2, H), H).astype(bf)
    be2 = pad_bias(b_e2, H)

    # fused mean || log_std head, each half padded to LAT_PAD lanes
    wml = jnp.zeros((H, 2 * LAT_PAD), jnp.float32)
    wml = wml.at[:H_RAW, :latent_dim].set(w_mu)
    wml = wml.at[:H_RAW, LAT_PAD:LAT_PAD + latent_dim].set(w_ls)
    wml = wml.astype(bf)
    bml = jnp.zeros((1, 2 * LAT_PAD), jnp.float32)
    bml = bml.at[0, :latent_dim].set(b_mu)
    bml = bml.at[0, LAT_PAD:LAT_PAD + latent_dim].set(b_ls)

    # decoder layer 1: split rows; latent half padded to LAT_PAD rows (K=128)
    wd1s = pad_cols(w_d1[:state_dim], H).astype(bf)
    wd1z = pad_cols(pad_rows(w_d1[state_dim:], LAT_PAD), H).astype(bf)
    bd1 = pad_bias(b_d1, H)
    wd2 = pad_cols(pad_rows(w_d2, H), H).astype(bf)
    bd2 = pad_bias(b_d2, H)

    # final head padded to 128 output lanes (lane-dense store, clean MXU tile)
    wd3 = pad_cols(pad_rows(w_d3, H), LAT_PAD).astype(bf)
    bd3 = pad_bias(b_d3, LAT_PAD)

    return (we1s, we1a, be1, we2, be2, wml, bml,
            wd1s, wd1z, bd1, wd2, bd2, wd3, bd3)


# ----------------------------------------------------------------------------
# Wrapper
# ----------------------------------------------------------------------------
def vae_forward(state, action, eps, params, max_action, *, block_b=512):
    state = state.astype(jnp.float32)
    action = action.astype(jnp.float32)
    eps = eps.astype(jnp.float32)
    max_action = jnp.asarray(max_action, jnp.float32).reshape(1, -1)

    batch, S = state.shape
    A = action.shape[1]
    L = eps.shape[1]
    assert A <= LAT_PAD and L <= LAT_PAD

    # Batch tiling:
    #  * tb multiple of 16 (bf16 packs 16 sublanes per vreg),
    #  * split into >= 2 tiles whenever batch >= 32 so the "parallel" grid axis
    #    shards across v7x's two TensorCores,
    #  * cap at block_b (step-overhead amortization on v5e/v6e vs VMEM on v7x).
    tb = min(_round_up(batch, 16), block_b)
    if batch >= 32:
        tb = min(tb, _round_up((batch + 1) // 2, 16))
    pb = _round_up(batch, tb)
    pad_rows = pb - batch

    state = jnp.pad(state, ((0, pad_rows), (0, 0)))
    action = jnp.pad(action, ((0, pad_rows), (0, 0)))
    eps = jnp.pad(eps, ((0, pad_rows), (0, LAT_PAD - L)))        # 128-lane latent
    amax = jnp.pad(max_action, ((0, 0), (0, LAT_PAD - A)))       # 128-lane head

    grid = (pb // tb,)

    def row_spec(cols):
        return pl.BlockSpec((tb, cols), lambda i: (i, 0))

    def full_spec(arr):
        return pl.BlockSpec(arr.shape, lambda i: (0, 0))

    in_specs = [row_spec(S), row_spec(A), row_spec(LAT_PAD),
                pl.BlockSpec((1, LAT_PAD), lambda i: (0, 0))]
    in_specs += [full_spec(p) for p in params]

    # single lane-dense output slab: [u | mean | std], each 128 lanes wide
    out_shape = jax.ShapeDtypeStruct((pb, 3 * LAT_PAD), jnp.float32)
    out_specs = row_spec(3 * LAT_PAD)

    out = pl.pallas_call(
        vae_kernel,
        grid=grid,
        in_specs=in_specs,
        out_specs=out_specs,
        out_shape=out_shape,
        compiler_params=pltpu.CompilerParams(
            dimension_semantics=("parallel",),
            vmem_limit_bytes=40 * 1024 * 1024),
    )(state, action, eps, amax, *params)

    u = out[:batch, :A]
    mean = out[:batch, LAT_PAD:LAT_PAD + L]
    std = out[:batch, 2 * LAT_PAD:2 * LAT_PAD + L]
    return u, mean, std


# ----------------------------------------------------------------------------
# Pure-JAX reference (same bf16 weight quantization, same padded layout)
# ----------------------------------------------------------------------------
def vae_forward_ref(state, action, eps, params, max_action):
    (we1s, we1a, be1, we2, be2, wml, bml,
     wd1s, wd1z, bd1, wd2, bd2, wd3, bd3) = params
    bf16, f32 = jnp.bfloat16, jnp.float32
    L = eps.shape[1]
    A = action.shape[1]
    max_action = jnp.asarray(max_action, f32).reshape(1, -1)

    def mm(x, w):
        return jnp.dot(x.astype(bf16), w, preferred_element_type=f32)

    h = jnp.maximum(mm(state, we1s) + mm(action, we1a) + be1, 0.0)
    h = jnp.maximum(mm(h, we2) + be2, 0.0)
    ml = mm(h, wml) + bml
    mean = ml[:, :L]
    std = jnp.exp(jnp.clip(ml[:, LAT_PAD:LAT_PAD + L], -4.0, 15.0))
    z = mean + std * eps
    d = jnp.maximum(mm(state, wd1s) + mm(z, wd1z[:L]) + bd1, 0.0)
    d = jnp.maximum(mm(d, wd2) + bd2, 0.0)
    u = max_action * jnp.tanh((mm(d, wd3) + bd3)[:, :A])
    return u, mean, std


# TODO(synk): only VAE.forward() is implemented; decode_bc / decode_bc_test /
# decode_multiple / decode_softplus variants are not translated.

if __name__ == "__main__":
    key = jax.random.PRNGKey(0)
    k_params, k_state, k_action, k_eps = jax.random.split(key, 4)

    batch, state_dim, action_dim, latent_dim = 8, 17, 6, 12

    params = init_vae_params(k_params, state_dim, action_dim, latent_dim)
    state = jax.random.normal(k_state, (batch, state_dim), jnp.float32)
    action = jax.random.normal(k_action, (batch, action_dim), jnp.float32)
    # external Gaussian noise (torch uses np.random.normal; passed in explicitly)
    eps = jax.random.normal(k_eps, (batch, latent_dim), jnp.float32)
    max_action = jnp.linspace(0.5, 1.5, action_dim, dtype=jnp.float32)[None, :]

    u, mean, std = vae_forward(state, action, eps, params, max_action)
    u = jax.block_until_ready(u)
    mean = jax.block_until_ready(mean)
    std = jax.block_until_ready(std)

    u_r, mean_r, std_r = vae_forward_ref(state, action, eps, params, max_action)

    assert u.shape == (batch, action_dim)
    assert mean.shape == (batch, latent_dim)
    assert std.shape == (batch, latent_dim)
    assert jnp.all(jnp.isfinite(u)) and jnp.all(jnp.isfinite(mean)) and jnp.all(jnp.isfinite(std))
    # bf16 weights/activations at the MXU -> compare against the same-quantized
    # JAX reference with a loosened tolerance.
    assert jnp.allclose(u, u_r, atol=1e-2, rtol=1e-2)
    assert jnp.allclose(mean, mean_r, atol=1e-2, rtol=1e-2)
    assert jnp.allclose(std, std_r, atol=1e-2, rtol=1e-2)

    print("KERNEL_OK")
</pallas_src>

<mosaic_0001>
module attributes {stable_mosaic.version = 11 : i64} {
  func.func @vae_kernel(%arg0: i32, %arg1: memref<16x17xf32, #tpu.memory_space<vmem>>, %arg2: memref<16x6xf32, #tpu.memory_space<vmem>>, %arg3: memref<16x128xf32, #tpu.memory_space<vmem>>, %arg4: memref<1x128xf32, #tpu.memory_space<vmem>>, %arg5: memref<17x768xbf16, #tpu.memory_space<vmem>>, %arg6: memref<6x768xbf16, #tpu.memory_space<vmem>>, %arg7: memref<1x768xf32, #tpu.memory_space<vmem>>, %arg8: memref<768x768xbf16, #tpu.memory_space<vmem>>, %arg9: memref<1x768xf32, #tpu.memory_space<vmem>>, %arg10: memref<768x256xbf16, #tpu.memory_space<vmem>>, %arg11: memref<1x256xf32, #tpu.memory_space<vmem>>, %arg12: memref<17x768xbf16, #tpu.memory_space<vmem>>, %arg13: memref<128x768xbf16, #tpu.memory_space<vmem>>, %arg14: memref<1x768xf32, #tpu.memory_space<vmem>>, %arg15: memref<768x768xbf16, #tpu.memory_space<vmem>>, %arg16: memref<1x768xf32, #tpu.memory_space<vmem>>, %arg17: memref<768x128xbf16, #tpu.memory_space<vmem>>, %arg18: memref<1x128xf32, #tpu.memory_space<vmem>>, %arg19: memref<16x384xf32, #tpu.memory_space<vmem>>) attributes {dimension_semantics = [#tpu.dimension_semantics<parallel>], iteration_bounds = array<i64: 1>, scalar_prefetch = 0 : i64, scratch_operands = 0 : i64, tpu.core_type = #tpu.core_type<tc>, window_params = [{transform_indices = @transform_0, window_bounds = array<i64: 16, 17>}, {transform_indices = @transform_1, window_bounds = array<i64: 16, 6>}, {transform_indices = @transform_2, window_bounds = array<i64: 16, 128>}, {pipeline_mode = #tpu.pipeline_mode<synchronous>, transform_indices = @transform_3, window_bounds = array<i64: 1, 128>}, {pipeline_mode = #tpu.pipeline_mode<synchronous>, transform_indices = @transform_4, window_bounds = array<i64: 17, 768>}, {pipeline_mode = #tpu.pipeline_mode<synchronous>, transform_indices = @transform_5, window_bounds = array<i64: 6, 768>}, {pipeline_mode = #tpu.pipeline_mode<synchronous>, transform_indices = @transform_6, window_bounds = array<i64: 1, 768>}, {pipeline_mode = #tpu.pipeline_mode<synchronous>, transform_indices = @transform_7, window_bounds = array<i64: 768, 768>}, {pipeline_mode = #tpu.pipeline_mode<synchronous>, transform_indices = @transform_8, window_bounds = array<i64: 1, 768>}, {pipeline_mode = #tpu.pipeline_mode<synchronous>, transform_indices = @transform_9, window_bounds = array<i64: 768, 256>}, {pipeline_mode = #tpu.pipeline_mode<synchronous>, transform_indices = @transform_10, window_bounds = array<i64: 1, 256>}, {pipeline_mode = #tpu.pipeline_mode<synchronous>, transform_indices = @transform_11, window_bounds = array<i64: 17, 768>}, {pipeline_mode = #tpu.pipeline_mode<synchronous>, transform_indices = @transform_12, window_bounds = array<i64: 128, 768>}, {pipeline_mode = #tpu.pipeline_mode<synchronous>, transform_indices = @transform_13, window_bounds = array<i64: 1, 768>}, {pipeline_mode = #tpu.pipeline_mode<synchronous>, transform_indices = @transform_14, window_bounds = array<i64: 768, 768>}, {pipeline_mode = #tpu.pipeline_mode<synchronous>, transform_indices = @transform_15, window_bounds = array<i64: 1, 768>}, {pipeline_mode = #tpu.pipeline_mode<synchronous>, transform_indices = @transform_16, window_bounds = array<i64: 768, 128>}, {pipeline_mode = #tpu.pipeline_mode<synchronous>, transform_indices = @transform_17, window_bounds = array<i64: 1, 128>}, {transform_indices = @transform_18, window_bounds = array<i64: 16, 384>}]} {
    %c0 = arith.constant 0 : index
    %c0_0 = arith.constant 0 : index
    %0 = vector.load %arg1[%c0, %c0_0] : memref<16x17xf32, #tpu.memory_space<vmem>>, vector<16x17xf32>
    %c0_1 = arith.constant 0 : index
    %c0_2 = arith.constant 0 : index
    %1 = vector.load %arg2[%c0_1, %c0_2] : memref<16x6xf32, #tpu.memory_space<vmem>>, vector<16x6xf32>
    %c0_3 = arith.constant 0 : index
    %c0_4 = arith.constant 0 : index
    %2 = vector.load %arg3[%c0_3, %c0_4] : memref<16x128xf32, #tpu.memory_space<vmem>>, vector<16x128xf32>
    %3 = arith.truncf %0 : vector<16x17xf32> to vector<16x17xbf16>
    %c0_5 = arith.constant 0 : index
    %c0_6 = arith.constant 0 : index
    %4 = vector.load %arg5[%c0_5, %c0_6] : memref<17x768xbf16, #tpu.memory_space<vmem>>, vector<17x768xbf16>
    %cst = arith.constant dense<0.000000e+00> : vector<16x768xf32>
    %5 = tpu.matmul %3, %4, %cst {dimension_numbers = #tpu.dot_dimension_numbers<[1], [0], [0], [1], [0, 0, 1, 1], [], []>} : vector<16x17xbf16>, vector<17x768xbf16>, vector<16x768xf32> -> vector<16x768xf32>
    %6 = arith.truncf %1 : vector<16x6xf32> to vector<16x6xbf16>
    %c0_7 = arith.constant 0 : index
    %c0_8 = arith.constant 0 : index
    %7 = vector.load %arg6[%c0_7, %c0_8] : memref<6x768xbf16, #tpu.memory_space<vmem>>, vector<6x768xbf16>
    %cst_9 = arith.constant dense<0.000000e+00> : vector<16x768xf32>
    %8 = tpu.matmul %6, %7, %cst_9 {dimension_numbers = #tpu.dot_dimension_numbers<[1], [0], [0], [1], [0, 0, 1, 1], [], []>} : vector<16x6xbf16>, vector<6x768xbf16>, vector<16x768xf32> -> vector<16x768xf32>
    %9 = arith.addf %5, %8 : vector<16x768xf32>
    %c0_10 = arith.constant 0 : index
    %c0_11 = arith.constant 0 : index
    %10 = vector.load %arg7[%c0_10, %c0_11] : memref<1x768xf32, #tpu.memory_space<vmem>>, vector<1x768xf32>
    %11 = vector.broadcast %10 : vector<1x768xf32> to vector<16x768xf32>
    %12 = arith.addf %9, %11 : vector<16x768xf32>
    %cst_12 = arith.constant 0.000000e+00 : f32
    %13 = vector.broadcast %cst_12 : f32 to vector<16x768xf32>
    %14 = arith.maximumf %12, %13 : vector<16x768xf32>
    %15 = arith.truncf %14 : vector<16x768xf32> to vector<16x768xbf16>
    %c0_13 = arith.constant 0 : index
    %c0_14 = arith.constant 0 : index
    %16 = vector.load %arg8[%c0_13, %c0_14] : memref<768x768xbf16, #tpu.memory_space<vmem>>, vector<768x768xbf16>
    %cst_15 = arith.constant dense<0.000000e+00> : vector<16x768xf32>
    %17 = tpu.matmul %15, %16, %cst_15 {dimension_numbers = #tpu.dot_dimension_numbers<[1], [0], [0], [1], [0, 0, 1, 1], [], []>} : vector<16x768xbf16>, vector<768x768xbf16>, vector<16x768xf32> -> vector<16x768xf32>
    %c0_16 = arith.constant 0 : index
    %c0_17 = arith.constant 0 : index
    %18 = vector.load %arg9[%c0_16, %c0_17] : memref<1x768xf32, #tpu.memory_space<vmem>>, vector<1x768xf32>
    %19 = vector.broadcast %18 : vector<1x768xf32> to vector<16x768xf32>
    %20 = arith.addf %17, %19 : vector<16x768xf32>
    %cst_18 = arith.constant 0.000000e+00 : f32
    %21 = vector.broadcast %cst_18 : f32 to vector<16x768xf32>
    %22 = arith.maximumf %20, %21 : vector<16x768xf32>
    %23 = arith.truncf %22 : vector<16x768xf32> to vector<16x768xbf16>
    %c0_19 = arith.constant 0 : index
    %c0_20 = arith.constant 0 : index
    %24 = vector.load %arg10[%c0_19, %c0_20] : memref<768x256xbf16, #tpu.memory_space<vmem>>, vector<768x256xbf16>
    %cst_21 = arith.constant dense<0.000000e+00> : vector<16x256xf32>
    %25 = tpu.matmul %23, %24, %cst_21 {dimension_numbers = #tpu.dot_dimension_numbers<[1], [0], [0], [1], [0, 0, 1, 1], [], []>} : vector<16x768xbf16>, vector<768x256xbf16>, vector<16x256xf32> -> vector<16x256xf32>
    %c0_22 = arith.constant 0 : index
    %c0_23 = arith.constant 0 : index
    %26 = vector.load %arg11[%c0_22, %c0_23] : memref<1x256xf32, #tpu.memory_space<vmem>>, vector<1x256xf32>
    %27 = vector.broadcast %26 : vector<1x256xf32> to vector<16x256xf32>
    %28 = arith.addf %25, %27 : vector<16x256xf32>
    %29 = vector.extract_strided_slice %28 {offsets = [0, 0], sizes = [16, 128], strides = [1, 1]} : vector<16x256xf32> to vector<16x128xf32>
    %30 = vector.extract_strided_slice %28 {offsets = [0, 128], sizes = [16, 128], strides = [1, 1]} : vector<16x256xf32> to vector<16x128xf32>
    %cst_24 = arith.constant -4.000000e+00 : f32
    %cst_25 = arith.constant 1.500000e+01 : f32
    %31 = vector.broadcast %cst_24 : f32 to vector<16x128xf32>
    %32 = arith.maximumf %31, %30 : vector<16x128xf32>
    %33 = vector.broadcast %cst_25 : f32 to vector<16x128xf32>
    %34 = arith.minimumf %33, %32 : vector<16x128xf32>
    %35 = math.exp %34 : vector<16x128xf32>
    %36 = arith.mulf %35, %2 : vector<16x128xf32>
    %37 = arith.addf %29, %36 : vector<16x128xf32>
    %38 = arith.truncf %0 : vector<16x17xf32> to vector<16x17xbf16>
    %c0_26 = arith.constant 0 : index
    %c0_27 = arith.constant 0 : index
    %39 = vector.load %arg12[%c0_26, %c0_27] : memref<17x768xbf16, #tpu.memory_space<vmem>>, vector<17x768xbf16>
    %cst_28 = arith.constant dense<0.000000e+00> : vector<16x768xf32>
    %40 = tpu.matmul %38, %39, %cst_28 {dimension_numbers = #tpu.dot_dimension_numbers<[1], [0], [0], [1], [0, 0, 1, 1], [], []>} : vector<16x17xbf16>, vector<17x768xbf16>, vector<16x768xf32> -> vector<16x768xf32>
    %41 = arith.truncf %37 : vector<16x128xf32> to vector<16x128xbf16>
    %c0_29 = arith.constant 0 : index
    %c0_30 = arith.constant 0 : index
    %42 = vector.load %arg13[%c0_29, %c0_30] : memref<128x768xbf16, #tpu.memory_space<vmem>>, vector<128x768xbf16>
    %cst_31 = arith.constant dense<0.000000e+00> : vector<16x768xf32>
    %43 = tpu.matmul %41, %42, %cst_31 {dimension_numbers = #tpu.dot_dimension_numbers<[1], [0], [0], [1], [0, 0, 1, 1], [], []>} : vector<16x128xbf16>, vector<128x768xbf16>, vector<16x768xf32> -> vector<16x768xf32>
    %44 = arith.addf %40, %43 : vector<16x768xf32>
    %c0_32 = arith.constant 0 : index
    %c0_33 = arith.constant 0 : index
    %45 = vector.load %arg14[%c0_32, %c0_33] : memref<1x768xf32, #tpu.memory_space<vmem>>, vector<1x768xf32>
    %46 = vector.broadcast %45 : vector<1x768xf32> to vector<16x768xf32>
    %47 = arith.addf %44, %46 : vector<16x768xf32>
    %cst_34 = arith.constant 0.000000e+00 : f32
    %48 = vector.broadcast %cst_34 : f32 to vector<16x768xf32>
    %49 = arith.maximumf %47, %48 : vector<16x768xf32>
    %50 = arith.truncf %49 : vector<16x768xf32> to vector<16x768xbf16>
    %c0_35 = arith.constant 0 : index
    %c0_36 = arith.constant 0 : index
    %51 = vector.load %arg15[%c0_35, %c0_36] : memref<768x768xbf16, #tpu.memory_space<vmem>>, vector<768x768xbf16>
    %cst_37 = arith.constant dense<0.000000e+00> : vector<16x768xf32>
    %52 = tpu.matmul %50, %51, %cst_37 {dimension_numbers = #tpu.dot_dimension_numbers<[1], [0], [0], [1], [0, 0, 1, 1], [], []>} : vector<16x768xbf16>, vector<768x768xbf16>, vector<16x768xf32> -> vector<16x768xf32>
    %c0_38 = arith.constant 0 : index
    %c0_39 = arith.constant 0 : index
    %53 = vector.load %arg16[%c0_38, %c0_39] : memref<1x768xf32, #tpu.memory_space<vmem>>, vector<1x768xf32>
    %54 = vector.broadcast %53 : vector<1x768xf32> to vector<16x768xf32>
    %55 = arith.addf %52, %54 : vector<16x768xf32>
    %cst_40 = arith.constant 0.000000e+00 : f32
    %56 = vector.broadcast %cst_40 : f32 to vector<16x768xf32>
    %57 = arith.maximumf %55, %56 : vector<16x768xf32>
    %58 = arith.truncf %57 : vector<16x768xf32> to vector<16x768xbf16>
    %c0_41 = arith.constant 0 : index
    %c0_42 = arith.constant 0 : index
    %59 = vector.load %arg17[%c0_41, %c0_42] : memref<768x128xbf16, #tpu.memory_space<vmem>>, vector<768x128xbf16>
    %cst_43 = arith.constant dense<0.000000e+00> : vector<16x128xf32>
    %60 = tpu.matmul %58, %59, %cst_43 {dimension_numbers = #tpu.dot_dimension_numbers<[1], [0], [0], [1], [0, 0, 1, 1], [], []>} : vector<16x768xbf16>, vector<768x128xbf16>, vector<16x128xf32> -> vector<16x128xf32>
    %c0_44 = arith.constant 0 : index
    %c0_45 = arith.constant 0 : index
    %61 = vector.load %arg18[%c0_44, %c0_45] : memref<1x128xf32, #tpu.memory_space<vmem>>, vector<1x128xf32>
    %62 = vector.broadcast %61 : vector<1x128xf32> to vector<16x128xf32>
    %63 = arith.addf %60, %62 : vector<16x128xf32>
    %c0_46 = arith.constant 0 : index
    %c0_47 = arith.constant 0 : index
    %64 = vector.load %arg4[%c0_46, %c0_47] : memref<1x128xf32, #tpu.memory_space<vmem>>, vector<1x128xf32>
    %65 = math.tanh %63 : vector<16x128xf32>
    %66 = vector.broadcast %64 : vector<1x128xf32> to vector<16x128xf32>
    %67 = arith.mulf %66, %65 : vector<16x128xf32>
    %68 = tpu.concatenate %67, %29, %35 in 1 : vector<16x128xf32>, vector<16x128xf32>, vector<16x128xf32> -> vector<16x384xf32>
    %c0_48 = arith.constant 0 : index
    %c0_49 = arith.constant 0 : index
    %69 = vector.load %arg19[%c0_48, %c0_49] : memref<16x384xf32, #tpu.memory_space<vmem>>, vector<16x384xf32>
    tpu.vector_store %arg19[%c0_48, %c0_49], %68 {strides = array<i32>} : memref<16x384xf32, #tpu.memory_space<vmem>>, vector<16x384xf32>,
    return
  }
  func.func @transform_0(%arg0: i32) -> (i32, i32) {
    %c0_i32 = arith.constant 0 : i32
    %c0_i32_0 = arith.constant 0 : i32
    return %arg0, %c0_i32 : i32, i32
  }
  func.func @transform_1(%arg0: i32) -> (i32, i32) {
    %c0_i32 = arith.constant 0 : i32
    %c0_i32_0 = arith.constant 0 : i32
    return %arg0, %c0_i32 : i32, i32
  }
  func.func @transform_2(%arg0: i32) -> (i32, i32) {
    %c0_i32 = arith.constant 0 : i32
    %c0_i32_0 = arith.constant 0 : i32
    return %arg0, %c0_i32 : i32, i32
  }
  func.func @transform_3(%arg0: i32) -> (i32, i32) {
    %c0_i32 = arith.constant 0 : i32
    %c0_i32_0 = arith.constant 0 : i32
    %c0_i32_1 = arith.constant 0 : i32
    return %c0_i32, %c0_i32_0 : i32, i32
  }
  func.func @transform_4(%arg0: i32) -> (i32, i32) {
    %c0_i32 = arith.constant 0 : i32
    %c0_i32_0 = arith.constant 0 : i32
    %c0_i32_1 = arith.constant 0 : i32
    return %c0_i32, %c0_i32_0 : i32, i32
  }
  func.func @transform_5(%arg0: i32) -> (i32, i32) {
    %c0_i32 = arith.constant 0 : i32
    %c0_i32_0 = arith.constant 0 : i32
    %c0_i32_1 = arith.constant 0 : i32
    return %c0_i32, %c0_i32_0 : i32, i32
  }
  func.func @transform_6(%arg0: i32) -> (i32, i32) {
    %c0_i32 = arith.constant 0 : i32
    %c0_i32_0 = arith.constant 0 : i32
    %c0_i32_1 = arith.constant 0 : i32
    return %c0_i32, %c0_i32_0 : i32, i32
  }
  func.func @transform_7(%arg0: i32) -> (i32, i32) {
    %c0_i32 = arith.constant 0 : i32
    %c0_i32_0 = arith.constant 0 : i32
    %c0_i32_1 = arith.constant 0 : i32
    return %c0_i32, %c0_i32_0 : i32, i32
  }
  func.func @transform_8(%arg0: i32) -> (i32, i32) {
    %c0_i32 = arith.constant 0 : i32
    %c0_i32_0 = arith.constant 0 : i32
    %c0_i32_1 = arith.constant 0 : i32
    return %c0_i32, %c0_i32_0 : i32, i32
  }
  func.func @transform_9(%arg0: i32) -> (i32, i32) {
    %c0_i32 = arith.constant 0 : i32
    %c0_i32_0 = arith.constant 0 : i32
    %c0_i32_1 = arith.constant 0 : i32
    return %c0_i32, %c0_i32_0 : i32, i32
  }
  func.func @transform_10(%arg0: i32) -> (i32, i32) {
    %c0_i32 = arith.constant 0 : i32
    %c0_i32_0 = arith.constant 0 : i32
    %c0_i32_1 = arith.constant 0 : i32
    return %c0_i32, %c0_i32_0 : i32, i32
  }
  func.func @transform_11(%arg0: i32) -> (i32, i32) {
    %c0_i32 = arith.constant 0 : i32
    %c0_i32_0 = arith.constant 0 : i32
    %c0_i32_1 = arith.constant 0 : i32
    return %c0_i32, %c0_i32_0 : i32, i32
  }
  func.func @transform_12(%arg0: i32) -> (i32, i32) {
    %c0_i32 = arith.constant 0 : i32
    %c0_i32_0 = arith.constant 0 : i32
    %c0_i32_1 = arith.constant 0 : i32
    return %c0_i32, %c0_i32_0 : i32, i32
  }
  func.func @transform_13(%arg0: i32) -> (i32, i32) {
    %c0_i32 = arith.constant 0 : i32
    %c0_i32_0 = arith.constant 0 : i32
    %c0_i32_1 = arith.constant 0 : i32
    return %c0_i32, %c0_i32_0 : i32, i32
  }
  func.func @transform_14(%arg0: i32) -> (i32, i32) {
    %c0_i32 = arith.constant 0 : i32
    %c0_i32_0 = arith.constant 0 : i32
    %c0_i32_1 = arith.constant 0 : i32
    return %c0_i32, %c0_i32_0 : i32, i32
  }
  func.func @transform_15(%arg0: i32) -> (i32, i32) {
    %c0_i32 = arith.constant 0 : i32
    %c0_i32_0 = arith.constant 0 : i32
    %c0_i32_1 = arith.constant 0 : i32
    return %c0_i32, %c0_i32_0 : i32, i32
  }
  func.func @transform_16(%arg0: i32) -> (i32, i32) {
    %c0_i32 = arith.constant 0 : i32
    %c0_i32_0 = arith.constant 0 : i32
    %c0_i32_1 = arith.constant 0 : i32
    return %c0_i32, %c0_i32_0 : i32, i32
  }
  func.func @transform_17(%arg0: i32) -> (i32, i32) {
    %c0_i32 = arith.constant 0 : i32
    %c0_i32_0 = arith.constant 0 : i32
    %c0_i32_1 = arith.constant 0 : i32
    return %c0_i32, %c0_i32_0 : i32, i32
  }
  func.func @transform_18(%arg0: i32) -> (i32, i32) {
    %c0_i32 = arith.constant 0 : i32
    %c0_i32_0 = arith.constant 0 : i32
    return %arg0, %c0_i32 : i32, i32
  }
}

</mosaic_0001>

<llo_original>
// kernel: tpu_custom_call.1
$region0: #{tpu_custom_call.1}
  #allocation0 [shape = 'u32[]', space=smem, size = 0x4, offset = 0x4, fixed_abs, tag = 'smem constant byte address 0x4 - core index']
  #allocation1 [shape = 'u32[144,128]{1,0:T(1,128)}', space=vmem, size = 0x12000, scoped, tag = 'internal scratch']
  %s0 = inlined_call_operand.hbm [shape: f32[16,17], index: 0, kind: input, shape index: {}]
  %s1 = inlined_call_operand.vmem [shape: f32[16,6], index: 1, kind: input, shape index: {}]
  %s2 = inlined_call_operand.hbm [shape: f32[16,128], index: 2, kind: input, shape index: {}]
  %s3 = inlined_call_operand.hbm [shape: f32[1,128], index: 3, kind: input, shape index: {}]
  %s4 = inlined_call_operand.hbm [shape: bf16[17,768], index: 4, kind: input, shape index: {}]
  %s5 = inlined_call_operand.hbm [shape: bf16[6,768], index: 5, kind: input, shape index: {}]
  %s6 = inlined_call_operand.hbm [shape: f32[1,768], index: 6, kind: input, shape index: {}]
  %s7 = inlined_call_operand.hbm [shape: bf16[768,768], index: 7, kind: input, shape index: {}]
  %s8 = inlined_call_operand.hbm [shape: f32[1,768], index: 8, kind: input, shape index: {}]
  %s9 = inlined_call_operand.hbm [shape: bf16[768,256], index: 9, kind: input, shape index: {}]
  %s10 = inlined_call_operand.hbm [shape: f32[1,256], index: 10, kind: input, shape index: {}]
  %s11 = inlined_call_operand.hbm [shape: bf16[17,768], index: 11, kind: input, shape index: {}]
  %s12 = inlined_call_operand.hbm [shape: bf16[128,768], index: 12, kind: input, shape index: {}]
  %s13 = inlined_call_operand.hbm [shape: f32[1,768], index: 13, kind: input, shape index: {}]
  %s14 = inlined_call_operand.hbm [shape: bf16[768,768], index: 14, kind: input, shape index: {}]
  %s15 = inlined_call_operand.hbm [shape: f32[1,768], index: 15, kind: input, shape index: {}]
  %s16 = inlined_call_operand.hbm [shape: bf16[768,128], index: 16, kind: input, shape index: {}]
  %s17 = inlined_call_operand.hbm [shape: f32[1,128], index: 17, kind: input, shape index: {}]
  %s18 = inlined_call_operand.hbm [shape: f32[16,384], index: 18, kind: output, shape index: {}]
  %s19 = sld [smem:[#allocation0]]
  $region150: #{tpu_custom_call.1} parent=0
    _
  %s21 = ssub.s32 1, %s19
  %s22 = scalar_select 0, %s21, %s19
  $region1: #{tpu_custom_call.1} parent=0
    #allocation2 [shape = 'u8[8192]{0}', space=vmem, size = 0x2000, scoped, tag = 'input window, operand 0, single buffered']
    #allocation3 [shape = 's32[1]{0}', space=sflag, size = 0x4, scoped, tag = 'scoped memory for tpu_custom_call.1']
    #allocation4 [shape = 's32[1]{0}', space=sflag, size = 0x4, scoped, tag = 'scoped memory for tpu_custom_call.1']
    #allocation5 [shape = 'u8[8192]{0}', space=vmem, size = 0x2000, scoped, tag = 'input window, operand 2, single buffered']
    #allocation6 [shape = 's32[1]{0}', space=sflag, size = 0x4, scoped, tag = 'scoped memory for tpu_custom_call.1']
    #allocation7 [shape = 'u8[512]{0}', space=vmem, size = 0x400, scoped, tag = 'input window, operand 3, single buffered']
    #allocation8 [shape = 'u8[36864]{0}', space=vmem, size = 0x9000, scoped, tag = 'input window, operand 4, single buffered']
    #allocation9 [shape = 's32[1]{0}', space=sflag, size = 0x4, scoped, tag = 'scoped memory for tpu_custom_call.1']
    #allocation10 [shape = 'u8[12288]{0}', space=vmem, size = 0x3000, scoped, tag = 'input window, operand 5, single buffered']
    #allocation11 [shape = 'u8[3072]{0}', space=vmem, size = 0xc00, scoped, tag = 'input window, operand 6, single buffered']
    #allocation12 [shape = 's32[1]{0}', space=sflag, size = 0x4, scoped, tag = 'scoped memory for tpu_custom_call.1']
    #allocation13 [shape = 'u8[1179648]{0}', space=vmem, size = 0x120000, scoped, tag = 'input window, operand 7, single buffered']
    #allocation14 [shape = 'u8[3072]{0}', space=vmem, size = 0xc00, scoped, tag = 'input window, operand 8, single buffered']
    #allocation15 [shape = 's32[1]{0}', space=sflag, size = 0x4, scoped, tag = 'scoped memory for tpu_custom_call.1']
    #allocation16 [shape = 'u8[393216]{0}', space=vmem, size = 0x60000, scoped, tag = 'input window, operand 9, single buffered']
    #allocation17 [shape = 'u8[1024]{0}', space=vmem, size = 0x400, scoped, tag = 'input window, operand 10, single buffered']
    #allocation18 [shape = 's32[1]{0}', space=sflag, size = 0x4, scoped, tag = 'scoped memory for tpu_custom_call.1']
    #allocation19 [shape = 'u8[36864]{0}', space=vmem, size = 0x9000, scoped, tag = 'input window, operand 11, single buffered']
    #allocation20 [shape = 'u8[196608]{0}', space=vmem, size = 0x30000, scoped, tag = 'input window, operand 12, single buffered']
    #allocation21 [shape = 's32[1]{0}', space=sflag, size = 0x4, scoped, tag = 'scoped memory for tpu_custom_call.1']
    #allocation22 [shape = 'u8[3072]{0}', space=vmem, size = 0xc00, scoped, tag = 'input window, operand 13, single buffered']
    #allocation23 [shape = 'u8[1179648]{0}', space=vmem, size = 0x120000, scoped, tag = 'input window, operand 14, single buffered']
    #allocation24 [shape = 's32[1]{0}', space=sflag, size = 0x4, scoped, tag = 'scoped memory for tpu_custom_call.1']
    #allocation25 [shape = 'u8[3072]{0}', space=vmem, size = 0xc00, scoped, tag = 'input window, operand 15, single buffered']
    #allocation26 [shape = 'u8[196608]{0}', space=vmem, size = 0x30000, scoped, tag = 'input window, operand 16, single buffered']
    #allocation27 [shape = 's32[1]{0}', space=sflag, size = 0x4, scoped, tag = 'scoped memory for tpu_custom_call.1']
    #allocation28 [shape = 'u8[512]{0}', space=vmem, size = 0x400, scoped, tag = 'input window, operand 17, single buffered']
    #allocation29 [shape = 'u8[24576]{0}', space=vmem, size = 0x6000, scoped, tag = 'output window, operand 0, single buffered']
    %23 = vsyncpa [#allocation3], 0
    %24 = vsyncpa [#allocation6], 0
    %25 = vsyncpa [#allocation9], 0
    %26 = vsyncpa [#allocation12], 0
    %27 = vsyncpa [#allocation15], 0
    %28 = vsyncpa [#allocation18], 0
    %29 = vsyncpa [#allocation21], 0
    %30 = vsyncpa [#allocation24], 0
    %31 = vsyncpa [#allocation27], 0
    %32 = vsyncpa [#allocation4], 0
    // Predicated region
    $region2: #{tpu_custom_call.1} parent=1 // pred_check
      _
    $region3: #{tpu_custom_call.1} parent=1 // pred_check_branch
      %34 = sbr.rel (0) target = $region5
    $region4: #{tpu_custom_call.1} parent=1 // pred_region
      %s36 = ssub.s32 256, 256
      %37 = vsyncadd [#allocation3], %s36
      %s38 = sshll.u32 [#allocation2], 4
      %s39 = int_to_ptr.vmem [resolvable:$true] %s38
      %44 = dma.hbm_to_vmem [thread:$0]  %s0, 256, %s39, [#allocation3], 128, 128, 8
    $region5: #{tpu_custom_call.1} parent=1 // pred_fallthru
      _
    // Predicated region
    $region6: #{tpu_custom_call.1} parent=1 // pred_check
      _
    $region7: #{tpu_custom_call.1} parent=1 // pred_check_branch
      %46 = sbr.rel (0) target = $region9
    $region8: #{tpu_custom_call.1} parent=1 // pred_region
      _
    $region9: #{tpu_custom_call.1} parent=1 // pred_fallthru
      _
    // Predicated region
    $region10: #{tpu_custom_call.1} parent=1 // pred_check
      _
    $region11: #{tpu_custom_call.1} parent=1 // pred_check_branch
      %48 = sbr.rel (0) target = $region13
    $region12: #{tpu_custom_call.1} parent=1 // pred_region
      %s50 = ssub.s32 256, 256
      %51 = vsyncadd [#allocation6], %s50
      %s52 = sshll.u32 [#allocation5], 4
      %s53 = int_to_ptr.vmem [resolvable:$true] %s52
      %58 = dma.hbm_to_vmem [thread:$0]  %s2, 256, %s53, [#allocation6], 128, 128, 8
    $region13: #{tpu_custom_call.1} parent=1 // pred_fallthru
      _
    // Predicated region
    $region14: #{tpu_custom_call.1} parent=1 // pred_check
      _
    $region15: #{tpu_custom_call.1} parent=1 // pred_check_branch
      %60 = sbr.rel (0) target = $region17
    $region16: #{tpu_custom_call.1} parent=1 // pred_region
      %s62 = ssub.s32 16, 16
      %63 = vsyncadd [#allocation6], %s62
      %s65 = sshll.u32 [#allocation7], 4
      %s66 = int_to_ptr.vmem [resolvable:$true] %s65
      %68 = dma.hbm_to_vmem [thread:$0]  %s3, 16, %s66, [#allocation6]
    $region17: #{tpu_custom_call.1} parent=1 // pred_fallthru
      _
    // Predicated region
    $region18: #{tpu_custom_call.1} parent=1 // pred_check
      _
    $region19: #{tpu_custom_call.1} parent=1 // pred_check_branch
      %70 = sbr.rel (0) target = $region21
    $region20: #{tpu_custom_call.1} parent=1 // pred_region
      %s72 = ssub.s32 1152, 1152
      %73 = vsyncadd [#allocation9], %s72
      %s74 = sshll.u32 [#allocation8], 4
      %s75 = int_to_ptr.vmem [resolvable:$true] %s74
      %80 = dma.hbm_to_vmem [thread:$0]  %s4, 1152, %s75, [#allocation9], 384, 384, 24
    $region21: #{tpu_custom_call.1} parent=1 // pred_fallthru
      _
    // Predicated region
    $region22: #{tpu_custom_call.1} parent=1 // pred_check
      _
    $region23: #{tpu_custom_call.1} parent=1 // pred_check_branch
      %82 = sbr.rel (0) target = $region25
    $region24: #{tpu_custom_call.1} parent=1 // pred_region
      %s84 = ssub.s32 384, 384
      %85 = vsyncadd [#allocation9], %s84
      %s87 = sshll.u32 [#allocation10], 4
      %s88 = int_to_ptr.vmem [resolvable:$true] %s87
      %90 = dma.hbm_to_vmem [thread:$0]  %s5, 384, %s88, [#allocation9]
    $region25: #{tpu_custom_call.1} parent=1 // pred_fallthru
      _
    // Predicated region
    $region26: #{tpu_custom_call.1} parent=1 // pred_check
      _
    $region27: #{tpu_custom_call.1} parent=1 // pred_check_branch
      %92 = sbr.rel (0) target = $region29
    $region28: #{tpu_custom_call.1} parent=1 // pred_region
      %s94 = ssub.s32 96, 96
      %95 = vsyncadd [#allocation12], %s94
      %s97 = sshll.u32 [#allocation11], 4
      %s98 = int_to_ptr.vmem [resolvable:$true] %s97
      %100 = dma.hbm_to_vmem [thread:$0]  %s6, 96, %s98, [#allocation12]
    $region29: #{tpu_custom_call.1} parent=1 // pred_fallthru
      _
    // Predicated region
    $region30: #{tpu_custom_call.1} parent=1 // pred_check
      _
    $region31: #{tpu_custom_call.1} parent=1 // pred_check_branch
      %102 = sbr.rel (0) target = $region33
    $region32: #{tpu_custom_call.1} parent=1 // pred_region
      %s104 = ssub.s32 36864, 36864
      %105 = vsyncadd [#allocation12], %s104
      %s106 = sshll.u32 [#allocation13], 4
      %s107 = int_to_ptr.vmem [resolvable:$true] %s106
      %112 = dma.hbm_to_vmem [thread:$0]  %s7, 36864, %s107, [#allocation12], 384, 384, 24
    $region33: #{tpu_custom_call.1} parent=1 // pred_fallthru
      _
    // Predicated region
    $region34: #{tpu_custom_call.1} parent=1 // pred_check
      _
    $region35: #{tpu_custom_call.1} parent=1 // pred_check_branch
      %114 = sbr.rel (0) target = $region37
    $region36: #{tpu_custom_call.1} parent=1 // pred_region
      %s116 = ssub.s32 96, 96
      %117 = vsyncadd [#allocation15], %s116
      %s119 = sshll.u32 [#allocation14], 4
      %s120 = int_to_ptr.vmem [resolvable:$true] %s119
      %122 = dma.hbm_to_vmem [thread:$0]  %s8, 96, %s120, [#allocation15]
    $region37: #{tpu_custom_call.1} parent=1 // pred_fallthru
      _
    // Predicated region
    $region38: #{tpu_custom_call.1} parent=1 // pred_check
      _
    $region39: #{tpu_custom_call.1} parent=1 // pred_check_branch
      %124 = sbr.rel (0) target = $region41
    $region40: #{tpu_custom_call.1} parent=1 // pred_region
      %s126 = ssub.s32 12288, 12288
      %127 = vsyncadd [#allocation15], %s126
      %s128 = sshll.u32 [#allocation16], 4
      %s129 = int_to_ptr.vmem [resolvable:$true] %s128
      %134 = dma.hbm_to_vmem [thread:$0]  %s9, 12288, %s129, [#allocation15], 128, 128, 8
    $region41: #{tpu_custom_call.1} parent=1 // pred_fallthru
      _
    // Predicated region
    $region42: #{tpu_custom_call.1} parent=1 // pred_check
      _
    $region43: #{tpu_custom_call.1} parent=1 // pred_check_branch
      %136 = sbr.rel (0) target = $region45
    $region44: #{tpu_custom_call.1} parent=1 // pred_region
      %s138 = ssub.s32 32, 32
      %139 = vsyncadd [#allocation18], %s138
      %s141 = sshll.u32 [#allocation17], 4
      %s142 = int_to_ptr.vmem [resolvable:$true] %s141
      %144 = dma.hbm_to_vmem [thread:$0]  %s10, 32, %s142, [#allocation18]
    $region45: #{tpu_custom_call.1} parent=1 // pred_fallthru
      _
    // Predicated region
    $region46: #{tpu_custom_call.1} parent=1 // pred_check
      _
    $region47: #{tpu_custom_call.1} parent=1 // pred_check_branch
      %146 = sbr.rel (0) target = $region49
    $region48: #{tpu_custom_call.1} parent=1 // pred_region
      %s148 = ssub.s32 1152, 1152
      %149 = vsyncadd [#allocation18], %s148
      %s150 = sshll.u32 [#allocation19], 4
      %s151 = int_to_ptr.vmem [resolvable:$true] %s150
      %156 = dma.hbm_to_vmem [thread:$0]  %s11, 1152, %s151, [#allocation18], 384, 384, 24
    $region49: #{tpu_custom_call.1} parent=1 // pred_fallthru
      _
    // Predicated region
    $region50: #{tpu_custom_call.1} parent=1 // pred_check
      _
    $region51: #{tpu_custom_call.1} parent=1 // pred_check_branch
      %158 = sbr.rel (0) target = $region53
    $region52: #{tpu_custom_call.1} parent=1 // pred_region
      %s160 = ssub.s32 6144, 6144
      %161 = vsyncadd [#allocation21], %s160
      %s162 = sshll.u32 [#allocation20], 4
      %s163 = int_to_ptr.vmem [resolvable:$true] %s162
      %168 = dma.hbm_to_vmem [thread:$0]  %s12, 6144, %s163, [#allocation21], 384, 384, 24
    $region53: #{tpu_custom_call.1} parent=1 // pred_fallthru
      _
    // Predicated region
    $region54: #{tpu_custom_call.1} parent=1 // pred_check
      _
    $region55: #{tpu_custom_call.1} parent=1 // pred_check_branch
      %170 = sbr.rel (0) target = $region57
    $region56: #{tpu_custom_call.1} parent=1 // pred_region
      %s172 = ssub.s32 96, 96
      %173 = vsyncadd [#allocation21], %s172
      %s175 = sshll.u32 [#allocation22], 4
      %s176 = int_to_ptr.vmem [resolvable:$true] %s175
      %178 = dma.hbm_to_vmem [thread:$0]  %s13, 96, %s176, [#allocation21]
    $region57: #{tpu_custom_call.1} parent=1 // pred_fallthru
      _
    // Predicated region
    $region58: #{tpu_custom_call.1} parent=1 // pred_check
      _
    $region59: #{tpu_custom_call.1} parent=1 // pred_check_branch
      %180 = sbr.rel (0) target = $region61
    $region60: #{tpu_custom_call.1} parent=1 // pred_region
      %s182 = ssub.s32 36864, 36864
      %183 = vsyncadd [#allocation24], %s182
      %s184 = sshll.u32 [#allocation23], 4
      %s185 = int_to_ptr.vmem [resolvable:$true] %s184
      %190 = dma.hbm_to_vmem [thread:$0]  %s14, 36864, %s185, [#allocation24], 384, 384, 24
    $region61: #{tpu_custom_call.1} parent=1 // pred_fallthru
      _
    // Predicated region
    $region62: #{tpu_custom_call.1} parent=1 // pred_check
      _
    $region63: #{tpu_custom_call.1} parent=1 // pred_check_branch
      %192 = sbr.rel (0) target = $region65
    $region64: #{tpu_custom_call.1} parent=1 // pred_region
      %s194 = ssub.s32 96, 96
      %195 = vsyncadd [#allocation24], %s194
      %s197 = sshll.u32 [#allocation25], 4
      %s198 = int_to_ptr.vmem [resolvable:$true] %s197
      %200 = dma.hbm_to_vmem [thread:$0]  %s15, 96, %s198, [#allocation24]
    $region65: #{tpu_custom_call.1} parent=1 // pred_fallthru
      _
    // Predicated region
    $region66: #{tpu_custom_call.1} parent=1 // pred_check
      _
    $region67: #{tpu_custom_call.1} parent=1 // pred_check_branch
      %202 = sbr.rel (0) target = $region69
    $region68: #{tpu_custom_call.1} parent=1 // pred_region
      %s204 = ssub.s32 6144, 6144
      %205 = vsyncadd [#allocation27], %s204
      %s206 = sshll.u32 [#allocation26], 4
      %s207 = int_to_ptr.vmem [resolvable:$true] %s206
      %212 = dma.hbm_to_vmem [thread:$0]  %s16, 6144, %s207, [#allocation27], 64, 64, 4
    $region69: #{tpu_custom_call.1} parent=1 // pred_fallthru
      _
    // Predicated region
    $region70: #{tpu_custom_call.1} parent=1 // pred_check
      _
    $region71: #{tpu_custom_call.1} parent=1 // pred_check_branch
      %214 = sbr.rel (0) target = $region73
    $region72: #{tpu_custom_call.1} parent=1 // pred_region
      %s216 = ssub.s32 16, 16
      %217 = vsyncadd [#allocation27], %s216
      %s219 = sshll.u32 [#allocation28], 4
      %s220 = int_to_ptr.vmem [resolvable:$true] %s219
      %222 = dma.hbm_to_vmem [thread:$0]  %s17, 16, %s220, [#allocation27]
    $region73: #{tpu_custom_call.1} parent=1 // pred_fallthru
      _
    // Predicated region
    $region74: #{tpu_custom_call.1} parent=1 // pred_check
      _
    $region75: #{tpu_custom_call.1} parent=1 // pred_check_branch
      %224 = sbr.rel (0) target = $region77
    $region76: #{tpu_custom_call.1} parent=1 // pred_region
      %225 = dma.done [#allocation3], 256
    $region77: #{tpu_custom_call.1} parent=1 // pred_fallthru
      _
    // Predicated region
    $region78: #{tpu_custom_call.1} parent=1 // pred_check
      _
    $region79: #{tpu_custom_call.1} parent=1 // pred_check_branch
      %227 = sbr.rel (0) target = $region81
    $region80: #{tpu_custom_call.1} parent=1 // pred_region
      %228 = dma.done [#allocation6], 256
    $region81: #{tpu_custom_call.1} parent=1 // pred_fallthru
      _
    // Predicated region
    $region82: #{tpu_custom_call.1} parent=1 // pred_check
      _
    $region83: #{tpu_custom_call.1} parent=1 // pred_check_branch
      %230 = sbr.rel (0) target = $region85
    $region84: #{tpu_custom_call.1} parent=1 // pred_region
      %231 = dma.done [#allocation6], 16
    $region85: #{tpu_custom_call.1} parent=1 // pred_fallthru
      _
    // Predicated region
    $region86: #{tpu_custom_call.1} parent=1 // pred_check
      _
    $region87: #{tpu_custom_call.1} parent=1 // pred_check_branch
      %233 = sbr.rel (0) target = $region89
    $region88: #{tpu_custom_call.1} parent=1 // pred_region
      %234 = dma.done [#allocation9], 1152
    $region89: #{tpu_custom_call.1} parent=1 // pred_fallthru
      _
    // Predicated region
    $region90: #{tpu_custom_call.1} parent=1 // pred_check
      _
    $region91: #{tpu_custom_call.1} parent=1 // pred_check_branch
      %236 = sbr.rel (0) target = $region93
    $region92: #{tpu_custom_call.1} parent=1 // pred_region
      %237 = dma.done [#allocation9], 384
    $region93: #{tpu_custom_call.1} parent=1 // pred_fallthru
      _
    // Predicated region
    $region94: #{tpu_custom_call.1} parent=1 // pred_check
      _
    $region95: #{tpu_custom_call.1} parent=1 // pred_check_branch
      %239 = sbr.rel (0) target = $region97
    $region96: #{tpu_custom_call.1} parent=1 // pred_region
      %240 = dma.done [#allocation12], 96
    $region97: #{tpu_custom_call.1} parent=1 // pred_fallthru
      _
    // Predicated region
    $region98: #{tpu_custom_call.1} parent=1 // pred_check
      _
    $region99: #{tpu_custom_call.1} parent=1 // pred_check_branch
      %242 = sbr.rel (0) target = $region101
    $region100: #{tpu_custom_call.1} parent=1 // pred_region
      %243 = dma.done [#allocation12], 36864
    $region101: #{tpu_custom_call.1} parent=1 // pred_fallthru
      _
    // Predicated region
    $region102: #{tpu_custom_call.1} parent=1 // pred_check
      _
    $region103: #{tpu_custom_call.1} parent=1 // pred_check_branch
      %245 = sbr.rel (0) target = $region105
    $region104: #{tpu_custom_call.1} parent=1 // pred_region
      %246 = dma.done [#allocation15], 96
    $region105: #{tpu_custom_call.1} parent=1 // pred_fallthru
      _
    // Predicated region
    $region106: #{tpu_custom_call.1} parent=1 // pred_check
      _
    $region107: #{tpu_custom_call.1} parent=1 // pred_check_branch
      %248 = sbr.rel (0) target = $region109
    $region108: #{tpu_custom_call.1} parent=1 // pred_region
      %249 = dma.done [#allocation15], 12288
    $region109: #{tpu_custom_call.1} parent=1 // pred_fallthru
      _
    // Predicated region
    $region110: #{tpu_custom_call.1} parent=1 // pred_check
      _
    $region111: #{tpu_custom_call.1} parent=1 // pred_check_branch
      %251 = sbr.rel (0) target = $region113
    $region112: #{tpu_custom_call.1} parent=1 // pred_region
      %252 = dma.done [#allocation18], 32
    $region113: #{tpu_custom_call.1} parent=1 // pred_fallthru
      _
    // Predicated region
    $region114: #{tpu_custom_call.1} parent=1 // pred_check
      _
    $region115: #{tpu_custom_call.1} parent=1 // pred_check_branch
      %254 = sbr.rel (0) target = $region117
    $region116: #{tpu_custom_call.1} parent=1 // pred_region
      %255 = dma.done [#allocation18], 1152
    $region117: #{tpu_custom_call.1} parent=1 // pred_fallthru
      _
    // Predicated region
    $region118: #{tpu_custom_call.1} parent=1 // pred_check
      _
    $region119: #{tpu_custom_call.1} parent=1 // pred_check_branch
      %257 = sbr.rel (0) target = $region121
    $region120: #{tpu_custom_call.1} parent=1 // pred_region
      %258 = dma.done [#allocation21], 6144
    $region121: #{tpu_custom_call.1} parent=1 // pred_fallthru
      _
    // Predicated region
    $region122: #{tpu_custom_call.1} parent=1 // pred_check
      _
    $region123: #{tpu_custom_call.1} parent=1 // pred_check_branch
      %260 = sbr.rel (0) target = $region125
    $region124: #{tpu_custom_call.1} parent=1 // pred_region
      %261 = dma.done [#allocation21], 96
    $region125: #{tpu_custom_call.1} parent=1 // pred_fallthru
      _
    // Predicated region
    $region126: #{tpu_custom_call.1} parent=1 // pred_check
      _
    $region127: #{tpu_custom_call.1} parent=1 // pred_check_branch
      %263 = sbr.rel (0) target = $region129
    $region128: #{tpu_custom_call.1} parent=1 // pred_region
      %264 = dma.done [#allocation24], 36864
    $region129: #{tpu_custom_call.1} parent=1 // pred_fallthru
      _
    // Predicated region
    $region130: #{tpu_custom_call.1} parent=1 // pred_check
      _
    $region131: #{tpu_custom_call.1} parent=1 // pred_check_branch
      %266 = sbr.rel (0) target = $region133
    $region132: #{tpu_custom_call.1} parent=1 // pred_region
      %267 = dma.done [#allocation24], 96
    $region133: #{tpu_custom_call.1} parent=1 // pred_fallthru
      _
    // Predicated region
    $region134: #{tpu_custom_call.1} parent=1 // pred_check
      _
    $region135: #{tpu_custom_call.1} parent=1 // pred_check_branch
      %269 = sbr.rel (0) target = $region137
    $region136: #{tpu_custom_call.1} parent=1 // pred_region
      %270 = dma.done [#allocation27], 6144
    $region137: #{tpu_custom_call.1} parent=1 // pred_fallthru
      _
    // Predicated region
    $region138: #{tpu_custom_call.1} parent=1 // pred_check
      _
    $region139: #{tpu_custom_call.1} parent=1 // pred_check_branch
      %272 = sbr.rel (0) target = $region141
    $region140: #{tpu_custom_call.1} parent=1 // pred_region
      %273 = dma.done [#allocation27], 16
    $region141: #{tpu_custom_call.1} parent=1 // pred_fallthru
      _
    %v275 = vld [vmem:[#allocation2] sm:$0xff]
    %v276 = vld [vmem:[#allocation2 + $0x8] sm:$0xff]
    %v277 = vld [vmem:[%s1] sm:$0xff]
    %v278 = vld [vmem:[%s1 + $0x8] sm:$0xff]
    %v279 = vld [vmem:[#allocation5] sm:$0xff]
    %v280 = vld [vmem:[#allocation5 + $0x8] sm:$0xff]
    %v281 = vpack.c.bf16 %v276, %v275
    %v282 = vld [vmem:[#allocation8] sm:$0xff]
    %v283 = vld [vmem:[#allocation8 + $0x8] sm:$0xff]
    %v284 = vld [vmem:[#allocation8 + $0x10] sm:$0xff]
    %v285 = vld [vmem:[#allocation8 + $0x18] sm:$0xff]
    %v286 = vld [vmem:[#allocation8 + $0x20] sm:$0xff]
    %v287 = vld [vmem:[#allocation8 + $0x28] sm:$0xff]
    %v288 = vld [vmem:[#allocation8 + $0x30] sm:$0x11]
    %v289 = vld [vmem:[#allocation8 + $0x38] sm:$0x11]
    %v290 = vld [vmem:[#allocation8 + $0x40] sm:$0x11]
    %v291 = vpack.c.bf16 %v278, %v277
    %v292 = vld [vmem:[#allocation10] sm:$0x77]
    %v293 = vld [vmem:[#allocation10 + $0x8] sm:$0x77]
    %v294 = vld [vmem:[#allocation10 + $0x10] sm:$0x77]
    %v298 = vunpack.c.l.b16 %v292
    %v299 = vunpack.c.h.b16 %v292
    %v300 = vunpack.c.l.b16 %v293
    %v301 = vunpack.c.h.b16 %v293
    %v302 = vunpack.c.l.b16 %v294
    %v303 = vunpack.c.h.b16 %v294
    %v304 = vpack.c.b16 %v298, %v298
    %v305 = vpack.c.b16 %v299, %v299
    %v306 = vpack.c.b16 %v300, %v300
    %v307 = vpack.c.b16 %v301, %v301
    %v308 = vpack.c.b16 %v302, %v302
    %v309 = vpack.c.b16 %v303, %v303
    %vm310 = vcmask 48128
    %v312 = vsel %vm310, %v291, 0
    %vm314 = vcmask 1042432
    %v316 = vsel %vm314, %v304, 0
    %v319 = vsel %vm314, %v305, 0
    %v322 = vsel %vm314, %v306, 0
    %v325 = vsel %vm314, %v307, 0
    %v328 = vsel %vm314, %v308, 0
    %v331 = vsel %vm314, %v309, 0
    %333 = vmatprep.subr.bf16.mxu0 0
    %334 = vmatpush1.bf16.msra.mxu0 0
    %335 = vmatprep.subr.bf16.mxu0 0
    %336 = vmatpush1.bf16.msra.mxu0 0
    %337 = vmatprep.subr.bf16.mxu0 0
    %338 = vmatpush1.bf16.msra.mxu0 0
    %339 = vmatprep.subr.bf16.mxu0 0
    %340 = vmatpush1.bf16.msra.mxu0 0
    %341 = vmatprep.subr.bf16.mxu0 0
    %342 = vmatpush1.bf16.msra.mxu0 0
    %343 = vmatprep.subr.bf16.mxu0 0
    %344 = vmatpush1.bf16.msra.mxu0 0
    %345 = vmatprep.subr.bf16.mxu0 0
    %346 = vmatpush1.bf16.msra.mxu0 0
    %347 = vmatprep.subr.bf16.mxu0 %v319
    %348 = vmatpush1.bf16.msra.mxu0 %v316
    %349 = vmatprep.subr.bf16.mxu0 0
    %350 = vmatpush2.bf16.msra.mxu0 0
    %351 = vmatprep.subr.bf16.mxu0 0
    %352 = vmatpush2.bf16.msra.mxu0 0
    %353 = vmatprep.subr.bf16.mxu0 0
    %354 = vmatpush2.bf16.msra.mxu0 0
    %355 = vmatprep.subr.bf16.mxu0 0
    %356 = vmatpush2.bf16.msra.mxu0 0
    %357 = vmatprep.subr.bf16.mxu0 0
    %358 = vmatpush2.bf16.msra.mxu0 0
    %359 = vmatprep.subr.bf16.mxu0 0
    %360 = vmatpush2.bf16.msra.mxu0 0
    %361 = vmatprep.subr.bf16.mxu0 0
    %362 = vmatpush2.bf16.msra.mxu0 0
    %363 = vmatprep.subr.bf16.mxu0 0
    %364 = vmatpush2.bf16.msra.mxu0 0
    %365 = vmatprep.mubr.bf16.mxu0 0
    %366 = vmatmul.mubr.bf16.gmra.mxu0 %v312
    %v367 = vpop.f32.mrf.mxu0
    %v368 = vadd.f32 0.0, %v367
    %v369 = vpop.f32.mrf.mxu0
    %v370 = vadd.f32 0.0, %v369
    %v371 = vpop.f32.mrf.mxu0
    %v372 = vadd.f32 0.0, %v371
    %v373 = vpop.f32.mrf.mxu0
    %v374 = vadd.f32 0.0, %v373
    %375 = vdwg.mxu0
    %376 = vmatprep.subr.bf16.mxu0 0
    %377 = vmatpush1.bf16.msra.mxu0 0
    %378 = vmatprep.subr.bf16.mxu0 0
    %379 = vmatpush1.bf16.msra.mxu0 0
    %380 = vmatprep.subr.bf16.mxu0 0
    %381 = vmatpush1.bf16.msra.mxu0 0
    %382 = vmatprep.subr.bf16.mxu0 0
    %383 = vmatpush1.bf16.msra.mxu0 0
    %384 = vmatprep.subr.bf16.mxu0 0
    %385 = vmatpush1.bf16.msra.mxu0 0
    %386 = vmatprep.subr.bf16.mxu0 0
    %387 = vmatpush1.bf16.msra.mxu0 0
    %388 = vmatprep.subr.bf16.mxu0 0
    %389 = vmatpush1.bf16.msra.mxu0 0
    %390 = vmatprep.subr.bf16.mxu0 %v325
    %391 = vmatpush1.bf16.msra.mxu0 %v322
    %392 = vmatprep.subr.bf16.mxu0 0
    %393 = vmatpush2.bf16.msra.mxu0 0
    %394 = vmatprep.subr.bf16.mxu0 0
    %395 = vmatpush2.bf16.msra.mxu0 0
    %396 = vmatprep.subr.bf16.mxu0 0
    %397 = vmatpush2.bf16.msra.mxu0 0
    %398 = vmatprep.subr.bf16.mxu0 0
    %399 = vmatpush2.bf16.msra.mxu0 0
    %400 = vmatprep.subr.bf16.mxu0 0
    %401 = vmatpush2.bf16.msra.mxu0 0
    %402 = vmatprep.subr.bf16.mxu0 0
    %403 = vmatpush2.bf16.msra.mxu0 0
    %404 = vmatprep.subr.bf16.mxu0 0
    %405 = vmatpush2.bf16.msra.mxu0 0
    %406 = vmatprep.subr.bf16.mxu0 0
    %407 = vmatpush2.bf16.msra.mxu0 0
    %408 = vmatprep.mubr.bf16.mxu0 0
    %409 = vmatmul.mubr.bf16.gmra.mxu0 %v312
    %v410 = vpop.f32.mrf.mxu0
    %v411 = vadd.f32 0.0, %v410
    %v412 = vpop.f32.mrf.mxu0
    %v413 = vadd.f32 0.0, %v412
    %v414 = vpop.f32.mrf.mxu0
    %v415 = vadd.f32 0.0, %v414
    %v416 = vpop.f32.mrf.mxu0
    %v417 = vadd.f32 0.0, %v416
    %418 = vdwg.mxu0
    %419 = vmatprep.subr.bf16.mxu0 0
    %420 = vmatpush1.bf16.msra.mxu0 0
    %421 = vmatprep.subr.bf16.mxu0 0
    %422 = vmatpush1.bf16.msra.mxu0 0
    %423 = vmatprep.subr.bf16.mxu0 0
    %424 = vmatpush1.bf16.msra.mxu0 0
    %425 = vmatprep.subr.bf16.mxu0 0
    %426 = vmatpush1.bf16.msra.mxu0 0
    %427 = vmatprep.subr.bf16.mxu0 0
    %428 = vmatpush1.bf16.msra.mxu0 0
    %429 = vmatprep.subr.bf16.mxu0 0
    %430 = vmatpush1.bf16.msra.mxu0 0
    %431 = vmatprep.subr.bf16.mxu0 0
    %432 = vmatpush1.bf16.msra.mxu0 0
    %433 = vmatprep.subr.bf16.mxu0 %v331
    %434 = vmatpush1.bf16.msra.mxu0 %v328
    %435 = vmatprep.subr.bf16.mxu0 0
    %436 = vmatpush2.bf16.msra.mxu0 0
    %437 = vmatprep.subr.bf16.mxu0 0
    %438 = vmatpush2.bf16.msra.mxu0 0
    %439 = vmatprep.subr.bf16.mxu0 0
    %440 = vmatpush2.bf16.msra.mxu0 0
    %441 = vmatprep.subr.bf16.mxu0 0
    %442 = vmatpush2.bf16.msra.mxu0 0
    %443 = vmatprep.subr.bf16.mxu0 0
    %444 = vmatpush2.bf16.msra.mxu0 0
    %445 = vmatprep.subr.bf16.mxu0 0
    %446 = vmatpush2.bf16.msra.mxu0 0
    %447 = vmatprep.subr.bf16.mxu0 0
    %448 = vmatpush2.bf16.msra.mxu0 0
    %449 = vmatprep.subr.bf16.mxu0 0
    %450 = vmatpush2.bf16.msra.mxu0 0
    %451 = vmatprep.mubr.bf16.mxu0 0
    %452 = vmatmul.mubr.bf16.gmra.mxu0 %v312
    %v453 = vpop.f32.mrf.mxu0
    %v454 = vadd.f32 0.0, %v453
    %v455 = vpop.f32.mrf.mxu0
    %v456 = vadd.f32 0.0, %v455
    %v457 = vpop.f32.mrf.mxu0
    %v458 = vadd.f32 0.0, %v457
    %v459 = vpop.f32.mrf.mxu0
    %v460 = vadd.f32 0.0, %v459
    %461 = vdwg.mxu0
    %v471 = vunpack.c.l.b16 %v282
    %v472 = vunpack.c.h.b16 %v282
    %v473 = vunpack.c.l.b16 %v283
    %v474 = vunpack.c.h.b16 %v283
    %v475 = vunpack.c.l.b16 %v284
    %v476 = vunpack.c.h.b16 %v284
    %v477 = vunpack.c.l.b16 %v285
    %v478 = vunpack.c.h.b16 %v285
    %v479 = vunpack.c.l.b16 %v286
    %v480 = vunpack.c.h.b16 %v286
    %v481 = vunpack.c.l.b16 %v287
    %v482 = vunpack.c.h.b16 %v287
    %v483 = vunpack.c.l.b16 %v288
    %v484 = vunpack.c.h.b16 %v288
    %v485 = vunpack.c.l.b16 %v289
    %v486 = vunpack.c.h.b16 %v289
    %v487 = vunpack.c.l.b16 %v290
    %v488 = vunpack.c.h.b16 %v290
    %v489 = vpack.c.b16 %v477, %v471
    %v490 = vpack.c.b16 %v478, %v472
    %v491 = vpack.c.b16 %v479, %v473
    %v492 = vpack.c.b16 %v480, %v474
    %v493 = vpack.c.b16 %v481, %v475
    %v494 = vpack.c.b16 %v482, %v476
    %v495 = vpack.c.b16 %v483, %v483
    %v496 = vpack.c.b16 %v484, %v484
    %v497 = vpack.c.b16 %v485, %v485
    %v498 = vpack.c.b16 %v486, %v486
    %v499 = vpack.c.b16 %v487, %v487
    %v500 = vpack.c.b16 %v488, %v488
    %vm507 = vcmask 138240
    %v509 = vsel %vm507, %v281, 0
    %vm511 = vcmask 1040384
    %v512 = vsel 0, 4294967295, 65535
    %v513 = vsel %vm511, %v512, 0
    %v515 = vand.u32 %v495, %v513
    %v518 = vand.u32 %v496, %v513
    %v521 = vand.u32 %v497, %v513
    %v524 = vand.u32 %v498, %v513
    %v527 = vand.u32 %v499, %v513
    %v530 = vand.u32 %v500, %v513
    %532 = vmatprep.subr.bf16.mxu0 0
    %533 = vmatpush1.bf16.msra.mxu0 0
    %534 = vmatprep.subr.bf16.mxu0 0
    %535 = vmatpush1.bf16.msra.mxu0 0
    %536 = vmatprep.subr.bf16.mxu0 0
    %537 = vmatpush1.bf16.msra.mxu0 0
    %538 = vmatprep.subr.bf16.mxu0 0
    %539 = vmatpush1.bf16.msra.mxu0 0
    %540 = vmatprep.subr.bf16.mxu0 0
    %541 = vmatpush1.bf16.msra.mxu0 0
    %542 = vmatprep.subr.bf16.mxu0 0
    %543 = vmatpush1.bf16.msra.mxu0 0
    %544 = vmatprep.subr.bf16.mxu0 %v518
    %545 = vmatpush1.bf16.msra.mxu0 %v515
    %546 = vmatprep.subr.bf16.mxu0 %v490
    %547 = vmatpush1.bf16.msra.mxu0 %v489
    %548 = vmatprep.subr.bf16.mxu0 0
    %549 = vmatpush2.bf16.msra.mxu0 0
    %550 = vmatprep.subr.bf16.mxu0 0
    %551 = vmatpush2.bf16.msra.mxu0 0
    %552 = vmatprep.subr.bf16.mxu0 0
    %553 = vmatpush2.bf16.msra.mxu0 0
    %554 = vmatprep.subr.bf16.mxu0 0
    %555 = vmatpush2.bf16.msra.mxu0 0
    %556 = vmatprep.subr.bf16.mxu0 0
    %557 = vmatpush2.bf16.msra.mxu0 0
    %558 = vmatprep.subr.bf16.mxu0 0
    %559 = vmatpush2.bf16.msra.mxu0 0
    %560 = vmatprep.subr.bf16.mxu0 0
    %561 = vmatpush2.bf16.msra.mxu0 0
    %562 = vmatprep.subr.bf16.mxu0 0
    %563 = vmatpush2.bf16.msra.mxu0 0
    %564 = vmatprep.mubr.bf16.mxu0 0
    %565 = vmatmul.mubr.bf16.gmra.mxu0 %v509
    %v566 = vpop.f32.mrf.mxu0
    %v567 = vadd.f32 %v368, %v566
    %v568 = vpop.f32.mrf.mxu0
    %v569 = vadd.f32 %v370, %v568
    %v570 = vpop.f32.mrf.mxu0
    %v571 = vadd.f32 %v372, %v570
    %v572 = vpop.f32.mrf.mxu0
    %v573 = vadd.f32 %v374, %v572
    %574 = vdwg.mxu0
    %575 = vmatprep.subr.bf16.mxu0 0
    %576 = vmatpush1.bf16.msra.mxu0 0
    %577 = vmatprep.subr.bf16.mxu0 0
    %578 = vmatpush1.bf16.msra.mxu0 0
    %579 = vmatprep.subr.bf16.mxu0 0
    %580 = vmatpush1.bf16.msra.mxu0 0
    %581 = vmatprep.subr.bf16.mxu0 0
    %582 = vmatpush1.bf16.msra.mxu0 0
    %583 = vmatprep.subr.bf16.mxu0 0
    %584 = vmatpush1.bf16.msra.mxu0 0
    %585 = vmatprep.subr.bf16.mxu0 0
    %586 = vmatpush1.bf16.msra.mxu0 0
    %587 = vmatprep.subr.bf16.mxu0 %v524
    %588 = vmatpush1.bf16.msra.mxu0 %v521
    %589 = vmatprep.subr.bf16.mxu0 %v492
    %590 = vmatpush1.bf16.msra.mxu0 %v491
    %591 = vmatprep.subr.bf16.mxu0 0
    %592 = vmatpush2.bf16.msra.mxu0 0
    %593 = vmatprep.subr.bf16.mxu0 0
    %594 = vmatpush2.bf16.msra.mxu0 0
    %595 = vmatprep.subr.bf16.mxu0 0
    %596 = vmatpush2.bf16.msra.mxu0 0
    %597 = vmatprep.subr.bf16.mxu0 0
    %598 = vmatpush2.bf16.msra.mxu0 0
    %599 = vmatprep.subr.bf16.mxu0 0
    %600 = vmatpush2.bf16.msra.mxu0 0
    %601 = vmatprep.subr.bf16.mxu0 0
    %602 = vmatpush2.bf16.msra.mxu0 0
    %603 = vmatprep.subr.bf16.mxu0 0
    %604 = vmatpush2.bf16.msra.mxu0 0
    %605 = vmatprep.subr.bf16.mxu0 0
    %606 = vmatpush2.bf16.msra.mxu0 0
    %607 = vmatprep.mubr.bf16.mxu0 0
    %608 = vmatmul.mubr.bf16.gmra.mxu0 %v509
    %v609 = vpop.f32.mrf.mxu0
    %v610 = vadd.f32 %v411, %v609
    %v611 = vpop.f32.mrf.mxu0
    %v612 = vadd.f32 %v413, %v611
    %v613 = vpop.f32.mrf.mxu0
    %v614 = vadd.f32 %v415, %v613
    %v615 = vpop.f32.mrf.mxu0
    %v616 = vadd.f32 %v417, %v615
    %617 = vdwg.mxu0
    %618 = vmatprep.subr.bf16.mxu0 0
    %619 = vmatpush1.bf16.msra.mxu0 0
    %620 = vmatprep.subr.bf16.mxu0 0
    %621 = vmatpush1.bf16.msra.mxu0 0
    %622 = vmatprep.subr.bf16.mxu0 0
    %623 = vmatpush1.bf16.msra.mxu0 0
    %624 = vmatprep.subr.bf16.mxu0 0
    %625 = vmatpush1.bf16.msra.mxu0 0
    %626 = vmatprep.subr.bf16.mxu0 0
    %627 = vmatpush1.bf16.msra.mxu0 0
    %628 = vmatprep.subr.bf16.mxu0 0
    %629 = vmatpush1.bf16.msra.mxu0 0
    %630 = vmatprep.subr.bf16.mxu0 %v530
    %631 = vmatpush1.bf16.msra.mxu0 %v527
    %632 = vmatprep.subr.bf16.mxu0 %v494
    %633 = vmatpush1.bf16.msra.mxu0 %v493
    %634 = vmatprep.subr.bf16.mxu0 0
    %635 = vmatpush2.bf16.msra.mxu0 0
    %636 = vmatprep.subr.bf16.mxu0 0
    %637 = vmatpush2.bf16.msra.mxu0 0
    %638 = vmatprep.subr.bf16.mxu0 0
    %639 = vmatpush2.bf16.msra.mxu0 0
    %640 = vmatprep.subr.bf16.mxu0 0
    %641 = vmatpush2.bf16.msra.mxu0 0
    %642 = vmatprep.subr.bf16.mxu0 0
    %643 = vmatpush2.bf16.msra.mxu0 0
    %644 = vmatprep.subr.bf16.mxu0 0
    %645 = vmatpush2.bf16.msra.mxu0 0
    %646 = vmatprep.subr.bf16.mxu0 0
    %647 = vmatpush2.bf16.msra.mxu0 0
    %648 = vmatprep.subr.bf16.mxu0 0
    %649 = vmatpush2.bf16.msra.mxu0 0
    %650 = vmatprep.mubr.bf16.mxu0 0
    %651 = vmatmul.mubr.bf16.gmra.mxu0 %v509
    %v652 = vpop.f32.mrf.mxu0
    %v653 = vadd.f32 %v454, %v652
    %v654 = vpop.f32.mrf.mxu0
    %v655 = vadd.f32 %v456, %v654
    %v656 = vpop.f32.mrf.mxu0
    %v657 = vadd.f32 %v458, %v656
    %v658 = vpop.f32.mrf.mxu0
    %v659 = vadd.f32 %v460, %v658
    %660 = vdwg.mxu0
    %v661 = vld [vmem:[#allocation11] sm:$0x3f]
    %v663 = vlaneseq
    %v664 = vshrl.u32 %v663, 7
    %v665 = vsub.s32 0, %v664
    %v666 = vrot.slane %v661, %v665
    %v667 = vlaneseq
    %v668 = vshrl.u32 %v667, 7
    %v669 = vsub.s32 1, %v668
    %v670 = vrot.slane %v661, %v669
    %v671 = vlaneseq
    %v672 = vshrl.u32 %v671, 7
    %v673 = vsub.s32 2, %v672
    %v674 = vrot.slane %v661, %v673
    %v675 = vlaneseq
    %v676 = vshrl.u32 %v675, 7
    %v677 = vsub.s32 3, %v676
    %v678 = vrot.slane %v661, %v677
    %v679 = vlaneseq
    %v680 = vshrl.u32 %v679, 7
    %v681 = vsub.s32 4, %v680
    %v682 = vrot.slane %v661, %v681
    %v683 = vlaneseq
    %v684 = vshrl.u32 %v683, 7
    %v685 = vsub.s32 5, %v684
    %v686 = vrot.slane %v661, %v685
    %v693 = vadd.f32 %v567, %v666
    %v694 = vadd.f32 %v569, %v670
    %v695 = vadd.f32 %v610, %v674
    %v696 = vadd.f32 %v612, %v678
    %v697 = vadd.f32 %v653, %v682
    %v698 = vadd.f32 %v655, %v686
    %v699 = vadd.f32 %v571, %v666
    %v700 = vadd.f32 %v573, %v670
    %v701 = vadd.f32 %v614, %v674
    %v702 = vadd.f32 %v616, %v678
    %v703 = vadd.f32 %v657, %v682
    %v704 = vadd.f32 %v659, %v686
    %v705 = vmax.f32 %v693, 0.0
    %v706 = vmax.f32 %v694, 0.0
    %v707 = vmax.f32 %v695, 0.0
    %v708 = vmax.f32 %v696, 0.0
    %v709 = vmax.f32 %v697, 0.0
    %v710 = vmax.f32 %v698, 0.0
    %v711 = vmax.f32 %v699, 0.0
    %v712 = vmax.f32 %v700, 0.0
    %v713 = vmax.f32 %v701, 0.0
    %v714 = vmax.f32 %v702, 0.0
    %v715 = vmax.f32 %v703, 0.0
    %v716 = vmax.f32 %v704, 0.0
    %v717 = vpack.c.bf16 %v711, %v705
    %v718 = vpack.c.bf16 %v712, %v706
    %v719 = vpack.c.bf16 %v713, %v707
    %v720 = vpack.c.bf16 %v714, %v708
    %v721 = vpack.c.bf16 %v715, %v709
    %v722 = vpack.c.bf16 %v716, %v710
    %v723 = vld [vmem:[#allocation13] sm:$0xff]
    %v724 = vld [vmem:[#allocation13 + $0x8] sm:$0xff]
    %v725 = vld [vmem:[#allocation13 + $0x10] sm:$0xff]
    %v726 = vld [vmem:[#allocation13 + $0x18] sm:$0xff]
    %v727 = vld [vmem:[#allocation13 + $0x20] sm:$0xff]
    %v728 = vld [vmem:[#allocation13 + $0x28] sm:$0xff]
    %v729 = vld [vmem:[#allocation13 + $0x30] sm:$0xff]
    %v730 = vld [vmem:[#allocation13 + $0x38] sm:$0xff]
    %v731 = vld [vmem:[#allocation13 + $0x40] sm:$0xff]
    %v732 = vld [vmem:[#allocation13 + $0x48] sm:$0xff]
    %v733 = vld [vmem:[#allocation13 + $0x50] sm:$0xff]
    %v734 = vld [vmem:[#allocation13 + $0x58] sm:$0xff]
    %v735 = vld [vmem:[#allocation13 + $0x60] sm:$0xff]
    %v736 = vld [vmem:[#allocation13 + $0x68] sm:$0xff]
    %v737 = vld [vmem:[#allocation13 + $0x70] sm:$0xff]
    %v738 = vld [vmem:[#allocation13 + $0x78] sm:$0xff]
    %v739 = vld [vmem:[#allocation13 + $0x80] sm:$0xff]
    %v740 = vld [vmem:[#allocation13 + $0x88] sm:$0xff]
    %v741 = vld [vmem:[#allocation13 + $0x90] sm:$0xff]
    %v742 = vld [vmem:[#allocation13 + $0x98] sm:$0xff]
    %v743 = vld [vmem:[#allocation13 + $0xa0] sm:$0xff]
    %v744 = vld [vmem:[#allocation13 + $0xa8] sm:$0xff]
    %v745 = vld [vmem:[#allocation13 + $0xb0] sm:$0xff]
    %v746 = vld [vmem:[#allocation13 + $0xb8] sm:$0xff]
    %v747 = vld [vmem:[#allocation13 + $0xc0] sm:$0xff]
    %v748 = vld [vmem:[#allocation13 + $0xc8] sm:$0xff]
    %v749 = vld [vmem:[#allocation13 + $0xd0] sm:$0xff]
    %v750 = vld [vmem:[#allocation13 + $0xd8] sm:$0xff]
    %v751 = vld [vmem:[#allocation13 + $0xe0] sm:$0xff]
    %v752 = vld [vmem:[#allocation13 + $0xe8] sm:$0xff]
    %v753 = vld [vmem:[#allocation13 + $0xf0] sm:$0xff]
    %v754 = vld [vmem:[#allocation13 + $0xf8] sm:$0xff]
    %v755 = vld [vmem:[#allocation13 + $0x100] sm:$0xff]
    %v756 = vld [vmem:[#allocation13 + $0x108] sm:$0xff]
    %v757 = vld [vmem:[#allocation13 + $0x110] sm:$0xff]
    %v758 = vld [vmem:[#allocation13 + $0x118] sm:$0xff]
    %v759 = vld [vmem:[#allocation13 + $0x120] sm:$0xff]
    %v760 = vld [vmem:[#allocation13 + $0x128] sm:$0xff]
    %v761 = vld [vmem:[#allocation13 + $0x130] sm:$0xff]
    %v762 = vld [vmem:[#allocation13 + $0x138] sm:$0xff]
    %v763 = vld [vmem:[#allocation13 + $0x140] sm:$0xff]
    %v764 = vld [vmem:[#allocation13 + $0x148] sm:$0xff]
    %v765 = vld [vmem:[#allocation13 + $0x150] sm:$0xff]
    %v766 = vld [vmem:[#allocation13 + $0x158] sm:$0xff]
    %v767 = vld [vmem:[#allocation13 + $0x160] sm:$0xff]
    %v768 = vld [vmem:[#allocation13 + $0x168] sm:$0xff]
    %v769 = vld [vmem:[#allocation13 + $0x170] sm:$0xff]
    %v770 = vld [vmem:[#allocation13 + $0x178] sm:$0xff]
    %v771 = vld [vmem:[#allocation13 + $0x180] sm:$0xff]
    %v772 = vld [vmem:[#allocation13 + $0x188] sm:$0xff]
    %v773 = vld [vmem:[#allocation13 + $0x190] sm:$0xff]
    %v774 = vld [vmem:[#allocation13 + $0x198] sm:$0xff]
    %v775 = vld [vmem:[#allocation13 + $0x1a0] sm:$0xff]
    %v776 = vld [vmem:[#allocation13 + $0x1a8] sm:$0xff]
    %v777 = vld [vmem:[#allocation13 + $0x1b0] sm:$0xff]
    %v778 = vld [vmem:[#allocation13 + $0x1b8] sm:$0xff]
    %v779 = vld [vmem:[#allocation13 + $0x1c0] sm:$0xff]
    %v780 = vld [vmem:[#allocation13 + $0x1c8] sm:$0xff]
    %v781 = vld [vmem:[#allocation13 + $0x1d0] sm:$0xff]
    %v782 = vld [vmem:[#allocation13 + $0x1d8] sm:$0xff]
    %v783 = vld [vmem:[#allocation13 + $0x1e0] sm:$0xff]
    %v784 = vld [vmem:[#allocation13 + $0x1e8] sm:$0xff]
    %v785 = vld [vmem:[#allocation13 + $0x1f0] sm:$0xff]
    %v786 = vld [vmem:[#allocation13 + $0x1f8] sm:$0xff]
    %v787 = vld [vmem:[#allocation13 + $0x200] sm:$0xff]
    %v788 = vld [vmem:[#allocation13 + $0x208] sm:$0xff]
    %v789 = vld [vmem:[#allocation13 + $0x210] sm:$0xff]
    %v790 = vld [vmem:[#allocation13 + $0x218] sm:$0xff]
    %v791 = vld [vmem:[#allocation13 + $0x220] sm:$0xff]
    %v792 = vld [vmem:[#allocation13 + $0x228] sm:$0xff]
    %v793 = vld [vmem:[#allocation13 + $0x230] sm:$0xff]
    %v794 = vld [vmem:[#allocation13 + $0x238] sm:$0xff]
    %v795 = vld [vmem:[#allocation13 + $0x240] sm:$0xff]
    %v796 = vld [vmem:[#allocation13 + $0x248] sm:$0xff]
    %v797 = vld [vmem:[#allocation13 + $0x250] sm:$0xff]
    %v798 = vld [vmem:[#allocation13 + $0x258] sm:$0xff]
    %v799 = vld [vmem:[#allocation13 + $0x260] sm:$0xff]
    %v800 = vld [vmem:[#allocation13 + $0x268] sm:$0xff]
    %v801 = vld [vmem:[#allocation13 + $0x270] sm:$0xff]
    %v802 = vld [vmem:[#allocation13 + $0x278] sm:$0xff]
    %v803 = vld [vmem:[#allocation13 + $0x280] sm:$0xff]
    %v804 = vld [vmem:[#allocation13 + $0x288] sm:$0xff]
    %v805 = vld [vmem:[#allocation13 + $0x290] sm:$0xff]
    %v806 = vld [vmem:[#allocation13 + $0x298] sm:$0xff]
    %v807 = vld [vmem:[#allocation13 + $0x2a0] sm:$0xff]
    %v808 = vld [vmem:[#allocation13 + $0x2a8] sm:$0xff]
    %v809 = vld [vmem:[#allocation13 + $0x2b0] sm:$0xff]
    %v810 = vld [vmem:[#allocation13 + $0x2b8] sm:$0xff]
    %v811 = vld [vmem:[#allocation13 + $0x2c0] sm:$0xff]
    %v812 = vld [vmem:[#allocation13 + $0x2c8] sm:$0xff]
    %v813 = vld [vmem:[#allocation13 + $0x2d0] sm:$0xff]
    %v814 = vld [vmem:[#allocation13 + $0x2d8] sm:$0xff]
    %v815 = vld [vmem:[#allocation13 + $0x2e0] sm:$0xff]
    %v816 = vld [vmem:[#allocation13 + $0x2e8] sm:$0xff]
    %v817 = vld [vmem:[#allocation13 + $0x2f0] sm:$0xff]
    %v818 = vld [vmem:[#allocation13 + $0x2f8] sm:$0xff]
    %v819 = vld [vmem:[#allocation13 + $0x300] sm:$0xff]
    %v820 = vld [vmem:[#allocation13 + $0x308] sm:$0xff]
    %v821 = vld [vmem:[#allocation13 + $0x310] sm:$0xff]
    %v822 = vld [vmem:[#allocation13 + $0x318] sm:$0xff]
    %v823 = vld [vmem:[#allocation13 + $0x320] sm:$0xff]
    %v824 = vld [vmem:[#allocation13 + $0x328] sm:$0xff]
    %v825 = vld [vmem:[#allocation13 + $0x330] sm:$0xff]
    %v826 = vld [vmem:[#allocation13 + $0x338] sm:$0xff]
    %v827 = vld [vmem:[#allocation13 + $0x340] sm:$0xff]
    %v828 = vld [vmem:[#allocation13 + $0x348] sm:$0xff]
    %v829 = vld [vmem:[#allocation13 + $0x350] sm:$0xff]
    %v830 = vld [vmem:[#allocation13 + $0x358] sm:$0xff]
    %v831 = vld [vmem:[#allocation13 + $0x360] sm:$0xff]
    %v832 = vld [vmem:[#allocation13 + $0x368] sm:$0xff]
    %v833 = vld [vmem:[#allocation13 + $0x370] sm:$0xff]
    %v834 = vld [vmem:[#allocation13 + $0x378] sm:$0xff]
    %v835 = vld [vmem:[#allocation13 + $0x380] sm:$0xff]
    %v836 = vld [vmem:[#allocation13 + $0x388] sm:$0xff]
    %v837 = vld [vmem:[#allocation13 + $0x390] sm:$0xff]
    %v838 = vld [vmem:[#allocation13 + $0x398] sm:$0xff]
    %v839 = vld [vmem:[#allocation13 + $0x3a0] sm:$0xff]
    %v840 = vld [vmem:[#allocation13 + $0x3a8] sm:$0xff]
    %v841 = vld [vmem:[#allocation13 + $0x3b0] sm:$0xff]
    %v842 = vld [vmem:[#allocation13 + $0x3b8] sm:$0xff]
    %v843 = vld [vmem:[#allocation13 + $0x3c0] sm:$0xff]
    %v844 = vld [vmem:[#allocation13 + $0x3c8] sm:$0xff]
    %v845 = vld [vmem:[#allocation13 + $0x3d0] sm:$0xff]
    %v846 = vld [vmem:[#allocation13 + $0x3d8] sm:$0xff]
    %v847 = vld [vmem:[#allocation13 + $0x3e0] sm:$0xff]
    %v848 = vld [vmem:[#allocation13 + $0x3e8] sm:$0xff]
    %v849 = vld [vmem:[#allocation13 + $0x3f0] sm:$0xff]
    %v850 = vld [vmem:[#allocation13 + $0x3f8] sm:$0xff]
    %v851 = vld [vmem:[#allocation13 + $0x400] sm:$0xff]
    %v852 = vld [vmem:[#allocation13 + $0x408] sm:$0xff]
    %v853 = vld [vmem:[#allocation13 + $0x410] sm:$0xff]
    %v854 = vld [vmem:[#allocation13 + $0x418] sm:$0xff]
    %v855 = vld [vmem:[#allocation13 + $0x420] sm:$0xff]
    %v856 = vld [vmem:[#allocation13 + $0x428] sm:$0xff]
    %v857 = vld [vmem:[#allocation13 + $0x430] sm:$0xff]
    %v858 = vld [vmem:[#allocation13 + $0x438] sm:$0xff]
    %v859 = vld [vmem:[#allocation13 + $0x440] sm:$0xff]
    %v860 = vld [vmem:[#allocation13 + $0x448] sm:$0xff]
    %v861 = vld [vmem:[#allocation13 + $0x450] sm:$0xff]
    %v862 = vld [vmem:[#allocation13 + $0x458] sm:$0xff]
    %v863 = vld [vmem:[#allocation13 + $0x460] sm:$0xff]
    %v864 = vld [vmem:[#allocation13 + $0x468] sm:$0xff]
    %v865 = vld [vmem:[#allocation13 + $0x470] sm:$0xff]
    %v866 = vld [vmem:[#allocation13 + $0x478] sm:$0xff]
    %v867 = vld [vmem:[#allocation13 + $0x480] sm:$0xff]
    %v868 = vld [vmem:[#allocation13 + $0x488] sm:$0xff]
    %v869 = vld [vmem:[#allocation13 + $0x490] sm:$0xff]
    %v870 = vld [vmem:[#allocation13 + $0x498] sm:$0xff]
    %v871 = vld [vmem:[#allocation13 + $0x4a0] sm:$0xff]
    %v872 = vld [vmem:[#allocation13 + $0x4a8] sm:$0xff]
    %v873 = vld [vmem:[#allocation13 + $0x4b0] sm:$0xff]
    %v874 = vld [vmem:[#allocation13 + $0x4b8] sm:$0xff]
    %v875 = vld [vmem:[#allocation13 + $0x4c0] sm:$0xff]
    %v876 = vld [vmem:[#allocation13 + $0x4c8] sm:$0xff]
    %v877 = vld [vmem:[#allocation13 + $0x4d0] sm:$0xff]
    %v878 = vld [vmem:[#allocation13 + $0x4d8] sm:$0xff]
    %v879 = vld [vmem:[#allocation13 + $0x4e0] sm:$0xff]
    %v880 = vld [vmem:[#allocation13 + $0x4e8] sm:$0xff]
    %v881 = vld [vmem:[#allocation13 + $0x4f0] sm:$0xff]
    %v882 = vld [vmem:[#allocation13 + $0x4f8] sm:$0xff]
    %v883 = vld [vmem:[#allocation13 + $0x500] sm:$0xff]
    %v884 = vld [vmem:[#allocation13 + $0x508] sm:$0xff]
    %v885 = vld [vmem:[#allocation13 + $0x510] sm:$0xff]
    %v886 = vld [vmem:[#allocation13 + $0x518] sm:$0xff]
    %v887 = vld [vmem:[#allocation13 + $0x520] sm:$0xff]
    %v888 = vld [vmem:[#allocation13 + $0x528] sm:$0xff]
    %v889 = vld [vmem:[#allocation13 + $0x530] sm:$0xff]
    %v890 = vld [vmem:[#allocation13 + $0x538] sm:$0xff]
    %v891 = vld [vmem:[#allocation13 + $0x540] sm:$0xff]
    %v892 = vld [vmem:[#allocation13 + $0x548] sm:$0xff]
    %v893 = vld [vmem:[#allocation13 + $0x550] sm:$0xff]
    %v894 = vld [vmem:[#allocation13 + $0x558] sm:$0xff]
    %v895 = vld [vmem:[#allocation13 + $0x560] sm:$0xff]
    %v896 = vld [vmem:[#allocation13 + $0x568] sm:$0xff]
    %v897 = vld [vmem:[#allocation13 + $0x570] sm:$0xff]
    %v898 = vld [vmem:[#allocation13 + $0x578] sm:$0xff]
    %v899 = vld [vmem:[#allocation13 + $0x580] sm:$0xff]
    %v900 = vld [vmem:[#allocation13 + $0x588] sm:$0xff]
    %v901 = vld [vmem:[#allocation13 + $0x590] sm:$0xff]
    %v902 = vld [vmem:[#allocation13 + $0x598] sm:$0xff]
    %v903 = vld [vmem:[#allocation13 + $0x5a0] sm:$0xff]
    %v904 = vld [vmem:[#allocation13 + $0x5a8] sm:$0xff]
    %v905 = vld [vmem:[#allocation13 + $0x5b0] sm:$0xff]
    %v906 = vld [vmem:[#allocation13 + $0x5b8] sm:$0xff]
    %v907 = vld [vmem:[#allocation13 + $0x5c0] sm:$0xff]
    %v908 = vld [vmem:[#allocation13 + $0x5c8] sm:$0xff]
    %v909 = vld [vmem:[#allocation13 + $0x5d0] sm:$0xff]
    %v910 = vld [vmem:[#allocation13 + $0x5d8] sm:$0xff]
    %v911 = vld [vmem:[#allocation13 + $0x5e0] sm:$0xff]
    %v912 = vld [vmem:[#allocation13 + $0x5e8] sm:$0xff]
    %v913 = vld [vmem:[#allocation13 + $0x5f0] sm:$0xff]
    %v914 = vld [vmem:[#allocation13 + $0x5f8] sm:$0xff]
    %v915 = vld [vmem:[#allocation13 + $0x600] sm:$0xff]
    %v916 = vld [vmem:[#allocation13 + $0x608] sm:$0xff]
    %v917 = vld [vmem:[#allocation13 + $0x610] sm:$0xff]
    %v918 = vld [vmem:[#allocation13 + $0x618] sm:$0xff]
    %v919 = vld [vmem:[#allocation13 + $0x620] sm:$0xff]
    %v920 = vld [vmem:[#allocation13 + $0x628] sm:$0xff]
    %v921 = vld [vmem:[#allocation13 + $0x630] sm:$0xff]
    %v922 = vld [vmem:[#allocation13 + $0x638] sm:$0xff]
    %v923 = vld [vmem:[#allocation13 + $0x640] sm:$0xff]
    %v924 = vld [vmem:[#allocation13 + $0x648] sm:$0xff]
    %v925 = vld [vmem:[#allocation13 + $0x650] sm:$0xff]
    %v926 = vld [vmem:[#allocation13 + $0x658] sm:$0xff]
    %v927 = vld [vmem:[#allocation13 + $0x660] sm:$0xff]
    %v928 = vld [vmem:[#allocation13 + $0x668] sm:$0xff]
    %v929 = vld [vmem:[#allocation13 + $0x670] sm:$0xff]
    %v930 = vld [vmem:[#allocation13 + $0x678] sm:$0xff]
    %v931 = vld [vmem:[#allocation13 + $0x680] sm:$0xff]
    %v932 = vld [vmem:[#allocation13 + $0x688] sm:$0xff]
    %v933 = vld [vmem:[#allocation13 + $0x690] sm:$0xff]
    %v934 = vld [vmem:[#allocation13 + $0x698] sm:$0xff]
    %v935 = vld [vmem:[#allocation13 + $0x6a0] sm:$0xff]
    %v936 = vld [vmem:[#allocation13 + $0x6a8] sm:$0xff]
    %v937 = vld [vmem:[#allocation13 + $0x6b0] sm:$0xff]
    %v938 = vld [vmem:[#allocation13 + $0x6b8] sm:$0xff]
    %v939 = vld [vmem:[#allocation13 + $0x6c0] sm:$0xff]
    %v940 = vld [vmem:[#allocation13 + $0x6c8] sm:$0xff]
    %v941 = vld [vmem:[#allocation13 + $0x6d0] sm:$0xff]
    %v942 = vld [vmem:[#allocation13 + $0x6d8] sm:$0xff]
    %v943 = vld [vmem:[#allocation13 + $0x6e0] sm:$0xff]
    %v944 = vld [vmem:[#allocation13 + $0x6e8] sm:$0xff]
    %v945 = vld [vmem:[#allocation13 + $0x6f0] sm:$0xff]
    %v946 = vld [vmem:[#allocation13 + $0x6f8] sm:$0xff]
    %v947 = vld [vmem:[#allocation13 + $0x700] sm:$0xff]
    %v948 = vld [vmem:[#allocation13 + $0x708] sm:$0xff]
    %v949 = vld [vmem:[#allocation13 + $0x710] sm:$0xff]
    %v950 = vld [vmem:[#allocation13 + $0x718] sm:$0xff]
    %v951 = vld [vmem:[#allocation13 + $0x720] sm:$0xff]
    %v952 = vld [vmem:[#allocation13 + $0x728] sm:$0xff]
    %v953 = vld [vmem:[#allocation13 + $0x730] sm:$0xff]
    %v954 = vld [vmem:[#allocation13 + $0x738] sm:$0xff]
    %v955 = vld [vmem:[#allocation13 + $0x740] sm:$0xff]
    %v956 = vld [vmem:[#allocation13 + $0x748] sm:$0xff]
    %v957 = vld [vmem:[#allocation13 + $0x750] sm:$0xff]
    %v958 = vld [vmem:[#allocation13 + $0x758] sm:$0xff]
    %v959 = vld [vmem:[#allocation13 + $0x760] sm:$0xff]
    %v960 = vld [vmem:[#allocation13 + $0x768] sm:$0xff]
    %v961 = vld [vmem:[#allocation13 + $0x770] sm:$0xff]
    %v962 = vld [vmem:[#allocation13 + $0x778] sm:$0xff]
    %v963 = vld [vmem:[#allocation13 + $0x780] sm:$0xff]
    %v964 = vld [vmem:[#allocation13 + $0x788] sm:$0xff]
    %v965 = vld [vmem:[#allocation13 + $0x790] sm:$0xff]
    %v966 = vld [vmem:[#allocation13 + $0x798] sm:$0xff]
    %v967 = vld [vmem:[#allocation13 + $0x7a0] sm:$0xff]
    %v968 = vld [vmem:[#allocation13 + $0x7a8] sm:$0xff]
    %v969 = vld [vmem:[#allocation13 + $0x7b0] sm:$0xff]
    %v970 = vld [vmem:[#allocation13 + $0x7b8] sm:$0xff]
    %v971 = vld [vmem:[#allocation13 + $0x7c0] sm:$0xff]
    %v972 = vld [vmem:[#allocation13 + $0x7c8] sm:$0xff]
    %v973 = vld [vmem:[#allocation13 + $0x7d0] sm:$0xff]
    %v974 = vld [vmem:[#allocation13 + $0x7d8] sm:$0xff]
    %v975 = vld [vmem:[#allocation13 + $0x7e0] sm:$0xff]
    %v976 = vld [vmem:[#allocation13 + $0x7e8] sm:$0xff]
    %v977 = vld [vmem:[#allocation13 + $0x7f0] sm:$0xff]
    %v978 = vld [vmem:[#allocation13 + $0x7f8] sm:$0xff]
    %v979 = vld [vmem:[#allocation13 + $0x800] sm:$0xff]
    %v980 = vld [vmem:[#allocation13 + $0x808] sm:$0xff]
    %v981 = vld [vmem:[#allocation13 + $0x810] sm:$0xff]
    %v982 = vld [vmem:[#allocation13 + $0x818] sm:$0xff]
    %v983 = vld [vmem:[#allocation13 + $0x820] sm:$0xff]
    %v984 = vld [vmem:[#allocation13 + $0x828] sm:$0xff]
    %v985 = vld [vmem:[#allocation13 + $0x830] sm:$0xff]
    %v986 = vld [vmem:[#allocation13 + $0x838] sm:$0xff]
    %v987 = vld [vmem:[#allocation13 + $0x840] sm:$0xff]
    %v988 = vld [vmem:[#allocation13 + $0x848] sm:$0xff]
    %v989 = vld [vmem:[#allocation13 + $0x850] sm:$0xff]
    %v990 = vld [vmem:[#allocation13 + $0x858] sm:$0xff]
    %v991 = vld [vmem:[#allocation13 + $0x860] sm:$0xff]
    %v992 = vld [vmem:[#allocation13 + $0x868] sm:$0xff]
    %v993 = vld [vmem:[#allocation13 + $0x870] sm:$0xff]
    %v994 = vld [vmem:[#allocation13 + $0x878] sm:$0xff]
    %v995 = vld [vmem:[#allocation13 + $0x880] sm:$0xff]
    %v996 = vld [vmem:[#allocation13 + $0x888] sm:$0xff]
    %v997 = vld [vmem:[#allocation13 + $0x890] sm:$0xff]
    %v998 = vld [vmem:[#allocation13 + $0x898] sm:$0xff]
    %v999 = vld [vmem:[#allocation13 + $0x8a0] sm:$0xff]
    %v1000 = vld [vmem:[#allocation13 + $0x8a8] sm:$0xff]
    %v1001 = vld [vmem:[#allocation13 + $0x8b0] sm:$0xff]
    %v1002 = vld [vmem:[#allocation13 + $0x8b8] sm:$0xff]
    %v1003 = vld [vmem:[#allocation13 + $0x8c0] sm:$0xff]
    %v1004 = vld [vmem:[#allocation13 + $0x8c8] sm:$0xff]
    %v1005 = vld [vmem:[#allocation13 + $0x8d0] sm:$0xff]
    %v1006 = vld [vmem:[#allocation13 + $0x8d8] sm:$0xff]
    %v1007 = vld [vmem:[#allocation13 + $0x8e0] sm:$0xff]
    %v1008 = vld [vmem:[#allocation13 + $0x8e8] sm:$0xff]
    %v1009 = vld [vmem:[#allocation13 + $0x8f0] sm:$0xff]
    %v1010 = vld [vmem:[#allocation13 + $0x8f8] sm:$0xff]
    %v1011 = vld [vmem:[#allocation14] sm:$0x3f]
    %v1013 = vlaneseq
    %v1014 = vshrl.u32 %v1013, 7
    %v1015 = vsub.s32 0, %v1014
    %v1016 = vrot.slane %v1011, %v1015
    %v1017 = vlaneseq
    %v1018 = vshrl.u32 %v1017, 7
    %v1019 = vsub.s32 1, %v1018
    %v1020 = vrot.slane %v1011, %v1019
    %v1021 = vlaneseq
    %v1022 = vshrl.u32 %v1021, 7
    %v1023 = vsub.s32 2, %v1022
    %v1024 = vrot.slane %v1011, %v1023
    %v1025 = vlaneseq
    %v1026 = vshrl.u32 %v1025, 7
    %v1027 = vsub.s32 3, %v1026
    %v1028 = vrot.slane %v1011, %v1027
    %v1029 = vlaneseq
    %v1030 = vshrl.u32 %v1029, 7
    %v1031 = vsub.s32 4, %v1030
    %v1032 = vrot.slane %v1011, %v1031
    %v1033 = vlaneseq
    %v1034 = vshrl.u32 %v1033, 7
    %v1035 = vsub.s32 5, %v1034
    %v1036 = vrot.slane %v1011, %v1035
    %v1331 = vunpack.c.l.b16 %v723
    %v1332 = vunpack.c.h.b16 %v723
    %v1333 = vunpack.c.l.b16 %v724
    %v1334 = vunpack.c.h.b16 %v724
    %v1335 = vunpack.c.l.b16 %v725
    %v1336 = vunpack.c.h.b16 %v725
    %v1337 = vunpack.c.l.b16 %v726
    %v1338 = vunpack.c.h.b16 %v726
    %v1339 = vunpack.c.l.b16 %v727
    %v1340 = vunpack.c.h.b16 %v727
    %v1341 = vunpack.c.l.b16 %v728
    %v1342 = vunpack.c.h.b16 %v728
    %v1343 = vunpack.c.l.b16 %v729
    %v1344 = vunpack.c.h.b16 %v729
    %v1345 = vunpack.c.l.b16 %v730
    %v1346 = vunpack.c.h.b16 %v730
    %v1347 = vunpack.c.l.b16 %v731
    %v1348 = vunpack.c.h.b16 %v731
    %v1349 = vunpack.c.l.b16 %v732
    %v1350 = vunpack.c.h.b16 %v732
    %v1351 = vunpack.c.l.b16 %v733
    %v1352 = vunpack.c.h.b16 %v733
    %v1353 = vunpack.c.l.b16 %v734
    %v1354 = vunpack.c.h.b16 %v734
    %v1355 = vunpack.c.l.b16 %v735
    %v1356 = vunpack.c.h.b16 %v735
    %v1357 = vunpack.c.l.b16 %v736
    %v1358 = vunpack.c.h.b16 %v736
    %v1359 = vunpack.c.l.b16 %v737
    %v1360 = vunpack.c.h.b16 %v737
    %v1361 = vunpack.c.l.b16 %v738
    %v1362 = vunpack.c.h.b16 %v738
    %v1363 = vunpack.c.l.b16 %v739
    %v1364 = vunpack.c.h.b16 %v739
    %v1365 = vunpack.c.l.b16 %v740
    %v1366 = vunpack.c.h.b16 %v740
    %v1367 = vunpack.c.l.b16 %v741
    %v1368 = vunpack.c.h.b16 %v741
    %v1369 = vunpack.c.l.b16 %v742
    %v1370 = vunpack.c.h.b16 %v742
    %v1371 = vunpack.c.l.b16 %v743
    %v1372 = vunpack.c.h.b16 %v743
    %v1373 = vunpack.c.l.b16 %v744
    %v1374 = vunpack.c.h.b16 %v744
    %v1375 = vunpack.c.l.b16 %v745
    %v1376 = vunpack.c.h.b16 %v745
    %v1377 = vunpack.c.l.b16 %v746
    %v1378 = vunpack.c.h.b16 %v746
    %v1379 = vunpack.c.l.b16 %v747
    %v1380 = vunpack.c.h.b16 %v747
    %v1381 = vunpack.c.l.b16 %v748
    %v1382 = vunpack.c.h.b16 %v748
    %v1383 = vunpack.c.l.b16 %v749
    %v1384 = vunpack.c.h.b16 %v749
    %v1385 = vunpack.c.l.b16 %v750
    %v1386 = vunpack.c.h.b16 %v750
    %v1387 = vunpack.c.l.b16 %v751
    %v1388 = vunpack.c.h.b16 %v751
    %v1389 = vunpack.c.l.b16 %v752
    %v1390 = vunpack.c.h.b16 %v752
    %v1391 = vunpack.c.l.b16 %v753
    %v1392 = vunpack.c.h.b16 %v753
    %v1393 = vunpack.c.l.b16 %v754
    %v1394 = vunpack.c.h.b16 %v754
    %v1395 = vunpack.c.l.b16 %v755
    %v1396 = vunpack.c.h.b16 %v755
    %v1397 = vunpack.c.l.b16 %v756
    %v1398 = vunpack.c.h.b16 %v756
    %v1399 = vunpack.c.l.b16 %v757
    %v1400 = vunpack.c.h.b16 %v757
    %v1401 = vunpack.c.l.b16 %v758
    %v1402 = vunpack.c.h.b16 %v758
    %v1403 = vunpack.c.l.b16 %v759
    %v1404 = vunpack.c.h.b16 %v759
    %v1405 = vunpack.c.l.b16 %v760
    %v1406 = vunpack.c.h.b16 %v760
    %v1407 = vunpack.c.l.b16 %v761
    %v1408 = vunpack.c.h.b16 %v761
    %v1409 = vunpack.c.l.b16 %v762
    %v1410 = vunpack.c.h.b16 %v762
    %v1411 = vunpack.c.l.b16 %v763
    %v1412 = vunpack.c.h.b16 %v763
    %v1413 = vunpack.c.l.b16 %v764
    %v1414 = vunpack.c.h.b16 %v764
    %v1415 = vunpack.c.l.b16 %v765
    %v1416 = vunpack.c.h.b16 %v765
    %v1417 = vunpack.c.l.b16 %v766
    %v1418 = vunpack.c.h.b16 %v766
    %v1419 = vunpack.c.l.b16 %v767
    %v1420 = vunpack.c.h.b16 %v767
    %v1421 = vunpack.c.l.b16 %v768
    %v1422 = vunpack.c.h.b16 %v768
    %v1423 = vunpack.c.l.b16 %v769
    %v1424 = vunpack.c.h.b16 %v769
    %v1425 = vunpack.c.l.b16 %v770
    %v1426 = vunpack.c.h.b16 %v770
    %v1427 = vunpack.c.l.b16 %v771
    %v1428 = vunpack.c.h.b16 %v771
    %v1429 = vunpack.c.l.b16 %v772
    %v1430 = vunpack.c.h.b16 %v772
    %v1431 = vunpack.c.l.b16 %v773
    %v1432 = vunpack.c.h.b16 %v773
    %v1433 = vunpack.c.l.b16 %v774
    %v1434 = vunpack.c.h.b16 %v774
    %v1435 = vunpack.c.l.b16 %v775
    %v1436 = vunpack.c.h.b16 %v775
    %v1437 = vunpack.c.l.b16 %v776
    %v1438 = vunpack.c.h.b16 %v776
    %v1439 = vunpack.c.l.b16 %v777
    %v1440 = vunpack.c.h.b16 %v777
    %v1441 = vunpack.c.l.b16 %v778
    %v1442 = vunpack.c.h.b16 %v778
    %v1443 = vunpack.c.l.b16 %v779
    %v1444 = vunpack.c.h.b16 %v779
    %v1445 = vunpack.c.l.b16 %v780
    %v1446 = vunpack.c.h.b16 %v780
    %v1447 = vunpack.c.l.b16 %v781
    %v1448 = vunpack.c.h.b16 %v781
    %v1449 = vunpack.c.l.b16 %v782
    %v1450 = vunpack.c.h.b16 %v782
    %v1451 = vunpack.c.l.b16 %v783
    %v1452 = vunpack.c.h.b16 %v783
    %v1453 = vunpack.c.l.b16 %v784
    %v1454 = vunpack.c.h.b16 %v784
    %v1455 = vunpack.c.l.b16 %v785
    %v1456 = vunpack.c.h.b16 %v785
    %v1457 = vunpack.c.l.b16 %v786
    %v1458 = vunpack.c.h.b16 %v786
    %v1459 = vunpack.c.l.b16 %v787
    %v1460 = vunpack.c.h.b16 %v787
    %v1461 = vunpack.c.l.b16 %v788
    %v1462 = vunpack.c.h.b16 %v788
    %v1463 = vunpack.c.l.b16 %v789
    %v1464 = vunpack.c.h.b16 %v789
    %v1465 = vunpack.c.l.b16 %v790
    %v1466 = vunpack.c.h.b16 %v790
    %v1467 = vunpack.c.l.b16 %v791
    %v1468 = vunpack.c.h.b16 %v791
    %v1469 = vunpack.c.l.b16 %v792
    %v1470 = vunpack.c.h.b16 %v792
    %v1471 = vunpack.c.l.b16 %v793
    %v1472 = vunpack.c.h.b16 %v793
    %v1473 = vunpack.c.l.b16 %v794
    %v1474 = vunpack.c.h.b16 %v794
    %v1475 = vunpack.c.l.b16 %v795
    %v1476 = vunpack.c.h.b16 %v795
    %v1477 = vunpack.c.l.b16 %v796
    %v1478 = vunpack.c.h.b16 %v796
    %v1479 = vunpack.c.l.b16 %v797
    %v1480 = vunpack.c.h.b16 %v797
    %v1481 = vunpack.c.l.b16 %v798
    %v1482 = vunpack.c.h.b16 %v798
    %v1483 = vunpack.c.l.b16 %v799
    %v1484 = vunpack.c.h.b16 %v799
    %v1485 = vunpack.c.l.b16 %v800
    %v1486 = vunpack.c.h.b16 %v800
    %v1487 = vunpack.c.l.b16 %v801
    %v1488 = vunpack.c.h.b16 %v801
    %v1489 = vunpack.c.l.b16 %v802
    %v1490 = vunpack.c.h.b16 %v802
    %v1491 = vunpack.c.l.b16 %v803
    %v1492 = vunpack.c.h.b16 %v803
    %v1493 = vunpack.c.l.b16 %v804
    %v1494 = vunpack.c.h.b16 %v804
    %v1495 = vunpack.c.l.b16 %v805
    %v1496 = vunpack.c.h.b16 %v805
    %v1497 = vunpack.c.l.b16 %v806
    %v1498 = vunpack.c.h.b16 %v806
    %v1499 = vunpack.c.l.b16 %v807
    %v1500 = vunpack.c.h.b16 %v807
    %v1501 = vunpack.c.l.b16 %v808
    %v1502 = vunpack.c.h.b16 %v808
    %v1503 = vunpack.c.l.b16 %v809
    %v1504 = vunpack.c.h.b16 %v809
    %v1505 = vunpack.c.l.b16 %v810
    %v1506 = vunpack.c.h.b16 %v810
    %v1507 = vunpack.c.l.b16 %v811
    %v1508 = vunpack.c.h.b16 %v811
    %v1509 = vunpack.c.l.b16 %v812
    %v1510 = vunpack.c.h.b16 %v812
    %v1511 = vunpack.c.l.b16 %v813
    %v1512 = vunpack.c.h.b16 %v813
    %v1513 = vunpack.c.l.b16 %v814
    %v1514 = vunpack.c.h.b16 %v814
    %v1515 = vunpack.c.l.b16 %v815
    %v1516 = vunpack.c.h.b16 %v815
    %v1517 = vunpack.c.l.b16 %v816
    %v1518 = vunpack.c.h.b16 %v816
    %v1519 = vunpack.c.l.b16 %v817
    %v1520 = vunpack.c.h.b16 %v817
    %v1521 = vunpack.c.l.b16 %v818
    %v1522 = vunpack.c.h.b16 %v818
    %v1523 = vunpack.c.l.b16 %v819
    %v1524 = vunpack.c.h.b16 %v819
    %v1525 = vunpack.c.l.b16 %v820
    %v1526 = vunpack.c.h.b16 %v820
    %v1527 = vunpack.c.l.b16 %v821
    %v1528 = vunpack.c.h.b16 %v821
    %v1529 = vunpack.c.l.b16 %v822
    %v1530 = vunpack.c.h.b16 %v822
    %v1531 = vunpack.c.l.b16 %v823
    %v1532 = vunpack.c.h.b16 %v823
    %v1533 = vunpack.c.l.b16 %v824
    %v1534 = vunpack.c.h.b16 %v824
    %v1535 = vunpack.c.l.b16 %v825
    %v1536 = vunpack.c.h.b16 %v825
    %v1537 = vunpack.c.l.b16 %v826
    %v1538 = vunpack.c.h.b16 %v826
    %v1539 = vunpack.c.l.b16 %v827
    %v1540 = vunpack.c.h.b16 %v827
    %v1541 = vunpack.c.l.b16 %v828
    %v1542 = vunpack.c.h.b16 %v828
    %v1543 = vunpack.c.l.b16 %v829
    %v1544 = vunpack.c.h.b16 %v829
    %v1545 = vunpack.c.l.b16 %v830
    %v1546 = vunpack.c.h.b16 %v830
    %v1547 = vunpack.c.l.b16 %v831
    %v1548 = vunpack.c.h.b16 %v831
    %v1549 = vunpack.c.l.b16 %v832
    %v1550 = vunpack.c.h.b16 %v832
    %v1551 = vunpack.c.l.b16 %v833
    %v1552 = vunpack.c.h.b16 %v833
    %v1553 = vunpack.c.l.b16 %v834
    %v1554 = vunpack.c.h.b16 %v834
    %v1555 = vunpack.c.l.b16 %v835
    %v1556 = vunpack.c.h.b16 %v835
    %v1557 = vunpack.c.l.b16 %v836
    %v1558 = vunpack.c.h.b16 %v836
    %v1559 = vunpack.c.l.b16 %v837
    %v1560 = vunpack.c.h.b16 %v837
    %v1561 = vunpack.c.l.b16 %v838
    %v1562 = vunpack.c.h.b16 %v838
    %v1563 = vunpack.c.l.b16 %v839
    %v1564 = vunpack.c.h.b16 %v839
    %v1565 = vunpack.c.l.b16 %v840
    %v1566 = vunpack.c.h.b16 %v840
    %v1567 = vunpack.c.l.b16 %v841
    %v1568 = vunpack.c.h.b16 %v841
    %v1569 = vunpack.c.l.b16 %v842
    %v1570 = vunpack.c.h.b16 %v842
    %v1571 = vunpack.c.l.b16 %v843
    %v1572 = vunpack.c.h.b16 %v843
    %v1573 = vunpack.c.l.b16 %v844
    %v1574 = vunpack.c.h.b16 %v844
    %v1575 = vunpack.c.l.b16 %v845
    %v1576 = vunpack.c.h.b16 %v845
    %v1577 = vunpack.c.l.b16 %v846
    %v1578 = vunpack.c.h.b16 %v846
    %v1579 = vunpack.c.l.b16 %v847
    %v1580 = vunpack.c.h.b16 %v847
    %v1581 = vunpack.c.l.b16 %v848
    %v1582 = vunpack.c.h.b16 %v848
    %v1583 = vunpack.c.l.b16 %v849
    %v1584 = vunpack.c.h.b16 %v849
    %v1585 = vunpack.c.l.b16 %v850
    %v1586 = vunpack.c.h.b16 %v850
    %v1587 = vunpack.c.l.b16 %v851
    %v1588 = vunpack.c.h.b16 %v851
    %v1589 = vunpack.c.l.b16 %v852
    %v1590 = vunpack.c.h.b16 %v852
    %v1591 = vunpack.c.l.b16 %v853
    %v1592 = vunpack.c.h.b16 %v853
    %v1593 = vunpack.c.l.b16 %v854
    %v1594 = vunpack.c.h.b16 %v854
    %v1595 = vunpack.c.l.b16 %v855
    %v1596 = vunpack.c.h.b16 %v855
    %v1597 = vunpack.c.l.b16 %v856
    %v1598 = vunpack.c.h.b16 %v856
    %v1599 = vunpack.c.l.b16 %v857
    %v1600 = vunpack.c.h.b16 %v857
    %v1601 = vunpack.c.l.b16 %v858
    %v1602 = vunpack.c.h.b16 %v858
    %v1603 = vunpack.c.l.b16 %v859
    %v1604 = vunpack.c.h.b16 %v859
    %v1605 = vunpack.c.l.b16 %v860
    %v1606 = vunpack.c.h.b16 %v860
    %v1607 = vunpack.c.l.b16 %v861
    %v1608 = vunpack.c.h.b16 %v861
    %v1609 = vunpack.c.l.b16 %v862
    %v1610 = vunpack.c.h.b16 %v862
    %v1611 = vunpack.c.l.b16 %v863
    %v1612 = vunpack.c.h.b16 %v863
    %v1613 = vunpack.c.l.b16 %v864
    %v1614 = vunpack.c.h.b16 %v864
    %v1615 = vunpack.c.l.b16 %v865
    %v1616 = vunpack.c.h.b16 %v865
    %v1617 = vunpack.c.l.b16 %v866
    %v1618 = vunpack.c.h.b16 %v866
    %v1619 = vunpack.c.l.b16 %v867
    %v1620 = vunpack.c.h.b16 %v867
    %v1621 = vunpack.c.l.b16 %v868
    %v1622 = vunpack.c.h.b16 %v868
    %v1623 = vunpack.c.l.b16 %v869
    %v1624 = vunpack.c.h.b16 %v869
    %v1625 = vunpack.c.l.b16 %v870
    %v1626 = vunpack.c.h.b16 %v870
    %v1627 = vunpack.c.l.b16 %v871
    %v1628 = vunpack.c.h.b16 %v871
    %v1629 = vunpack.c.l.b16 %v872
    %v1630 = vunpack.c.h.b16 %v872
    %v1631 = vunpack.c.l.b16 %v873
    %v1632 = vunpack.c.h.b16 %v873
    %v1633 = vunpack.c.l.b16 %v874
    %v1634 = vunpack.c.h.b16 %v874
    %v1635 = vunpack.c.l.b16 %v875
    %v1636 = vunpack.c.h.b16 %v875
    %v1637 = vunpack.c.l.b16 %v876
    %v1638 = vunpack.c.h.b16 %v876
    %v1639 = vunpack.c.l.b16 %v877
    %v1640 = vunpack.c.h.b16 %v877
    %v1641 = vunpack.c.l.b16 %v878
    %v1642 = vunpack.c.h.b16 %v878
    %v1643 = vunpack.c.l.b16 %v879
    %v1644 = vunpack.c.h.b16 %v879
    %v1645 = vunpack.c.l.b16 %v880
    %v1646 = vunpack.c.h.b16 %v880
    %v1647 = vunpack.c.l.b16 %v881
    %v1648 = vunpack.c.h.b16 %v881
    %v1649 = vunpack.c.l.b16 %v882
    %v1650 = vunpack.c.h.b16 %v882
    %v1651 = vunpack.c.l.b16 %v883
    %v1652 = vunpack.c.h.b16 %v883
    %v1653 = vunpack.c.l.b16 %v884
    %v1654 = vunpack.c.h.b16 %v884
    %v1655 = vunpack.c.l.b16 %v885
    %v1656 = vunpack.c.h.b16 %v885
    %v1657 = vunpack.c.l.b16 %v886
    %v1658 = vunpack.c.h.b16 %v886
    %v1659 = vunpack.c.l.b16 %v887
    %v1660 = vunpack.c.h.b16 %v887
    %v1661 = vunpack.c.l.b16 %v888
    %v1662 = vunpack.c.h.b16 %v888
    %v1663 = vunpack.c.l.b16 %v889
    %v1664 = vunpack.c.h.b16 %v889
    %v1665 = vunpack.c.l.b16 %v890
    %v1666 = vunpack.c.h.b16 %v890
    %v1667 = vunpack.c.l.b16 %v891
    %v1668 = vunpack.c.h.b16 %v891
    %v1669 = vunpack.c.l.b16 %v892
    %v1670 = vunpack.c.h.b16 %v892
    %v1671 = vunpack.c.l.b16 %v893
    %v1672 = vunpack.c.h.b16 %v893
    %v1673 = vunpack.c.l.b16 %v894
    %v1674 = vunpack.c.h.b16 %v894
    %v1675 = vunpack.c.l.b16 %v895
    %v1676 = vunpack.c.h.b16 %v895
    %v1677 = vunpack.c.l.b16 %v896
    %v1678 = vunpack.c.h.b16 %v896
    %v1679 = vunpack.c.l.b16 %v897
    %v1680 = vunpack.c.h.b16 %v897
    %v1681 = vunpack.c.l.b16 %v898
    %v1682 = vunpack.c.h.b16 %v898
    %v1683 = vunpack.c.l.b16 %v899
    %v1684 = vunpack.c.h.b16 %v899
    %v1685 = vunpack.c.l.b16 %v900
    %v1686 = vunpack.c.h.b16 %v900
    %v1687 = vunpack.c.l.b16 %v901
    %v1688 = vunpack.c.h.b16 %v901
    %v1689 = vunpack.c.l.b16 %v902
    %v1690 = vunpack.c.h.b16 %v902
    %v1691 = vunpack.c.l.b16 %v903
    %v1692 = vunpack.c.h.b16 %v903
    %v1693 = vunpack.c.l.b16 %v904
    %v1694 = vunpack.c.h.b16 %v904
    %v1695 = vunpack.c.l.b16 %v905
    %v1696 = vunpack.c.h.b16 %v905
    %v1697 = vunpack.c.l.b16 %v906
    %v1698 = vunpack.c.h.b16 %v906
    %v1699 = vunpack.c.l.b16 %v907
    %v1700 = vunpack.c.h.b16 %v907
    %v1701 = vunpack.c.l.b16 %v908
    %v1702 = vunpack.c.h.b16 %v908
    %v1703 = vunpack.c.l.b16 %v909
    %v1704 = vunpack.c.h.b16 %v909
    %v1705 = vunpack.c.l.b16 %v910
    %v1706 = vunpack.c.h.b16 %v910
    %v1707 = vunpack.c.l.b16 %v911
    %v1708 = vunpack.c.h.b16 %v911
    %v1709 = vunpack.c.l.b16 %v912
    %v1710 = vunpack.c.h.b16 %v912
    %v1711 = vunpack.c.l.b16 %v913
    %v1712 = vunpack.c.h.b16 %v913
    %v1713 = vunpack.c.l.b16 %v914
    %v1714 = vunpack.c.h.b16 %v914
    %v1715 = vunpack.c.l.b16 %v915
    %v1716 = vunpack.c.h.b16 %v915
    %v1717 = vunpack.c.l.b16 %v916
    %v1718 = vunpack.c.h.b16 %v916
    %v1719 = vunpack.c.l.b16 %v917
    %v1720 = vunpack.c.h.b16 %v917
    %v1721 = vunpack.c.l.b16 %v918
    %v1722 = vunpack.c.h.b16 %v918
    %v1723 = vunpack.c.l.b16 %v919
    %v1724 = vunpack.c.h.b16 %v919
    %v1725 = vunpack.c.l.b16 %v920
    %v1726 = vunpack.c.h.b16 %v920
    %v1727 = vunpack.c.l.b16 %v921
    %v1728 = vunpack.c.h.b16 %v921
    %v1729 = vunpack.c.l.b16 %v922
    %v1730 = vunpack.c.h.b16 %v922
    %v1731 = vunpack.c.l.b16 %v923
    %v1732 = vunpack.c.h.b16 %v923
    %v1733 = vunpack.c.l.b16 %v924
    %v1734 = vunpack.c.h.b16 %v924
    %v1735 = vunpack.c.l.b16 %v925
    %v1736 = vunpack.c.h.b16 %v925
    %v1737 = vunpack.c.l.b16 %v926
    %v1738 = vunpack.c.h.b16 %v926
    %v1739 = vunpack.c.l.b16 %v927
    %v1740 = vunpack.c.h.b16 %v927
    %v1741 = vunpack.c.l.b16 %v928
    %v1742 = vunpack.c.h.b16 %v928
    %v1743 = vunpack.c.l.b16 %v929
    %v1744 = vunpack.c.h.b16 %v929
    %v1745 = vunpack.c.l.b16 %v930
    %v1746 = vunpack.c.h.b16 %v930
    %v1747 = vunpack.c.l.b16 %v931
    %v1748 = vunpack.c.h.b16 %v931
    %v1749 = vunpack.c.l.b16 %v932
    %v1750 = vunpack.c.h.b16 %v932
    %v1751 = vunpack.c.l.b16 %v933
    %v1752 = vunpack.c.h.b16 %v933
    %v1753 = vunpack.c.l.b16 %v934
    %v1754 = vunpack.c.h.b16 %v934
    %v1755 = vunpack.c.l.b16 %v935
    %v1756 = vunpack.c.h.b16 %v935
    %v1757 = vunpack.c.l.b16 %v936
    %v1758 = vunpack.c.h.b16 %v936
    %v1759 = vunpack.c.l.b16 %v937
    %v1760 = vunpack.c.h.b16 %v937
    %v1761 = vunpack.c.l.b16 %v938
    %v1762 = vunpack.c.h.b16 %v938
    %v1763 = vunpack.c.l.b16 %v939
    %v1764 = vunpack.c.h.b16 %v939
    %v1765 = vunpack.c.l.b16 %v940
    %v1766 = vunpack.c.h.b16 %v940
    %v1767 = vunpack.c.l.b16 %v941
    %v1768 = vunpack.c.h.b16 %v941
    %v1769 = vunpack.c.l.b16 %v942
    %v1770 = vunpack.c.h.b16 %v942
    %v1771 = vunpack.c.l.b16 %v943
    %v1772 = vunpack.c.h.b16 %v943
    %v1773 = vunpack.c.l.b16 %v944
    %v1774 = vunpack.c.h.b16 %v944
    %v1775 = vunpack.c.l.b16 %v945
    %v1776 = vunpack.c.h.b16 %v945
    %v1777 = vunpack.c.l.b16 %v946
    %v1778 = vunpack.c.h.b16 %v946
    %v1779 = vunpack.c.l.b16 %v947
    %v1780 = vunpack.c.h.b16 %v947
    %v1781 = vunpack.c.l.b16 %v948
    %v1782 = vunpack.c.h.b16 %v948
    %v1783 = vunpack.c.l.b16 %v949
    %v1784 = vunpack.c.h.b16 %v949
    %v1785 = vunpack.c.l.b16 %v950
    %v1786 = vunpack.c.h.b16 %v950
    %v1787 = vunpack.c.l.b16 %v951
    %v1788 = vunpack.c.h.b16 %v951
    %v1789 = vunpack.c.l.b16 %v952
    %v1790 = vunpack.c.h.b16 %v952
    %v1791 = vunpack.c.l.b16 %v953
    %v1792 = vunpack.c.h.b16 %v953
    %v1793 = vunpack.c.l.b16 %v954
    %v1794 = vunpack.c.h.b16 %v954
    %v1795 = vunpack.c.l.b16 %v955
    %v1796 = vunpack.c.h.b16 %v955
    %v1797 = vunpack.c.l.b16 %v956
    %v1798 = vunpack.c.h.b16 %v956
    %v1799 = vunpack.c.l.b16 %v957
    %v1800 = vunpack.c.h.b16 %v957
    %v1801 = vunpack.c.l.b16 %v958
    %v1802 = vunpack.c.h.b16 %v958
    %v1803 = vunpack.c.l.b16 %v959
    %v1804 = vunpack.c.h.b16 %v959
    %v1805 = vunpack.c.l.b16 %v960
    %v1806 = vunpack.c.h.b16 %v960
    %v1807 = vunpack.c.l.b16 %v961
    %v1808 = vunpack.c.h.b16 %v961
    %v1809 = vunpack.c.l.b16 %v962
    %v1810 = vunpack.c.h.b16 %v962
    %v1811 = vunpack.c.l.b16 %v963
    %v1812 = vunpack.c.h.b16 %v963
    %v1813 = vunpack.c.l.b16 %v964
    %v1814 = vunpack.c.h.b16 %v964
    %v1815 = vunpack.c.l.b16 %v965
    %v1816 = vunpack.c.h.b16 %v965
    %v1817 = vunpack.c.l.b16 %v966
    %v1818 = vunpack.c.h.b16 %v966
    %v1819 = vunpack.c.l.b16 %v967
    %v1820 = vunpack.c.h.b16 %v967
    %v1821 = vunpack.c.l.b16 %v968
    %v1822 = vunpack.c.h.b16 %v968
    %v1823 = vunpack.c.l.b16 %v969
    %v1824 = vunpack.c.h.b16 %v969
    %v1825 = vunpack.c.l.b16 %v970
    %v1826 = vunpack.c.h.b16 %v970
    %v1827 = vunpack.c.l.b16 %v971
    %v1828 = vunpack.c.h.b16 %v971
    %v1829 = vunpack.c.l.b16 %v972
    %v1830 = vunpack.c.h.b16 %v972
    %v1831 = vunpack.c.l.b16 %v973
    %v1832 = vunpack.c.h.b16 %v973
    %v1833 = vunpack.c.l.b16 %v974
    %v1834 = vunpack.c.h.b16 %v974
    %v1835 = vunpack.c.l.b16 %v975
    %v1836 = vunpack.c.h.b16 %v975
    %v1837 = vunpack.c.l.b16 %v976
    %v1838 = vunpack.c.h.b16 %v976
    %v1839 = vunpack.c.l.b16 %v977
    %v1840 = vunpack.c.h.b16 %v977
    %v1841 = vunpack.c.l.b16 %v978
    %v1842 = vunpack.c.h.b16 %v978
    %v1843 = vunpack.c.l.b16 %v979
    %v1844 = vunpack.c.h.b16 %v979
    %v1845 = vunpack.c.l.b16 %v980
    %v1846 = vunpack.c.h.b16 %v980
    %v1847 = vunpack.c.l.b16 %v981
    %v1848 = vunpack.c.h.b16 %v981
    %v1849 = vunpack.c.l.b16 %v982
    %v1850 = vunpack.c.h.b16 %v982
    %v1851 = vunpack.c.l.b16 %v983
    %v1852 = vunpack.c.h.b16 %v983
    %v1853 = vunpack.c.l.b16 %v984
    %v1854 = vunpack.c.h.b16 %v984
    %v1855 = vunpack.c.l.b16 %v985
    %v1856 = vunpack.c.h.b16 %v985
    %v1857 = vunpack.c.l.b16 %v986
    %v1858 = vunpack.c.h.b16 %v986
    %v1859 = vunpack.c.l.b16 %v987
    %v1860 = vunpack.c.h.b16 %v987
    %v1861 = vunpack.c.l.b16 %v988
    %v1862 = vunpack.c.h.b16 %v988
    %v1863 = vunpack.c.l.b16 %v989
    %v1864 = vunpack.c.h.b16 %v989
    %v1865 = vunpack.c.l.b16 %v990
    %v1866 = vunpack.c.h.b16 %v990
    %v1867 = vunpack.c.l.b16 %v991
    %v1868 = vunpack.c.h.b16 %v991
    %v1869 = vunpack.c.l.b16 %v992
    %v1870 = vunpack.c.h.b16 %v992
    %v1871 = vunpack.c.l.b16 %v993
    %v1872 = vunpack.c.h.b16 %v993
    %v1873 = vunpack.c.l.b16 %v994
    %v1874 = vunpack.c.h.b16 %v994
    %v1875 = vunpack.c.l.b16 %v995
    %v1876 = vunpack.c.h.b16 %v995
    %v1877 = vunpack.c.l.b16 %v996
    %v1878 = vunpack.c.h.b16 %v996
    %v1879 = vunpack.c.l.b16 %v997
    %v1880 = vunpack.c.h.b16 %v997
    %v1881 = vunpack.c.l.b16 %v998
    %v1882 = vunpack.c.h.b16 %v998
    %v1883 = vunpack.c.l.b16 %v999
    %v1884 = vunpack.c.h.b16 %v999
    %v1885 = vunpack.c.l.b16 %v1000
    %v1886 = vunpack.c.h.b16 %v1000
    %v1887 = vunpack.c.l.b16 %v1001
    %v1888 = vunpack.c.h.b16 %v1001
    %v1889 = vunpack.c.l.b16 %v1002
    %v1890 = vunpack.c.h.b16 %v1002
    %v1891 = vunpack.c.l.b16 %v1003
    %v1892 = vunpack.c.h.b16 %v1003
    %v1893 = vunpack.c.l.b16 %v1004
    %v1894 = vunpack.c.h.b16 %v1004
    %v1895 = vunpack.c.l.b16 %v1005
    %v1896 = vunpack.c.h.b16 %v1005
    %v1897 = vunpack.c.l.b16 %v1006
    %v1898 = vunpack.c.h.b16 %v1006
    %v1899 = vunpack.c.l.b16 %v1007
    %v1900 = vunpack.c.h.b16 %v1007
    %v1901 = vunpack.c.l.b16 %v1008
    %v1902 = vunpack.c.h.b16 %v1008
    %v1903 = vunpack.c.l.b16 %v1009
    %v1904 = vunpack.c.h.b16 %v1009
    %v1905 = vunpack.c.l.b16 %v1010
    %v1906 = vunpack.c.h.b16 %v1010
    %v1907 = vpack.c.b16 %v1337, %v1331
    %v1908 = vpack.c.b16 %v1338, %v1332
    %v1909 = vpack.c.b16 %v1339, %v1333
    %v1910 = vpack.c.b16 %v1340, %v1334
    %v1911 = vpack.c.b16 %v1341, %v1335
    %v1912 = vpack.c.b16 %v1342, %v1336
    %v1913 = vpack.c.b16 %v1349, %v1343
    %v1914 = vpack.c.b16 %v1350, %v1344
    %v1915 = vpack.c.b16 %v1351, %v1345
    %v1916 = vpack.c.b16 %v1352, %v1346
    %v1917 = vpack.c.b16 %v1353, %v1347
    %v1918 = vpack.c.b16 %v1354, %v1348
    %v1919 = vpack.c.b16 %v1361, %v1355
    %v1920 = vpack.c.b16 %v1362, %v1356
    %v1921 = vpack.c.b16 %v1363, %v1357
    %v1922 = vpack.c.b16 %v1364, %v1358
    %v1923 = vpack.c.b16 %v1365, %v1359
    %v1924 = vpack.c.b16 %v1366, %v1360
    %v1925 = vpack.c.b16 %v1373, %v1367
    %v1926 = vpack.c.b16 %v1374, %v1368
    %v1927 = vpack.c.b16 %v1375, %v1369
    %v1928 = vpack.c.b16 %v1376, %v1370
    %v1929 = vpack.c.b16 %v1377, %v1371
    %v1930 = vpack.c.b16 %v1378, %v1372
    %v1931 = vpack.c.b16 %v1385, %v1379
    %v1932 = vpack.c.b16 %v1386, %v1380
    %v1933 = vpack.c.b16 %v1387, %v1381
    %v1934 = vpack.c.b16 %v1388, %v1382
    %v1935 = vpack.c.b16 %v1389, %v1383
    %v1936 = vpack.c.b16 %v1390, %v1384
    %v1937 = vpack.c.b16 %v1397, %v1391
    %v1938 = vpack.c.b16 %v1398, %v1392
    %v1939 = vpack.c.b16 %v1399, %v1393
    %v1940 = vpack.c.b16 %v1400, %v1394
    %v1941 = vpack.c.b16 %v1401, %v1395
    %v1942 = vpack.c.b16 %v1402, %v1396
    %v1943 = vpack.c.b16 %v1409, %v1403
    %v1944 = vpack.c.b16 %v1410, %v1404
    %v1945 = vpack.c.b16 %v1411, %v1405
    %v1946 = vpack.c.b16 %v1412, %v1406
    %v1947 = vpack.c.b16 %v1413, %v1407
    %v1948 = vpack.c.b16 %v1414, %v1408
    %v1949 = vpack.c.b16 %v1421, %v1415
    %v1950 = vpack.c.b16 %v1422, %v1416
    %v1951 = vpack.c.b16 %v1423, %v1417
    %v1952 = vpack.c.b16 %v1424, %v1418
    %v1953 = vpack.c.b16 %v1425, %v1419
    %v1954 = vpack.c.b16 %v1426, %v1420
    %v1955 = vpack.c.b16 %v1433, %v1427
    %v1956 = vpack.c.b16 %v1434, %v1428
    %v1957 = vpack.c.b16 %v1435, %v1429
    %v1958 = vpack.c.b16 %v1436, %v1430
    %v1959 = vpack.c.b16 %v1437, %v1431
    %v1960 = vpack.c.b16 %v1438, %v1432
    %v1961 = vpack.c.b16 %v1445, %v1439
    %v1962 = vpack.c.b16 %v1446, %v1440
    %v1963 = vpack.c.b16 %v1447, %v1441
    %v1964 = vpack.c.b16 %v1448, %v1442
    %v1965 = vpack.c.b16 %v1449, %v1443
    %v1966 = vpack.c.b16 %v1450, %v1444
    %v1967 = vpack.c.b16 %v1457, %v1451
    %v1968 = vpack.c.b16 %v1458, %v1452
    %v1969 = vpack.c.b16 %v1459, %v1453
    %v1970 = vpack.c.b16 %v1460, %v1454
    %v1971 = vpack.c.b16 %v1461, %v1455
    %v1972 = vpack.c.b16 %v1462, %v1456
    %v1973 = vpack.c.b16 %v1469, %v1463
    %v1974 = vpack.c.b16 %v1470, %v1464
    %v1975 = vpack.c.b16 %v1471, %v1465
    %v1976 = vpack.c.b16 %v1472, %v1466
    %v1977 = vpack.c.b16 %v1473, %v1467
    %v1978 = vpack.c.b16 %v1474, %v1468
    %v1979 = vpack.c.b16 %v1481, %v1475
    %v1980 = vpack.c.b16 %v1482, %v1476
    %v1981 = vpack.c.b16 %v1483, %v1477
    %v1982 = vpack.c.b16 %v1484, %v1478
    %v1983 = vpack.c.b16 %v1485, %v1479
    %v1984 = vpack.c.b16 %v1486, %v1480
    %v1985 = vpack.c.b16 %v1493, %v1487
    %v1986 = vpack.c.b16 %v1494, %v1488
    %v1987 = vpack.c.b16 %v1495, %v1489
    %v1988 = vpack.c.b16 %v1496, %v1490
    %v1989 = vpack.c.b16 %v1497, %v1491
    %v1990 = vpack.c.b16 %v1498, %v1492
    %v1991 = vpack.c.b16 %v1505, %v1499
    %v1992 = vpack.c.b16 %v1506, %v1500
    %v1993 = vpack.c.b16 %v1507, %v1501
    %v1994 = vpack.c.b16 %v1508, %v1502
    %v1995 = vpack.c.b16 %v1509, %v1503
    %v1996 = vpack.c.b16 %v1510, %v1504
    %v1997 = vpack.c.b16 %v1517, %v1511
    %v1998 = vpack.c.b16 %v1518, %v1512
    %v1999 = vpack.c.b16 %v1519, %v1513
    %v2000 = vpack.c.b16 %v1520, %v1514
    %v2001 = vpack.c.b16 %v1521, %v1515
    %v2002 = vpack.c.b16 %v1522, %v1516
    %v2003 = vpack.c.b16 %v1529, %v1523
    %v2004 = vpack.c.b16 %v1530, %v1524
    %v2005 = vpack.c.b16 %v1531, %v1525
    %v2006 = vpack.c.b16 %v1532, %v1526
    %v2007 = vpack.c.b16 %v1533, %v1527
    %v2008 = vpack.c.b16 %v1534, %v1528
    %v2009 = vpack.c.b16 %v1541, %v1535
    %v2010 = vpack.c.b16 %v1542, %v1536
    %v2011 = vpack.c.b16 %v1543, %v1537
    %v2012 = vpack.c.b16 %v1544, %v1538
    %v2013 = vpack.c.b16 %v1545, %v1539
    %v2014 = vpack.c.b16 %v1546, %v1540
    %v2015 = vpack.c.b16 %v1553, %v1547
    %v2016 = vpack.c.b16 %v1554, %v1548
    %v2017 = vpack.c.b16 %v1555, %v1549
    %v2018 = vpack.c.b16 %v1556, %v1550
    %v2019 = vpack.c.b16 %v1557, %v1551
    %v2020 = vpack.c.b16 %v1558, %v1552
    %v2021 = vpack.c.b16 %v1565, %v1559
    %v2022 = vpack.c.b16 %v1566, %v1560
    %v2023 = vpack.c.b16 %v1567, %v1561
    %v2024 = vpack.c.b16 %v1568, %v1562
    %v2025 = vpack.c.b16 %v1569, %v1563
    %v2026 = vpack.c.b16 %v1570, %v1564
    %v2027 = vpack.c.b16 %v1577, %v1571
    %v2028 = vpack.c.b16 %v1578, %v1572
    %v2029 = vpack.c.b16 %v1579, %v1573
    %v2030 = vpack.c.b16 %v1580, %v1574
    %v2031 = vpack.c.b16 %v1581, %v1575
    %v2032 = vpack.c.b16 %v1582, %v1576
    %v2033 = vpack.c.b16 %v1589, %v1583
    %v2034 = vpack.c.b16 %v1590, %v1584
    %v2035 = vpack.c.b16 %v1591, %v1585
    %v2036 = vpack.c.b16 %v1592, %v1586
    %v2037 = vpack.c.b16 %v1593, %v1587
    %v2038 = vpack.c.b16 %v1594, %v1588
    %v2039 = vpack.c.b16 %v1601, %v1595
    %v2040 = vpack.c.b16 %v1602, %v1596
    %v2041 = vpack.c.b16 %v1603, %v1597
    %v2042 = vpack.c.b16 %v1604, %v1598
    %v2043 = vpack.c.b16 %v1605, %v1599
    %v2044 = vpack.c.b16 %v1606, %v1600
    %v2045 = vpack.c.b16 %v1613, %v1607
    %v2046 = vpack.c.b16 %v1614, %v1608
    %v2047 = vpack.c.b16 %v1615, %v1609
    %v2048 = vpack.c.b16 %v1616, %v1610
    %v2049 = vpack.c.b16 %v1617, %v1611
    %v2050 = vpack.c.b16 %v1618, %v1612
    %v2051 = vpack.c.b16 %v1625, %v1619
    %v2052 = vpack.c.b16 %v1626, %v1620
    %v2053 = vpack.c.b16 %v1627, %v1621
    %v2054 = vpack.c.b16 %v1628, %v1622
    %v2055 = vpack.c.b16 %v1629, %v1623
    %v2056 = vpack.c.b16 %v1630, %v1624
    %v2057 = vpack.c.b16 %v1637, %v1631
    %v2058 = vpack.c.b16 %v1638, %v1632
    %v2059 = vpack.c.b16 %v1639, %v1633
    %v2060 = vpack.c.b16 %v1640, %v1634
    %v2061 = vpack.c.b16 %v1641, %v1635
    %v2062 = vpack.c.b16 %v1642, %v1636
    %v2063 = vpack.c.b16 %v1649, %v1643
    %v2064 = vpack.c.b16 %v1650, %v1644
    %v2065 = vpack.c.b16 %v1651, %v1645
    %v2066 = vpack.c.b16 %v1652, %v1646
    %v2067 = vpack.c.b16 %v1653, %v1647
    %v2068 = vpack.c.b16 %v1654, %v1648
    %v2069 = vpack.c.b16 %v1661, %v1655
    %v2070 = vpack.c.b16 %v1662, %v1656
    %v2071 = vpack.c.b16 %v1663, %v1657
    %v2072 = vpack.c.b16 %v1664, %v1658
    %v2073 = vpack.c.b16 %v1665, %v1659
    %v2074 = vpack.c.b16 %v1666, %v1660
    %v2075 = vpack.c.b16 %v1673, %v1667
    %v2076 = vpack.c.b16 %v1674, %v1668
    %v2077 = vpack.c.b16 %v1675, %v1669
    %v2078 = vpack.c.b16 %v1676, %v1670
    %v2079 = vpack.c.b16 %v1677, %v1671
    %v2080 = vpack.c.b16 %v1678, %v1672
    %v2081 = vpack.c.b16 %v1685, %v1679
    %v2082 = vpack.c.b16 %v1686, %v1680
    %v2083 = vpack.c.b16 %v1687, %v1681
    %v2084 = vpack.c.b16 %v1688, %v1682
    %v2085 = vpack.c.b16 %v1689, %v1683
    %v2086 = vpack.c.b16 %v1690, %v1684
    %v2087 = vpack.c.b16 %v1697, %v1691
    %v2088 = vpack.c.b16 %v1698, %v1692
    %v2089 = vpack.c.b16 %v1699, %v1693
    %v2090 = vpack.c.b16 %v1700, %v1694
    %v2091 = vpack.c.b16 %v1701, %v1695
    %v2092 = vpack.c.b16 %v1702, %v1696
    %v2093 = vpack.c.b16 %v1709, %v1703
    %v2094 = vpack.c.b16 %v1710, %v1704
    %v2095 = vpack.c.b16 %v1711, %v1705
    %v2096 = vpack.c.b16 %v1712, %v1706
    %v2097 = vpack.c.b16 %v1713, %v1707
    %v2098 = vpack.c.b16 %v1714, %v1708
    %v2099 = vpack.c.b16 %v1721, %v1715
    %v2100 = vpack.c.b16 %v1722, %v1716
    %v2101 = vpack.c.b16 %v1723, %v1717
    %v2102 = vpack.c.b16 %v1724, %v1718
    %v2103 = vpack.c.b16 %v1725, %v1719
    %v2104 = vpack.c.b16 %v1726, %v1720
    %v2105 = vpack.c.b16 %v1733, %v1727
    %v2106 = vpack.c.b16 %v1734, %v1728
    %v2107 = vpack.c.b16 %v1735, %v1729
    %v2108 = vpack.c.b16 %v1736, %v1730
    %v2109 = vpack.c.b16 %v1737, %v1731
    %v2110 = vpack.c.b16 %v1738, %v1732
    %v2111 = vpack.c.b16 %v1745, %v1739
    %v2112 = vpack.c.b16 %v1746, %v1740
    %v2113 = vpack.c.b16 %v1747, %v1741
    %v2114 = vpack.c.b16 %v1748, %v1742
    %v2115 = vpack.c.b16 %v1749, %v1743
    %v2116 = vpack.c.b16 %v1750, %v1744
    %v2117 = vpack.c.b16 %v1757, %v1751
    %v2118 = vpack.c.b16 %v1758, %v1752
    %v2119 = vpack.c.b16 %v1759, %v1753
    %v2120 = vpack.c.b16 %v1760, %v1754
    %v2121 = vpack.c.b16 %v1761, %v1755
    %v2122 = vpack.c.b16 %v1762, %v1756
    %v2123 = vpack.c.b16 %v1769, %v1763
    %v2124 = vpack.c.b16 %v1770, %v1764
    %v2125 = vpack.c.b16 %v1771, %v1765
    %v2126 = vpack.c.b16 %v1772, %v1766
    %v2127 = vpack.c.b16 %v1773, %v1767
    %v2128 = vpack.c.b16 %v1774, %v1768
    %v2129 = vpack.c.b16 %v1781, %v1775
    %v2130 = vpack.c.b16 %v1782, %v1776
    %v2131 = vpack.c.b16 %v1783, %v1777
    %v2132 = vpack.c.b16 %v1784, %v1778
    %v2133 = vpack.c.b16 %v1785, %v1779
    %v2134 = vpack.c.b16 %v1786, %v1780
    %v2135 = vpack.c.b16 %v1793, %v1787
    %v2136 = vpack.c.b16 %v1794, %v1788
    %v2137 = vpack.c.b16 %v1795, %v1789
    %v2138 = vpack.c.b16 %v1796, %v1790
    %v2139 = vpack.c.b16 %v1797, %v1791
    %v2140 = vpack.c.b16 %v1798, %v1792
    %v2141 = vpack.c.b16 %v1805, %v1799
    %v2142 = vpack.c.b16 %v1806, %v1800
    %v2143 = vpack.c.b16 %v1807, %v1801
    %v2144 = vpack.c.b16 %v1808, %v1802
    %v2145 = vpack.c.b16 %v1809, %v1803
    %v2146 = vpack.c.b16 %v1810, %v1804
    %v2147 = vpack.c.b16 %v1817, %v1811
    %v2148 = vpack.c.b16 %v1818, %v1812
    %v2149 = vpack.c.b16 %v1819, %v1813
    %v2150 = vpack.c.b16 %v1820, %v1814
    %v2151 = vpack.c.b16 %v1821, %v1815
    %v2152 = vpack.c.b16 %v1822, %v1816
    %v2153 = vpack.c.b16 %v1829, %v1823
    %v2154 = vpack.c.b16 %v1830, %v1824
    %v2155 = vpack.c.b16 %v1831, %v1825
    %v2156 = vpack.c.b16 %v1832, %v1826
    %v2157 = vpack.c.b16 %v1833, %v1827
    %v2158 = vpack.c.b16 %v1834, %v1828
    %v2159 = vpack.c.b16 %v1841, %v1835
    %v2160 = vpack.c.b16 %v1842, %v1836
    %v2161 = vpack.c.b16 %v1843, %v1837
    %v2162 = vpack.c.b16 %v1844, %v1838
    %v2163 = vpack.c.b16 %v1845, %v1839
    %v2164 = vpack.c.b16 %v1846, %v1840
    %v2165 = vpack.c.b16 %v1853, %v1847
    %v2166 = vpack.c.b16 %v1854, %v1848
    %v2167 = vpack.c.b16 %v1855, %v1849
    %v2168 = vpack.c.b16 %v1856, %v1850
    %v2169 = vpack.c.b16 %v1857, %v1851
    %v2170 = vpack.c.b16 %v1858, %v1852
    %v2171 = vpack.c.b16 %v1865, %v1859
    %v2172 = vpack.c.b16 %v1866, %v1860
    %v2173 = vpack.c.b16 %v1867, %v1861
    %v2174 = vpack.c.b16 %v1868, %v1862
    %v2175 = vpack.c.b16 %v1869, %v1863
    %v2176 = vpack.c.b16 %v1870, %v1864
    %v2177 = vpack.c.b16 %v1877, %v1871
    %v2178 = vpack.c.b16 %v1878, %v1872
    %v2179 = vpack.c.b16 %v1879, %v1873
    %v2180 = vpack.c.b16 %v1880, %v1874
    %v2181 = vpack.c.b16 %v1881, %v1875
    %v2182 = vpack.c.b16 %v1882, %v1876
    %v2183 = vpack.c.b16 %v1889, %v1883
    %v2184 = vpack.c.b16 %v1890, %v1884
    %v2185 = vpack.c.b16 %v1891, %v1885
    %v2186 = vpack.c.b16 %v1892, %v1886
    %v2187 = vpack.c.b16 %v1893, %v1887
    %v2188 = vpack.c.b16 %v1894, %v1888
    %v2189 = vpack.c.b16 %v1901, %v1895
    %v2190 = vpack.c.b16 %v1902, %v1896
    %v2191 = vpack.c.b16 %v1903, %v1897
    %v2192 = vpack.c.b16 %v1904, %v1898
    %v2193 = vpack.c.b16 %v1905, %v1899
    %v2194 = vpack.c.b16 %v1906, %v1900
    %2483 = vmatprep.subr.bf16.mxu0 %v1950
    %2484 = vmatpush1.bf16.msra.mxu0 %v1949
    %2485 = vmatprep.subr.bf16.mxu0 %v1944
    %2486 = vmatpush1.bf16.msra.mxu0 %v1943
    %2487 = vmatprep.subr.bf16.mxu0 %v1938
    %2488 = vmatpush1.bf16.msra.mxu0 %v1937
    %2489 = vmatprep.subr.bf16.mxu0 %v1932
    %2490 = vmatpush1.bf16.msra.mxu0 %v1931
    %2491 = vmatprep.subr.bf16.mxu0 %v1926
    %2492 = vmatpush1.bf16.msra.mxu0 %v1925
    %2493 = vmatprep.subr.bf16.mxu0 %v1920
    %2494 = vmatpush1.bf16.msra.mxu0 %v1919
    %2495 = vmatprep.subr.bf16.mxu0 %v1914
    %2496 = vmatpush1.bf16.msra.mxu0 %v1913
    %2497 = vmatprep.subr.bf16.mxu0 %v1908
    %2498 = vmatpush1.bf16.msra.mxu0 %v1907
    %2499 = vmatprep.subr.bf16.mxu0 %v1998
    %2500 = vmatpush2.bf16.msra.mxu0 %v1997
    %2501 = vmatprep.subr.bf16.mxu0 %v1992
    %2502 = vmatpush2.bf16.msra.mxu0 %v1991
    %2503 = vmatprep.subr.bf16.mxu0 %v1986
    %2504 = vmatpush2.bf16.msra.mxu0 %v1985
    %2505 = vmatprep.subr.bf16.mxu0 %v1980
    %2506 = vmatpush2.bf16.msra.mxu0 %v1979
    %2507 = vmatprep.subr.bf16.mxu0 %v1974
    %2508 = vmatpush2.bf16.msra.mxu0 %v1973
    %2509 = vmatprep.subr.bf16.mxu0 %v1968
    %2510 = vmatpush2.bf16.msra.mxu0 %v1967
    %2511 = vmatprep.subr.bf16.mxu0 %v1962
    %2512 = vmatpush2.bf16.msra.mxu0 %v1961
    %2513 = vmatprep.subr.bf16.mxu0 %v1956
    %2514 = vmatpush2.bf16.msra.mxu0 %v1955
    %2515 = vmatprep.mubr.bf16.mxu0 %v718
    %2516 = vmatmul.mubr.bf16.gmra.mxu0 %v717
    %v2517 = vpop.f32.mrf.mxu0
    %v2518 = vadd.f32 %v1016, %v2517
    %v2519 = vpop.f32.mrf.mxu0
    %v2520 = vadd.f32 %v1020, %v2519
    %v2521 = vpop.f32.mrf.mxu0
    %v2522 = vadd.f32 %v1016, %v2521
    %v2523 = vpop.f32.mrf.mxu0
    %v2524 = vadd.f32 %v1020, %v2523
    %2525 = vdwg.mxu0
    %2526 = vmatprep.subr.bf16.mxu0 %v2046
    %2527 = vmatpush1.bf16.msra.mxu0 %v2045
    %2528 = vmatprep.subr.bf16.mxu0 %v2040
    %2529 = vmatpush1.bf16.msra.mxu0 %v2039
    %2530 = vmatprep.subr.bf16.mxu0 %v2034
    %2531 = vmatpush1.bf16.msra.mxu0 %v2033
    %2532 = vmatprep.subr.bf16.mxu0 %v2028
    %2533 = vmatpush1.bf16.msra.mxu0 %v2027
    %2534 = vmatprep.subr.bf16.mxu0 %v2022
    %2535 = vmatpush1.bf16.msra.mxu0 %v2021
    %2536 = vmatprep.subr.bf16.mxu0 %v2016
    %2537 = vmatpush1.bf16.msra.mxu0 %v2015
    %2538 = vmatprep.subr.bf16.mxu0 %v2010
    %2539 = vmatpush1.bf16.msra.mxu0 %v2009
    %2540 = vmatprep.subr.bf16.mxu0 %v2004
    %2541 = vmatpush1.bf16.msra.mxu0 %v2003
    %2542 = vmatprep.subr.bf16.mxu0 %v2094
    %2543 = vmatpush2.bf16.msra.mxu0 %v2093
    %2544 = vmatprep.subr.bf16.mxu0 %v2088
    %2545 = vmatpush2.bf16.msra.mxu0 %v2087
    %2546 = vmatprep.subr.bf16.mxu0 %v2082
    %2547 = vmatpush2.bf16.msra.mxu0 %v2081
    %2548 = vmatprep.subr.bf16.mxu0 %v2076
    %2549 = vmatpush2.bf16.msra.mxu0 %v2075
    %2550 = vmatprep.subr.bf16.mxu0 %v2070
    %2551 = vmatpush2.bf16.msra.mxu0 %v2069
    %2552 = vmatprep.subr.bf16.mxu0 %v2064
    %2553 = vmatpush2.bf16.msra.mxu0 %v2063
    %2554 = vmatprep.subr.bf16.mxu0 %v2058
    %2555 = vmatpush2.bf16.msra.mxu0 %v2057
    %2556 = vmatprep.subr.bf16.mxu0 %v2052
    %2557 = vmatpush2.bf16.msra.mxu0 %v2051
    %2558 = vmatprep.mubr.bf16.mxu0 %v720
    %2559 = vmatmul.mubr.bf16.gmra.mxu0 %v719
    %v2560 = vpop.f32.mrf.mxu0
    %v2561 = vadd.f32 %v2518, %v2560
    %v2562 = vpop.f32.mrf.mxu0
    %v2563 = vadd.f32 %v2520, %v2562
    %v2564 = vpop.f32.mrf.mxu0
    %v2565 = vadd.f32 %v2522, %v2564
    %v2566 = vpop.f32.mrf.mxu0
    %v2567 = vadd.f32 %v2524, %v2566
    %2568 = vdwg.mxu0
    %2569 = vmatprep.subr.bf16.mxu0 %v2142
    %2570 = vmatpush1.bf16.msra.mxu0 %v2141
    %2571 = vmatprep.subr.bf16.mxu0 %v2136
    %2572 = vmatpush1.bf16.msra.mxu0 %v2135
    %2573 = vmatprep.subr.bf16.mxu0 %v2130
    %2574 = vmatpush1.bf16.msra.mxu0 %v2129
    %2575 = vmatprep.subr.bf16.mxu0 %v2124
    %2576 = vmatpush1.bf16.msra.mxu0 %v2123
    %2577 = vmatprep.subr.bf16.mxu0 %v2118
    %2578 = vmatpush1.bf16.msra.mxu0 %v2117
    %2579 = vmatprep.subr.bf16.mxu0 %v2112
    %2580 = vmatpush1.bf16.msra.mxu0 %v2111
    %2581 = vmatprep.subr.bf16.mxu0 %v2106
    %2582 = vmatpush1.bf16.msra.mxu0 %v2105
    %2583 = vmatprep.subr.bf16.mxu0 %v2100
    %2584 = vmatpush1.bf16.msra.mxu0 %v2099
    %2585 = vmatprep.subr.bf16.mxu0 %v2190
    %2586 = vmatpush2.bf16.msra.mxu0 %v2189
    %2587 = vmatprep.subr.bf16.mxu0 %v2184
    %2588 = vmatpush2.bf16.msra.mxu0 %v2183
    %2589 = vmatprep.subr.bf16.mxu0 %v2178
    %2590 = vmatpush2.bf16.msra.mxu0 %v2177
    %2591 = vmatprep.subr.bf16.mxu0 %v2172
    %2592 = vmatpush2.bf16.msra.mxu0 %v2171
    %2593 = vmatprep.subr.bf16.mxu0 %v2166
    %2594 = vmatpush2.bf16.msra.mxu0 %v2165
    %2595 = vmatprep.subr.bf16.mxu0 %v2160
    %2596 = vmatpush2.bf16.msra.mxu0 %v2159
    %2597 = vmatprep.subr.bf16.mxu0 %v2154
    %2598 = vmatpush2.bf16.msra.mxu0 %v2153
    %2599 = vmatprep.subr.bf16.mxu0 %v2148
    %2600 = vmatpush2.bf16.msra.mxu0 %v2147
    %2601 = vmatprep.mubr.bf16.mxu0 %v722
    %2602 = vmatmul.mubr.bf16.gmra.mxu0 %v721
    %v2603 = vpop.f32.mrf.mxu0
    %v2604 = vadd.f32 %v2561, %v2603
    %v2605 = vpop.f32.mrf.mxu0
    %v2606 = vadd.f32 %v2563, %v2605
    %v2607 = vpop.f32.mrf.mxu0
    %v2608 = vadd.f32 %v2565, %v2607
    %v2609 = vpop.f32.mrf.mxu0
    %v2610 = vadd.f32 %v2567, %v2609
    %2611 = vdwg.mxu0
    %2612 = vmatprep.subr.bf16.mxu0 %v1952
    %2613 = vmatpush1.bf16.msra.mxu0 %v1951
    %2614 = vmatprep.subr.bf16.mxu0 %v1946
    %2615 = vmatpush1.bf16.msra.mxu0 %v1945
    %2616 = vmatprep.subr.bf16.mxu0 %v1940
    %2617 = vmatpush1.bf16.msra.mxu0 %v1939
    %2618 = vmatprep.subr.bf16.mxu0 %v1934
    %2619 = vmatpush1.bf16.msra.mxu0 %v1933
    %2620 = vmatprep.subr.bf16.mxu0 %v1928
    %2621 = vmatpush1.bf16.msra.mxu0 %v1927
    %2622 = vmatprep.subr.bf16.mxu0 %v1922
    %2623 = vmatpush1.bf16.msra.mxu0 %v1921
    %2624 = vmatprep.subr.bf16.mxu0 %v1916
    %2625 = vmatpush1.bf16.msra.mxu0 %v1915
    %2626 = vmatprep.subr.bf16.mxu0 %v1910
    %2627 = vmatpush1.bf16.msra.mxu0 %v1909
    %2628 = vmatprep.subr.bf16.mxu0 %v2000
    %2629 = vmatpush2.bf16.msra.mxu0 %v1999
    %2630 = vmatprep.subr.bf16.mxu0 %v1994
    %2631 = vmatpush2.bf16.msra.mxu0 %v1993
    %2632 = vmatprep.subr.bf16.mxu0 %v1988
    %2633 = vmatpush2.bf16.msra.mxu0 %v1987
    %2634 = vmatprep.subr.bf16.mxu0 %v1982
    %2635 = vmatpush2.bf16.msra.mxu0 %v1981
    %2636 = vmatprep.subr.bf16.mxu0 %v1976
    %2637 = vmatpush2.bf16.msra.mxu0 %v1975
    %2638 = vmatprep.subr.bf16.mxu0 %v1970
    %2639 = vmatpush2.bf16.msra.mxu0 %v1969
    %2640 = vmatprep.subr.bf16.mxu0 %v1964
    %2641 = vmatpush2.bf16.msra.mxu0 %v1963
    %2642 = vmatprep.subr.bf16.mxu0 %v1958
    %2643 = vmatpush2.bf16.msra.mxu0 %v1957
    %2644 = vmatprep.mubr.bf16.mxu0 %v718
    %2645 = vmatmul.mubr.bf16.gmra.mxu0 %v717
    %v2646 = vpop.f32.mrf.mxu0
    %v2647 = vadd.f32 %v1024, %v2646
    %v2648 = vpop.f32.mrf.mxu0
    %v2649 = vadd.f32 %v1028, %v2648
    %v2650 = vpop.f32.mrf.mxu0
    %v2651 = vadd.f32 %v1024, %v2650
    %v2652 = vpop.f32.mrf.mxu0
    %v2653 = vadd.f32 %v1028, %v2652
    %2654 = vdwg.mxu0
    %2655 = vmatprep.subr.bf16.mxu0 %v2048
    %2656 = vmatpush1.bf16.msra.mxu0 %v2047
    %2657 = vmatprep.subr.bf16.mxu0 %v2042
    %2658 = vmatpush1.bf16.msra.mxu0 %v2041
    %2659 = vmatprep.subr.bf16.mxu0 %v2036
    %2660 = vmatpush1.bf16.msra.mxu0 %v2035
    %2661 = vmatprep.subr.bf16.mxu0 %v2030
    %2662 = vmatpush1.bf16.msra.mxu0 %v2029
    %2663 = vmatprep.subr.bf16.mxu0 %v2024
    %2664 = vmatpush1.bf16.msra.mxu0 %v2023
    %2665 = vmatprep.subr.bf16.mxu0 %v2018
    %2666 = vmatpush1.bf16.msra.mxu0 %v2017
    %2667 = vmatprep.subr.bf16.mxu0 %v2012
    %2668 = vmatpush1.bf16.msra.mxu0 %v2011
    %2669 = vmatprep.subr.bf16.mxu0 %v2006
    %2670 = vmatpush1.bf16.msra.mxu0 %v2005
    %2671 = vmatprep.subr.bf16.mxu0 %v2096
    %2672 = vmatpush2.bf16.msra.mxu0 %v2095
    %2673 = vmatprep.subr.bf16.mxu0 %v2090
    %2674 = vmatpush2.bf16.msra.mxu0 %v2089
    %2675 = vmatprep.subr.bf16.mxu0 %v2084
    %2676 = vmatpush2.bf16.msra.mxu0 %v2083
    %2677 = vmatprep.subr.bf16.mxu0 %v2078
    %2678 = vmatpush2.bf16.msra.mxu0 %v2077
    %2679 = vmatprep.subr.bf16.mxu0 %v2072
    %2680 = vmatpush2.bf16.msra.mxu0 %v2071
    %2681 = vmatprep.subr.bf16.mxu0 %v2066
    %2682 = vmatpush2.bf16.msra.mxu0 %v2065
    %2683 = vmatprep.subr.bf16.mxu0 %v2060
    %2684 = vmatpush2.bf16.msra.mxu0 %v2059
    %2685 = vmatprep.subr.bf16.mxu0 %v2054
    %2686 = vmatpush2.bf16.msra.mxu0 %v2053
    %2687 = vmatprep.mubr.bf16.mxu0 %v720
    %2688 = vmatmul.mubr.bf16.gmra.mxu0 %v719
    %v2689 = vpop.f32.mrf.mxu0
    %v2690 = vadd.f32 %v2647, %v2689
    %v2691 = vpop.f32.mrf.mxu0
    %v2692 = vadd.f32 %v2649, %v2691
    %v2693 = vpop.f32.mrf.mxu0
    %v2694 = vadd.f32 %v2651, %v2693
    %v2695 = vpop.f32.mrf.mxu0
    %v2696 = vadd.f32 %v2653, %v2695
    %2697 = vdwg.mxu0
    %2698 = vmatprep.subr.bf16.mxu0 %v2144
    %2699 = vmatpush1.bf16.msra.mxu0 %v2143
    %2700 = vmatprep.subr.bf16.mxu0 %v2138
    %2701 = vmatpush1.bf16.msra.mxu0 %v2137
    %2702 = vmatprep.subr.bf16.mxu0 %v2132
    %2703 = vmatpush1.bf16.msra.mxu0 %v2131
    %2704 = vmatprep.subr.bf16.mxu0 %v2126
    %2705 = vmatpush1.bf16.msra.mxu0 %v2125
    %2706 = vmatprep.subr.bf16.mxu0 %v2120
    %2707 = vmatpush1.bf16.msra.mxu0 %v2119
    %2708 = vmatprep.subr.bf16.mxu0 %v2114
    %2709 = vmatpush1.bf16.msra.mxu0 %v2113
    %2710 = vmatprep.subr.bf16.mxu0 %v2108
    %2711 = vmatpush1.bf16.msra.mxu0 %v2107
    %2712 = vmatprep.subr.bf16.mxu0 %v2102
    %2713 = vmatpush1.bf16.msra.mxu0 %v2101
    %2714 = vmatprep.subr.bf16.mxu0 %v2192
    %2715 = vmatpush2.bf16.msra.mxu0 %v2191
    %2716 = vmatprep.subr.bf16.mxu0 %v2186
    %2717 = vmatpush2.bf16.msra.mxu0 %v2185
    %2718 = vmatprep.subr.bf16.mxu0 %v2180
    %2719 = vmatpush2.bf16.msra.mxu0 %v2179
    %2720 = vmatprep.subr.bf16.mxu0 %v2174
    %2721 = vmatpush2.bf16.msra.mxu0 %v2173
    %2722 = vmatprep.subr.bf16.mxu0 %v2168
    %2723 = vmatpush2.bf16.msra.mxu0 %v2167
    %2724 = vmatprep.subr.bf16.mxu0 %v2162
    %2725 = vmatpush2.bf16.msra.mxu0 %v2161
    %2726 = vmatprep.subr.bf16.mxu0 %v2156
    %2727 = vmatpush2.bf16.msra.mxu0 %v2155
    %2728 = vmatprep.subr.bf16.mxu0 %v2150
    %2729 = vmatpush2.bf16.msra.mxu0 %v2149
    %2730 = vmatprep.mubr.bf16.mxu0 %v722
    %2731 = vmatmul.mubr.bf16.gmra.mxu0 %v721
    %v2732 = vpop.f32.mrf.mxu0
    %v2733 = vadd.f32 %v2690, %v2732
    %v2734 = vpop.f32.mrf.mxu0
    %v2735 = vadd.f32 %v2692, %v2734
    %v2736 = vpop.f32.mrf.mxu0
    %v2737 = vadd.f32 %v2694, %v2736
    %v2738 = vpop.f32.mrf.mxu0
    %v2739 = vadd.f32 %v2696, %v2738
    %2740 = vdwg.mxu0
    %2741 = vmatprep.subr.bf16.mxu0 %v1954
    %2742 = vmatpush1.bf16.msra.mxu0 %v1953
    %2743 = vmatprep.subr.bf16.mxu0 %v1948
    %2744 = vmatpush1.bf16.msra.mxu0 %v1947
    %2745 = vmatprep.subr.bf16.mxu0 %v1942
    %2746 = vmatpush1.bf16.msra.mxu0 %v1941
    %2747 = vmatprep.subr.bf16.mxu0 %v1936
    %2748 = vmatpush1.bf16.msra.mxu0 %v1935
    %2749 = vmatprep.subr.bf16.mxu0 %v1930
    %2750 = vmatpush1.bf16.msra.mxu0 %v1929
    %2751 = vmatprep.subr.bf16.mxu0 %v1924
    %2752 = vmatpush1.bf16.msra.mxu0 %v1923
    %2753 = vmatprep.subr.bf16.mxu0 %v1918
    %2754 = vmatpush1.bf16.msra.mxu0 %v1917
    %2755 = vmatprep.subr.bf16.mxu0 %v1912
    %2756 = vmatpush1.bf16.msra.mxu0 %v1911
    %2757 = vmatprep.subr.bf16.mxu0 %v2002
    %2758 = vmatpush2.bf16.msra.mxu0 %v2001
    %2759 = vmatprep.subr.bf16.mxu0 %v1996
    %2760 = vmatpush2.bf16.msra.mxu0 %v1995
    %2761 = vmatprep.subr.bf16.mxu0 %v1990
    %2762 = vmatpush2.bf16.msra.mxu0 %v1989
    %2763 = vmatprep.subr.bf16.mxu0 %v1984
    %2764 = vmatpush2.bf16.msra.mxu0 %v1983
    %2765 = vmatprep.subr.bf16.mxu0 %v1978
    %2766 = vmatpush2.bf16.msra.mxu0 %v1977
    %2767 = vmatprep.subr.bf16.mxu0 %v1972
    %2768 = vmatpush2.bf16.msra.mxu0 %v1971
    %2769 = vmatprep.subr.bf16.mxu0 %v1966
    %2770 = vmatpush2.bf16.msra.mxu0 %v1965
    %2771 = vmatprep.subr.bf16.mxu0 %v1960
    %2772 = vmatpush2.bf16.msra.mxu0 %v1959
    %2773 = vmatprep.mubr.bf16.mxu0 %v718
    %2774 = vmatmul.mubr.bf16.gmra.mxu0 %v717
    %v2775 = vpop.f32.mrf.mxu0
    %v2776 = vadd.f32 %v1032, %v2775
    %v2777 = vpop.f32.mrf.mxu0
    %v2778 = vadd.f32 %v1036, %v2777
    %v2779 = vpop.f32.mrf.mxu0
    %v2780 = vadd.f32 %v1032, %v2779
    %v2781 = vpop.f32.mrf.mxu0
    %v2782 = vadd.f32 %v1036, %v2781
    %2783 = vdwg.mxu0
    %2784 = vmatprep.subr.bf16.mxu0 %v2050
    %2785 = vmatpush1.bf16.msra.mxu0 %v2049
    %2786 = vmatprep.subr.bf16.mxu0 %v2044
    %2787 = vmatpush1.bf16.msra.mxu0 %v2043
    %2788 = vmatprep.subr.bf16.mxu0 %v2038
    %2789 = vmatpush1.bf16.msra.mxu0 %v2037
    %2790 = vmatprep.subr.bf16.mxu0 %v2032
    %2791 = vmatpush1.bf16.msra.mxu0 %v2031
    %2792 = vmatprep.subr.bf16.mxu0 %v2026
    %2793 = vmatpush1.bf16.msra.mxu0 %v2025
    %2794 = vmatprep.subr.bf16.mxu0 %v2020
    %2795 = vmatpush1.bf16.msra.mxu0 %v2019
    %2796 = vmatprep.subr.bf16.mxu0 %v2014
    %2797 = vmatpush1.bf16.msra.mxu0 %v2013
    %2798 = vmatprep.subr.bf16.mxu0 %v2008
    %2799 = vmatpush1.bf16.msra.mxu0 %v2007
    %2800 = vmatprep.subr.bf16.mxu0 %v2098
    %2801 = vmatpush2.bf16.msra.mxu0 %v2097
    %2802 = vmatprep.subr.bf16.mxu0 %v2092
    %2803 = vmatpush2.bf16.msra.mxu0 %v2091
    %2804 = vmatprep.subr.bf16.mxu0 %v2086
    %2805 = vmatpush2.bf16.msra.mxu0 %v2085
    %2806 = vmatprep.subr.bf16.mxu0 %v2080
    %2807 = vmatpush2.bf16.msra.mxu0 %v2079
    %2808 = vmatprep.subr.bf16.mxu0 %v2074
    %2809 = vmatpush2.bf16.msra.mxu0 %v2073
    %2810 = vmatprep.subr.bf16.mxu0 %v2068
    %2811 = vmatpush2.bf16.msra.mxu0 %v2067
    %2812 = vmatprep.subr.bf16.mxu0 %v2062
    %2813 = vmatpush2.bf16.msra.mxu0 %v2061
    %2814 = vmatprep.subr.bf16.mxu0 %v2056
    %2815 = vmatpush2.bf16.msra.mxu0 %v2055
    %2816 = vmatprep.mubr.bf16.mxu0 %v720
    %2817 = vmatmul.mubr.bf16.gmra.mxu0 %v719
    %v2818 = vpop.f32.mrf.mxu0
    %v2819 = vadd.f32 %v2776, %v2818
    %v2820 = vpop.f32.mrf.mxu0
    %v2821 = vadd.f32 %v2778, %v2820
    %v2822 = vpop.f32.mrf.mxu0
    %v2823 = vadd.f32 %v2780, %v2822
    %v2824 = vpop.f32.mrf.mxu0
    %v2825 = vadd.f32 %v2782, %v2824
    %2826 = vdwg.mxu0
    %2827 = vmatprep.subr.bf16.mxu0 %v2146
    %2828 = vmatpush1.bf16.msra.mxu0 %v2145
    %2829 = vmatprep.subr.bf16.mxu0 %v2140
    %2830 = vmatpush1.bf16.msra.mxu0 %v2139
    %2831 = vmatprep.subr.bf16.mxu0 %v2134
    %2832 = vmatpush1.bf16.msra.mxu0 %v2133
    %2833 = vmatprep.subr.bf16.mxu0 %v2128
    %2834 = vmatpush1.bf16.msra.mxu0 %v2127
    %2835 = vmatprep.subr.bf16.mxu0 %v2122
    %2836 = vmatpush1.bf16.msra.mxu0 %v2121
    %2837 = vmatprep.subr.bf16.mxu0 %v2116
    %2838 = vmatpush1.bf16.msra.mxu0 %v2115
    %2839 = vmatprep.subr.bf16.mxu0 %v2110
    %2840 = vmatpush1.bf16.msra.mxu0 %v2109
    %2841 = vmatprep.subr.bf16.mxu0 %v2104
    %2842 = vmatpush1.bf16.msra.mxu0 %v2103
    %2843 = vmatprep.subr.bf16.mxu0 %v2194
    %2844 = vmatpush2.bf16.msra.mxu0 %v2193
    %2845 = vmatprep.subr.bf16.mxu0 %v2188
    %2846 = vmatpush2.bf16.msra.mxu0 %v2187
    %2847 = vmatprep.subr.bf16.mxu0 %v2182
    %2848 = vmatpush2.bf16.msra.mxu0 %v2181
    %2849 = vmatprep.subr.bf16.mxu0 %v2176
    %2850 = vmatpush2.bf16.msra.mxu0 %v2175
    %2851 = vmatprep.subr.bf16.mxu0 %v2170
    %2852 = vmatpush2.bf16.msra.mxu0 %v2169
    %2853 = vmatprep.subr.bf16.mxu0 %v2164
    %2854 = vmatpush2.bf16.msra.mxu0 %v2163
    %2855 = vmatprep.subr.bf16.mxu0 %v2158
    %2856 = vmatpush2.bf16.msra.mxu0 %v2157
    %2857 = vmatprep.subr.bf16.mxu0 %v2152
    %2858 = vmatpush2.bf16.msra.mxu0 %v2151
    %2859 = vmatprep.mubr.bf16.mxu0 %v722
    %2860 = vmatmul.mubr.bf16.gmra.mxu0 %v721
    %v2861 = vpop.f32.mrf.mxu0
    %v2862 = vadd.f32 %v2819, %v2861
    %v2863 = vpop.f32.mrf.mxu0
    %v2864 = vadd.f32 %v2821, %v2863
    %v2865 = vpop.f32.mrf.mxu0
    %v2866 = vadd.f32 %v2823, %v2865
    %v2867 = vpop.f32.mrf.mxu0
    %v2868 = vadd.f32 %v2825, %v2867
    %2869 = vdwg.mxu0
    %v2870 = vmax.f32 %v2604, 0.0
    %v2871 = vmax.f32 %v2606, 0.0
    %v2872 = vmax.f32 %v2733, 0.0
    %v2873 = vmax.f32 %v2735, 0.0
    %v2874 = vmax.f32 %v2862, 0.0
    %v2875 = vmax.f32 %v2864, 0.0
    %v2876 = vmax.f32 %v2608, 0.0
    %v2877 = vmax.f32 %v2610, 0.0
    %v2878 = vmax.f32 %v2737, 0.0
    %v2879 = vmax.f32 %v2739, 0.0
    %v2880 = vmax.f32 %v2866, 0.0
    %v2881 = vmax.f32 %v2868, 0.0
    %v2882 = vpack.c.bf16 %v2876, %v2870
    %v2883 = vpack.c.bf16 %v2877, %v2871
    %v2884 = vpack.c.bf16 %v2878, %v2872
    %v2885 = vpack.c.bf16 %v2879, %v2873
    %v2886 = vpack.c.bf16 %v2880, %v2874
    %v2887 = vpack.c.bf16 %v2881, %v2875
    %v2888 = vld [vmem:[#allocation16] sm:$0xff]
    %v2889 = vld [vmem:[#allocation16 + $0x8] sm:$0xff]
    %v2890 = vld [vmem:[#allocation16 + $0x10] sm:$0xff]
    %v2891 = vld [vmem:[#allocation16 + $0x18] sm:$0xff]
    %v2892 = vld [vmem:[#allocation16 + $0x20] sm:$0xff]
    %v2893 = vld [vmem:[#allocation16 + $0x28] sm:$0xff]
    %v2894 = vld [vmem:[#allocation16 + $0x30] sm:$0xff]
    %v2895 = vld [vmem:[#allocation16 + $0x38] sm:$0xff]
    %v2896 = vld [vmem:[#allocation16 + $0x40] sm:$0xff]
    %v2897 = vld [vmem:[#allocation16 + $0x48] sm:$0xff]
    %v2898 = vld [vmem:[#allocation16 + $0x50] sm:$0xff]
    %v2899 = vld [vmem:[#allocation16 + $0x58] sm:$0xff]
    %v2900 = vld [vmem:[#allocation16 + $0x60] sm:$0xff]
    %v2901 = vld [vmem:[#allocation16 + $0x68] sm:$0xff]
    %v2902 = vld [vmem:[#allocation16 + $0x70] sm:$0xff]
    %v2903 = vld [vmem:[#allocation16 + $0x78] sm:$0xff]
    %v2904 = vld [vmem:[#allocation16 + $0x80] sm:$0xff]
    %v2905 = vld [vmem:[#allocation16 + $0x88] sm:$0xff]
    %v2906 = vld [vmem:[#allocation16 + $0x90] sm:$0xff]
    %v2907 = vld [vmem:[#allocation16 + $0x98] sm:$0xff]
    %v2908 = vld [vmem:[#allocation16 + $0xa0] sm:$0xff]
    %v2909 = vld [vmem:[#allocation16 + $0xa8] sm:$0xff]
    %v2910 = vld [vmem:[#allocation16 + $0xb0] sm:$0xff]
    %v2911 = vld [vmem:[#allocation16 + $0xb8] sm:$0xff]
    %v2912 = vld [vmem:[#allocation16 + $0xc0] sm:$0xff]
    %v2913 = vld [vmem:[#allocation16 + $0xc8] sm:$0xff]
    %v2914 = vld [vmem:[#allocation16 + $0xd0] sm:$0xff]
    %v2915 = vld [vmem:[#allocation16 + $0xd8] sm:$0xff]
    %v2916 = vld [vmem:[#allocation16 + $0xe0] sm:$0xff]
    %v2917 = vld [vmem:[#allocation16 + $0xe8] sm:$0xff]
    %v2918 = vld [vmem:[#allocation16 + $0xf0] sm:$0xff]
    %v2919 = vld [vmem:[#allocation16 + $0xf8] sm:$0xff]
    %v2920 = vld [vmem:[#allocation16 + $0x100] sm:$0xff]
    %v2921 = vld [vmem:[#allocation16 + $0x108] sm:$0xff]
    %v2922 = vld [vmem:[#allocation16 + $0x110] sm:$0xff]
    %v2923 = vld [vmem:[#allocation16 + $0x118] sm:$0xff]
    %v2924 = vld [vmem:[#allocation16 + $0x120] sm:$0xff]
    %v2925 = vld [vmem:[#allocation16 + $0x128] sm:$0xff]
    %v2926 = vld [vmem:[#allocation16 + $0x130] sm:$0xff]
    %v2927 = vld [vmem:[#allocation16 + $0x138] sm:$0xff]
    %v2928 = vld [vmem:[#allocation16 + $0x140] sm:$0xff]
    %v2929 = vld [vmem:[#allocation16 + $0x148] sm:$0xff]
    %v2930 = vld [vmem:[#allocation16 + $0x150] sm:$0xff]
    %v2931 = vld [vmem:[#allocation16 + $0x158] sm:$0xff]
    %v2932 = vld [vmem:[#allocation16 + $0x160] sm:$0xff]
    %v2933 = vld [vmem:[#allocation16 + $0x168] sm:$0xff]
    %v2934 = vld [vmem:[#allocation16 + $0x170] sm:$0xff]
    %v2935 = vld [vmem:[#allocation16 + $0x178] sm:$0xff]
    %v2936 = vld [vmem:[#allocation16 + $0x180] sm:$0xff]
    %v2937 = vld [vmem:[#allocation16 + $0x188] sm:$0xff]
    %v2938 = vld [vmem:[#allocation16 + $0x190] sm:$0xff]
    %v2939 = vld [vmem:[#allocation16 + $0x198] sm:$0xff]
    %v2940 = vld [vmem:[#allocation16 + $0x1a0] sm:$0xff]
    %v2941 = vld [vmem:[#allocation16 + $0x1a8] sm:$0xff]
    %v2942 = vld [vmem:[#allocation16 + $0x1b0] sm:$0xff]
    %v2943 = vld [vmem:[#allocation16 + $0x1b8] sm:$0xff]
    %v2944 = vld [vmem:[#allocation16 + $0x1c0] sm:$0xff]
    %v2945 = vld [vmem:[#allocation16 + $0x1c8] sm:$0xff]
    %v2946 = vld [vmem:[#allocation16 + $0x1d0] sm:$0xff]
    %v2947 = vld [vmem:[#allocation16 + $0x1d8] sm:$0xff]
    %v2948 = vld [vmem:[#allocation16 + $0x1e0] sm:$0xff]
    %v2949 = vld [vmem:[#allocation16 + $0x1e8] sm:$0xff]
    %v2950 = vld [vmem:[#allocation16 + $0x1f0] sm:$0xff]
    %v2951 = vld [vmem:[#allocation16 + $0x1f8] sm:$0xff]
    %v2952 = vld [vmem:[#allocation16 + $0x200] sm:$0xff]
    %v2953 = vld [vmem:[#allocation16 + $0x208] sm:$0xff]
    %v2954 = vld [vmem:[#allocation16 + $0x210] sm:$0xff]
    %v2955 = vld [vmem:[#allocation16 + $0x218] sm:$0xff]
    %v2956 = vld [vmem:[#allocation16 + $0x220] sm:$0xff]
    %v2957 = vld [vmem:[#allocation16 + $0x228] sm:$0xff]
    %v2958 = vld [vmem:[#allocation16 + $0x230] sm:$0xff]
    %v2959 = vld [vmem:[#allocation16 + $0x238] sm:$0xff]
    %v2960 = vld [vmem:[#allocation16 + $0x240] sm:$0xff]
    %v2961 = vld [vmem:[#allocation16 + $0x248] sm:$0xff]
    %v2962 = vld [vmem:[#allocation16 + $0x250] sm:$0xff]
    %v2963 = vld [vmem:[#allocation16 + $0x258] sm:$0xff]
    %v2964 = vld [vmem:[#allocation16 + $0x260] sm:$0xff]
    %v2965 = vld [vmem:[#allocation16 + $0x268] sm:$0xff]
    %v2966 = vld [vmem:[#allocation16 + $0x270] sm:$0xff]
    %v2967 = vld [vmem:[#allocation16 + $0x278] sm:$0xff]
    %v2968 = vld [vmem:[#allocation16 + $0x280] sm:$0xff]
    %v2969 = vld [vmem:[#allocation16 + $0x288] sm:$0xff]
    %v2970 = vld [vmem:[#allocation16 + $0x290] sm:$0xff]
    %v2971 = vld [vmem:[#allocation16 + $0x298] sm:$0xff]
    %v2972 = vld [vmem:[#allocation16 + $0x2a0] sm:$0xff]
    %v2973 = vld [vmem:[#allocation16 + $0x2a8] sm:$0xff]
    %v2974 = vld [vmem:[#allocation16 + $0x2b0] sm:$0xff]
    %v2975 = vld [vmem:[#allocation16 + $0x2b8] sm:$0xff]
    %v2976 = vld [vmem:[#allocation16 + $0x2c0] sm:$0xff]
    %v2977 = vld [vmem:[#allocation16 + $0x2c8] sm:$0xff]
    %v2978 = vld [vmem:[#allocation16 + $0x2d0] sm:$0xff]
    %v2979 = vld [vmem:[#allocation16 + $0x2d8] sm:$0xff]
    %v2980 = vld [vmem:[#allocation16 + $0x2e0] sm:$0xff]
    %v2981 = vld [vmem:[#allocation16 + $0x2e8] sm:$0xff]
    %v2982 = vld [vmem:[#allocation16 + $0x2f0] sm:$0xff]
    %v2983 = vld [vmem:[#allocation16 + $0x2f8] sm:$0xff]
    %v2984 = vld [vmem:[#allocation17] sm:$0x3]
    %v2986 = vlaneseq
    %v2987 = vshrl.u32 %v2986, 7
    %v2988 = vsub.s32 0, %v2987
    %v2989 = vrot.slane %v2984, %v2988
    %v2990 = vlaneseq
    %v2991 = vshrl.u32 %v2990, 7
    %v2992 = vsub.s32 1, %v2991
    %v2993 = vrot.slane %v2984, %v2992
    %v3092 = vunpack.c.l.b16 %v2888
    %v3093 = vunpack.c.h.b16 %v2888
    %v3094 = vunpack.c.l.b16 %v2889
    %v3095 = vunpack.c.h.b16 %v2889
    %v3096 = vunpack.c.l.b16 %v2890
    %v3097 = vunpack.c.h.b16 %v2890
    %v3098 = vunpack.c.l.b16 %v2891
    %v3099 = vunpack.c.h.b16 %v2891
    %v3100 = vunpack.c.l.b16 %v2892
    %v3101 = vunpack.c.h.b16 %v2892
    %v3102 = vunpack.c.l.b16 %v2893
    %v3103 = vunpack.c.h.b16 %v2893
    %v3104 = vunpack.c.l.b16 %v2894
    %v3105 = vunpack.c.h.b16 %v2894
    %v3106 = vunpack.c.l.b16 %v2895
    %v3107 = vunpack.c.h.b16 %v2895
    %v3108 = vunpack.c.l.b16 %v2896
    %v3109 = vunpack.c.h.b16 %v2896
    %v3110 = vunpack.c.l.b16 %v2897
    %v3111 = vunpack.c.h.b16 %v2897
    %v3112 = vunpack.c.l.b16 %v2898
    %v3113 = vunpack.c.h.b16 %v2898
    %v3114 = vunpack.c.l.b16 %v2899
    %v3115 = vunpack.c.h.b16 %v2899
    %v3116 = vunpack.c.l.b16 %v2900
    %v3117 = vunpack.c.h.b16 %v2900
    %v3118 = vunpack.c.l.b16 %v2901
    %v3119 = vunpack.c.h.b16 %v2901
    %v3120 = vunpack.c.l.b16 %v2902
    %v3121 = vunpack.c.h.b16 %v2902
    %v3122 = vunpack.c.l.b16 %v2903
    %v3123 = vunpack.c.h.b16 %v2903
    %v3124 = vunpack.c.l.b16 %v2904
    %v3125 = vunpack.c.h.b16 %v2904
    %v3126 = vunpack.c.l.b16 %v2905
    %v3127 = vunpack.c.h.b16 %v2905
    %v3128 = vunpack.c.l.b16 %v2906
    %v3129 = vunpack.c.h.b16 %v2906
    %v3130 = vunpack.c.l.b16 %v2907
    %v3131 = vunpack.c.h.b16 %v2907
    %v3132 = vunpack.c.l.b16 %v2908
    %v3133 = vunpack.c.h.b16 %v2908
    %v3134 = vunpack.c.l.b16 %v2909
    %v3135 = vunpack.c.h.b16 %v2909
    %v3136 = vunpack.c.l.b16 %v2910
    %v3137 = vunpack.c.h.b16 %v2910
    %v3138 = vunpack.c.l.b16 %v2911
    %v3139 = vunpack.c.h.b16 %v2911
    %v3140 = vunpack.c.l.b16 %v2912
    %v3141 = vunpack.c.h.b16 %v2912
    %v3142 = vunpack.c.l.b16 %v2913
    %v3143 = vunpack.c.h.b16 %v2913
    %v3144 = vunpack.c.l.b16 %v2914
    %v3145 = vunpack.c.h.b16 %v2914
    %v3146 = vunpack.c.l.b16 %v2915
    %v3147 = vunpack.c.h.b16 %v2915
    %v3148 = vunpack.c.l.b16 %v2916
    %v3149 = vunpack.c.h.b16 %v2916
    %v3150 = vunpack.c.l.b16 %v2917
    %v3151 = vunpack.c.h.b16 %v2917
    %v3152 = vunpack.c.l.b16 %v2918
    %v3153 = vunpack.c.h.b16 %v2918
    %v3154 = vunpack.c.l.b16 %v2919
    %v3155 = vunpack.c.h.b16 %v2919
    %v3156 = vunpack.c.l.b16 %v2920
    %v3157 = vunpack.c.h.b16 %v2920
    %v3158 = vunpack.c.l.b16 %v2921
    %v3159 = vunpack.c.h.b16 %v2921
    %v3160 = vunpack.c.l.b16 %v2922
    %v3161 = vunpack.c.h.b16 %v2922
    %v3162 = vunpack.c.l.b16 %v2923
    %v3163 = vunpack.c.h.b16 %v2923
    %v3164 = vunpack.c.l.b16 %v2924
    %v3165 = vunpack.c.h.b16 %v2924
    %v3166 = vunpack.c.l.b16 %v2925
    %v3167 = vunpack.c.h.b16 %v2925
    %v3168 = vunpack.c.l.b16 %v2926
    %v3169 = vunpack.c.h.b16 %v2926
    %v3170 = vunpack.c.l.b16 %v2927
    %v3171 = vunpack.c.h.b16 %v2927
    %v3172 = vunpack.c.l.b16 %v2928
    %v3173 = vunpack.c.h.b16 %v2928
    %v3174 = vunpack.c.l.b16 %v2929
    %v3175 = vunpack.c.h.b16 %v2929
    %v3176 = vunpack.c.l.b16 %v2930
    %v3177 = vunpack.c.h.b16 %v2930
    %v3178 = vunpack.c.l.b16 %v2931
    %v3179 = vunpack.c.h.b16 %v2931
    %v3180 = vunpack.c.l.b16 %v2932
    %v3181 = vunpack.c.h.b16 %v2932
    %v3182 = vunpack.c.l.b16 %v2933
    %v3183 = vunpack.c.h.b16 %v2933
    %v3184 = vunpack.c.l.b16 %v2934
    %v3185 = vunpack.c.h.b16 %v2934
    %v3186 = vunpack.c.l.b16 %v2935
    %v3187 = vunpack.c.h.b16 %v2935
    %v3188 = vunpack.c.l.b16 %v2936
    %v3189 = vunpack.c.h.b16 %v2936
    %v3190 = vunpack.c.l.b16 %v2937
    %v3191 = vunpack.c.h.b16 %v2937
    %v3192 = vunpack.c.l.b16 %v2938
    %v3193 = vunpack.c.h.b16 %v2938
    %v3194 = vunpack.c.l.b16 %v2939
    %v3195 = vunpack.c.h.b16 %v2939
    %v3196 = vunpack.c.l.b16 %v2940
    %v3197 = vunpack.c.h.b16 %v2940
    %v3198 = vunpack.c.l.b16 %v2941
    %v3199 = vunpack.c.h.b16 %v2941
    %v3200 = vunpack.c.l.b16 %v2942
    %v3201 = vunpack.c.h.b16 %v2942
    %v3202 = vunpack.c.l.b16 %v2943
    %v3203 = vunpack.c.h.b16 %v2943
    %v3204 = vunpack.c.l.b16 %v2944
    %v3205 = vunpack.c.h.b16 %v2944
    %v3206 = vunpack.c.l.b16 %v2945
    %v3207 = vunpack.c.h.b16 %v2945
    %v3208 = vunpack.c.l.b16 %v2946
    %v3209 = vunpack.c.h.b16 %v2946
    %v3210 = vunpack.c.l.b16 %v2947
    %v3211 = vunpack.c.h.b16 %v2947
    %v3212 = vunpack.c.l.b16 %v2948
    %v3213 = vunpack.c.h.b16 %v2948
    %v3214 = vunpack.c.l.b16 %v2949
    %v3215 = vunpack.c.h.b16 %v2949
    %v3216 = vunpack.c.l.b16 %v2950
    %v3217 = vunpack.c.h.b16 %v2950
    %v3218 = vunpack.c.l.b16 %v2951
    %v3219 = vunpack.c.h.b16 %v2951
    %v3220 = vunpack.c.l.b16 %v2952
    %v3221 = vunpack.c.h.b16 %v2952
    %v3222 = vunpack.c.l.b16 %v2953
    %v3223 = vunpack.c.h.b16 %v2953
    %v3224 = vunpack.c.l.b16 %v2954
    %v3225 = vunpack.c.h.b16 %v2954
    %v3226 = vunpack.c.l.b16 %v2955
    %v3227 = vunpack.c.h.b16 %v2955
    %v3228 = vunpack.c.l.b16 %v2956
    %v3229 = vunpack.c.h.b16 %v2956
    %v3230 = vunpack.c.l.b16 %v2957
    %v3231 = vunpack.c.h.b16 %v2957
    %v3232 = vunpack.c.l.b16 %v2958
    %v3233 = vunpack.c.h.b16 %v2958
    %v3234 = vunpack.c.l.b16 %v2959
    %v3235 = vunpack.c.h.b16 %v2959
    %v3236 = vunpack.c.l.b16 %v2960
    %v3237 = vunpack.c.h.b16 %v2960
    %v3238 = vunpack.c.l.b16 %v2961
    %v3239 = vunpack.c.h.b16 %v2961
    %v3240 = vunpack.c.l.b16 %v2962
    %v3241 = vunpack.c.h.b16 %v2962
    %v3242 = vunpack.c.l.b16 %v2963
    %v3243 = vunpack.c.h.b16 %v2963
    %v3244 = vunpack.c.l.b16 %v2964
    %v3245 = vunpack.c.h.b16 %v2964
    %v3246 = vunpack.c.l.b16 %v2965
    %v3247 = vunpack.c.h.b16 %v2965
    %v3248 = vunpack.c.l.b16 %v2966
    %v3249 = vunpack.c.h.b16 %v2966
    %v3250 = vunpack.c.l.b16 %v2967
    %v3251 = vunpack.c.h.b16 %v2967
    %v3252 = vunpack.c.l.b16 %v2968
    %v3253 = vunpack.c.h.b16 %v2968
    %v3254 = vunpack.c.l.b16 %v2969
    %v3255 = vunpack.c.h.b16 %v2969
    %v3256 = vunpack.c.l.b16 %v2970
    %v3257 = vunpack.c.h.b16 %v2970
    %v3258 = vunpack.c.l.b16 %v2971
    %v3259 = vunpack.c.h.b16 %v2971
    %v3260 = vunpack.c.l.b16 %v2972
    %v3261 = vunpack.c.h.b16 %v2972
    %v3262 = vunpack.c.l.b16 %v2973
    %v3263 = vunpack.c.h.b16 %v2973
    %v3264 = vunpack.c.l.b16 %v2974
    %v3265 = vunpack.c.h.b16 %v2974
    %v3266 = vunpack.c.l.b16 %v2975
    %v3267 = vunpack.c.h.b16 %v2975
    %v3268 = vunpack.c.l.b16 %v2976
    %v3269 = vunpack.c.h.b16 %v2976
    %v3270 = vunpack.c.l.b16 %v2977
    %v3271 = vunpack.c.h.b16 %v2977
    %v3272 = vunpack.c.l.b16 %v2978
    %v3273 = vunpack.c.h.b16 %v2978
    %v3274 = vunpack.c.l.b16 %v2979
    %v3275 = vunpack.c.h.b16 %v2979
    %v3276 = vunpack.c.l.b16 %v2980
    %v3277 = vunpack.c.h.b16 %v2980
    %v3278 = vunpack.c.l.b16 %v2981
    %v3279 = vunpack.c.h.b16 %v2981
    %v3280 = vunpack.c.l.b16 %v2982
    %v3281 = vunpack.c.h.b16 %v2982
    %v3282 = vunpack.c.l.b16 %v2983
    %v3283 = vunpack.c.h.b16 %v2983
    %v3284 = vpack.c.b16 %v3094, %v3092
    %v3285 = vpack.c.b16 %v3095, %v3093
    %v3286 = vpack.c.b16 %v3098, %v3096
    %v3287 = vpack.c.b16 %v3099, %v3097
    %v3288 = vpack.c.b16 %v3102, %v3100
    %v3289 = vpack.c.b16 %v3103, %v3101
    %v3290 = vpack.c.b16 %v3106, %v3104
    %v3291 = vpack.c.b16 %v3107, %v3105
    %v3292 = vpack.c.b16 %v3110, %v3108
    %v3293 = vpack.c.b16 %v3111, %v3109
    %v3294 = vpack.c.b16 %v3114, %v3112
    %v3295 = vpack.c.b16 %v3115, %v3113
    %v3296 = vpack.c.b16 %v3118, %v3116
    %v3297 = vpack.c.b16 %v3119, %v3117
    %v3298 = vpack.c.b16 %v3122, %v3120
    %v3299 = vpack.c.b16 %v3123, %v3121
    %v3300 = vpack.c.b16 %v3126, %v3124
    %v3301 = vpack.c.b16 %v3127, %v3125
    %v3302 = vpack.c.b16 %v3130, %v3128
    %v3303 = vpack.c.b16 %v3131, %v3129
    %v3304 = vpack.c.b16 %v3134, %v3132
    %v3305 = vpack.c.b16 %v3135, %v3133
    %v3306 = vpack.c.b16 %v3138, %v3136
    %v3307 = vpack.c.b16 %v3139, %v3137
    %v3308 = vpack.c.b16 %v3142, %v3140
    %v3309 = vpack.c.b16 %v3143, %v3141
    %v3310 = vpack.c.b16 %v3146, %v3144
    %v3311 = vpack.c.b16 %v3147, %v3145
    %v3312 = vpack.c.b16 %v3150, %v3148
    %v3313 = vpack.c.b16 %v3151, %v3149
    %v3314 = vpack.c.b16 %v3154, %v3152
    %v3315 = vpack.c.b16 %v3155, %v3153
    %v3316 = vpack.c.b16 %v3158, %v3156
    %v3317 = vpack.c.b16 %v3159, %v3157
    %v3318 = vpack.c.b16 %v3162, %v3160
    %v3319 = vpack.c.b16 %v3163, %v3161
    %v3320 = vpack.c.b16 %v3166, %v3164
    %v3321 = vpack.c.b16 %v3167, %v3165
    %v3322 = vpack.c.b16 %v3170, %v3168
    %v3323 = vpack.c.b16 %v3171, %v3169
    %v3324 = vpack.c.b16 %v3174, %v3172
    %v3325 = vpack.c.b16 %v3175, %v3173
    %v3326 = vpack.c.b16 %v3178, %v3176
    %v3327 = vpack.c.b16 %v3179, %v3177
    %v3328 = vpack.c.b16 %v3182, %v3180
    %v3329 = vpack.c.b16 %v3183, %v3181
    %v3330 = vpack.c.b16 %v3186, %v3184
    %v3331 = vpack.c.b16 %v3187, %v3185
    %v3332 = vpack.c.b16 %v3190, %v3188
    %v3333 = vpack.c.b16 %v3191, %v3189
    %v3334 = vpack.c.b16 %v3194, %v3192
    %v3335 = vpack.c.b16 %v3195, %v3193
    %v3336 = vpack.c.b16 %v3198, %v3196
    %v3337 = vpack.c.b16 %v3199, %v3197
    %v3338 = vpack.c.b16 %v3202, %v3200
    %v3339 = vpack.c.b16 %v3203, %v3201
    %v3340 = vpack.c.b16 %v3206, %v3204
    %v3341 = vpack.c.b16 %v3207, %v3205
    %v3342 = vpack.c.b16 %v3210, %v3208
    %v3343 = vpack.c.b16 %v3211, %v3209
    %v3344 = vpack.c.b16 %v3214, %v3212
    %v3345 = vpack.c.b16 %v3215, %v3213
    %v3346 = vpack.c.b16 %v3218, %v3216
    %v3347 = vpack.c.b16 %v3219, %v3217
    %v3348 = vpack.c.b16 %v3222, %v3220
    %v3349 = vpack.c.b16 %v3223, %v3221
    %v3350 = vpack.c.b16 %v3226, %v3224
    %v3351 = vpack.c.b16 %v3227, %v3225
    %v3352 = vpack.c.b16 %v3230, %v3228
    %v3353 = vpack.c.b16 %v3231, %v3229
    %v3354 = vpack.c.b16 %v3234, %v3232
    %v3355 = vpack.c.b16 %v3235, %v3233
    %v3356 = vpack.c.b16 %v3238, %v3236
    %v3357 = vpack.c.b16 %v3239, %v3237
    %v3358 = vpack.c.b16 %v3242, %v3240
    %v3359 = vpack.c.b16 %v3243, %v3241
    %v3360 = vpack.c.b16 %v3246, %v3244
    %v3361 = vpack.c.b16 %v3247, %v3245
    %v3362 = vpack.c.b16 %v3250, %v3248
    %v3363 = vpack.c.b16 %v3251, %v3249
    %v3364 = vpack.c.b16 %v3254, %v3252
    %v3365 = vpack.c.b16 %v3255, %v3253
    %v3366 = vpack.c.b16 %v3258, %v3256
    %v3367 = vpack.c.b16 %v3259, %v3257
    %v3368 = vpack.c.b16 %v3262, %v3260
    %v3369 = vpack.c.b16 %v3263, %v3261
    %v3370 = vpack.c.b16 %v3266, %v3264
    %v3371 = vpack.c.b16 %v3267, %v3265
    %v3372 = vpack.c.b16 %v3270, %v3268
    %v3373 = vpack.c.b16 %v3271, %v3269
    %v3374 = vpack.c.b16 %v3274, %v3272
    %v3375 = vpack.c.b16 %v3275, %v3273
    %v3376 = vpack.c.b16 %v3278, %v3276
    %v3377 = vpack.c.b16 %v3279, %v3277
    %v3378 = vpack.c.b16 %v3282, %v3280
    %v3379 = vpack.c.b16 %v3283, %v3281
    %3476 = vmatprep.subr.bf16.mxu0 %v3299
    %3477 = vmatpush1.bf16.msra.mxu0 %v3298
    %3478 = vmatprep.subr.bf16.mxu0 %v3297
    %3479 = vmatpush1.bf16.msra.mxu0 %v3296
    %3480 = vmatprep.subr.bf16.mxu0 %v3295
    %3481 = vmatpush1.bf16.msra.mxu0 %v3294
    %3482 = vmatprep.subr.bf16.mxu0 %v3293
    %3483 = vmatpush1.bf16.msra.mxu0 %v3292
    %3484 = vmatprep.subr.bf16.mxu0 %v3291
    %3485 = vmatpush1.bf16.msra.mxu0 %v3290
    %3486 = vmatprep.subr.bf16.mxu0 %v3289
    %3487 = vmatpush1.bf16.msra.mxu0 %v3288
    %3488 = vmatprep.subr.bf16.mxu0 %v3287
    %3489 = vmatpush1.bf16.msra.mxu0 %v3286
    %3490 = vmatprep.subr.bf16.mxu0 %v3285
    %3491 = vmatpush1.bf16.msra.mxu0 %v3284
    %3492 = vmatprep.subr.bf16.mxu0 %v3315
    %3493 = vmatpush2.bf16.msra.mxu0 %v3314
    %3494 = vmatprep.subr.bf16.mxu0 %v3313
    %3495 = vmatpush2.bf16.msra.mxu0 %v3312
    %3496 = vmatprep.subr.bf16.mxu0 %v3311
    %3497 = vmatpush2.bf16.msra.mxu0 %v3310
    %3498 = vmatprep.subr.bf16.mxu0 %v3309
    %3499 = vmatpush2.bf16.msra.mxu0 %v3308
    %3500 = vmatprep.subr.bf16.mxu0 %v3307
    %3501 = vmatpush2.bf16.msra.mxu0 %v3306
    %3502 = vmatprep.subr.bf16.mxu0 %v3305
    %3503 = vmatpush2.bf16.msra.mxu0 %v3304
    %3504 = vmatprep.subr.bf16.mxu0 %v3303
    %3505 = vmatpush2.bf16.msra.mxu0 %v3302
    %3506 = vmatprep.subr.bf16.mxu0 %v3301
    %3507 = vmatpush2.bf16.msra.mxu0 %v3300
    %3508 = vmatprep.mubr.bf16.mxu0 %v2883
    %3509 = vmatmul.mubr.bf16.gmra.mxu0 %v2882
    %v3510 = vpop.f32.mrf.mxu0
    %v3511 = vadd.f32 %v2989, %v3510
    %v3512 = vpop.f32.mrf.mxu0
    %v3513 = vadd.f32 %v2993, %v3512
    %v3514 = vpop.f32.mrf.mxu0
    %v3515 = vadd.f32 %v2989, %v3514
    %v3516 = vpop.f32.mrf.mxu0
    %v3517 = vadd.f32 %v2993, %v3516
    %3518 = vdwg.mxu0
    %3519 = vmatprep.subr.bf16.mxu0 %v3331
    %3520 = vmatpush1.bf16.msra.mxu0 %v3330
    %3521 = vmatprep.subr.bf16.mxu0 %v3329
    %3522 = vmatpush1.bf16.msra.mxu0 %v3328
    %3523 = vmatprep.subr.bf16.mxu0 %v3327
    %3524 = vmatpush1.bf16.msra.mxu0 %v3326
    %3525 = vmatprep.subr.bf16.mxu0 %v3325
    %3526 = vmatpush1.bf16.msra.mxu0 %v3324
    %3527 = vmatprep.subr.bf16.mxu0 %v3323
    %3528 = vmatpush1.bf16.msra.mxu0 %v3322
    %3529 = vmatprep.subr.bf16.mxu0 %v3321
    %3530 = vmatpush1.bf16.msra.mxu0 %v3320
    %3531 = vmatprep.subr.bf16.mxu0 %v3319
    %3532 = vmatpush1.bf16.msra.mxu0 %v3318
    %3533 = vmatprep.subr.bf16.mxu0 %v3317
    %3534 = vmatpush1.bf16.msra.mxu0 %v3316
    %3535 = vmatprep.subr.bf16.mxu0 %v3347
    %3536 = vmatpush2.bf16.msra.mxu0 %v3346
    %3537 = vmatprep.subr.bf16.mxu0 %v3345
    %3538 = vmatpush2.bf16.msra.mxu0 %v3344
    %3539 = vmatprep.subr.bf16.mxu0 %v3343
    %3540 = vmatpush2.bf16.msra.mxu0 %v3342
    %3541 = vmatprep.subr.bf16.mxu0 %v3341
    %3542 = vmatpush2.bf16.msra.mxu0 %v3340
    %3543 = vmatprep.subr.bf16.mxu0 %v3339
    %3544 = vmatpush2.bf16.msra.mxu0 %v3338
    %3545 = vmatprep.subr.bf16.mxu0 %v3337
    %3546 = vmatpush2.bf16.msra.mxu0 %v3336
    %3547 = vmatprep.subr.bf16.mxu0 %v3335
    %3548 = vmatpush2.bf16.msra.mxu0 %v3334
    %3549 = vmatprep.subr.bf16.mxu0 %v3333
    %3550 = vmatpush2.bf16.msra.mxu0 %v3332
    %3551 = vmatprep.mubr.bf16.mxu0 %v2885
    %3552 = vmatmul.mubr.bf16.gmra.mxu0 %v2884
    %v3553 = vpop.f32.mrf.mxu0
    %v3554 = vadd.f32 %v3511, %v3553
    %v3555 = vpop.f32.mrf.mxu0
    %v3556 = vadd.f32 %v3513, %v3555
    %v3557 = vpop.f32.mrf.mxu0
    %v3558 = vadd.f32 %v3515, %v3557
    %v3559 = vpop.f32.mrf.mxu0
    %v3560 = vadd.f32 %v3517, %v3559
    %3561 = vdwg.mxu0
    %3562 = vmatprep.subr.bf16.mxu0 %v3363
    %3563 = vmatpush1.bf16.msra.mxu0 %v3362
    %3564 = vmatprep.subr.bf16.mxu0 %v3361
    %3565 = vmatpush1.bf16.msra.mxu0 %v3360
    %3566 = vmatprep.subr.bf16.mxu0 %v3359
    %3567 = vmatpush1.bf16.msra.mxu0 %v3358
    %3568 = vmatprep.subr.bf16.mxu0 %v3357
    %3569 = vmatpush1.bf16.msra.mxu0 %v3356
    %3570 = vmatprep.subr.bf16.mxu0 %v3355
    %3571 = vmatpush1.bf16.msra.mxu0 %v3354
    %3572 = vmatprep.subr.bf16.mxu0 %v3353
    %3573 = vmatpush1.bf16.msra.mxu0 %v3352
    %3574 = vmatprep.subr.bf16.mxu0 %v3351
    %3575 = vmatpush1.bf16.msra.mxu0 %v3350
    %3576 = vmatprep.subr.bf16.mxu0 %v3349
    %3577 = vmatpush1.bf16.msra.mxu0 %v3348
    %3578 = vmatprep.subr.bf16.mxu0 %v3379
    %3579 = vmatpush2.bf16.msra.mxu0 %v3378
    %3580 = vmatprep.subr.bf16.mxu0 %v3377
    %3581 = vmatpush2.bf16.msra.mxu0 %v3376
    %3582 = vmatprep.subr.bf16.mxu0 %v3375
    %3583 = vmatpush2.bf16.msra.mxu0 %v3374
    %3584 = vmatprep.subr.bf16.mxu0 %v3373
    %3585 = vmatpush2.bf16.msra.mxu0 %v3372
    %3586 = vmatprep.subr.bf16.mxu0 %v3371
    %3587 = vmatpush2.bf16.msra.mxu0 %v3370
    %3588 = vmatprep.subr.bf16.mxu0 %v3369
    %3589 = vmatpush2.bf16.msra.mxu0 %v3368
    %3590 = vmatprep.subr.bf16.mxu0 %v3367
    %3591 = vmatpush2.bf16.msra.mxu0 %v3366
    %3592 = vmatprep.subr.bf16.mxu0 %v3365
    %3593 = vmatpush2.bf16.msra.mxu0 %v3364
    %3594 = vmatprep.mubr.bf16.mxu0 %v2887
    %3595 = vmatmul.mubr.bf16.gmra.mxu0 %v2886
    %v3596 = vpop.f32.mrf.mxu0
    %v3597 = vadd.f32 %v3554, %v3596
    %v3598 = vpop.f32.mrf.mxu0
    %v3599 = vadd.f32 %v3556, %v3598
    %v3600 = vpop.f32.mrf.mxu0
    %v3601 = vadd.f32 %v3558, %v3600
    %v3602 = vpop.f32.mrf.mxu0
    %v3603 = vadd.f32 %v3560, %v3602
    %3604 = vdwg.mxu0
    %v3605 = vmax.f32 %v3599, -4.0
    %v3606 = vmax.f32 %v3603, -4.0
    %v3607 = vmin.f32 %v3605, 15.0
    %v3608 = vmin.f32 %v3606, 15.0
    %v3609 = vmul.f32 %v3607, 1.442695
    %v3610 = vpow.pop %v3609
    %v3611 = vmul.f32 %v3608, 1.442695
    %v3612 = vpow.pop %v3611
    %v3613 = vmul.f32 %v3610, %v279
    %v3614 = vmul.f32 %v3612, %v280
    %v3615 = vadd.f32 %v3597, %v3613
    %v3616 = vadd.f32 %v3601, %v3614
    %v3617 = vld [vmem:[#allocation19] sm:$0xff]
    %v3618 = vld [vmem:[#allocation19 + $0x8] sm:$0xff]
    %v3619 = vld [vmem:[#allocation19 + $0x10] sm:$0xff]
    %v3620 = vld [vmem:[#allocation19 + $0x18] sm:$0xff]
    %v3621 = vld [vmem:[#allocation19 + $0x20] sm:$0xff]
    %v3622 = vld [vmem:[#allocation19 + $0x28] sm:$0xff]
    %v3623 = vld [vmem:[#allocation19 + $0x30] sm:$0x11]
    %v3624 = vld [vmem:[#allocation19 + $0x38] sm:$0x11]
    %v3625 = vld [vmem:[#allocation19 + $0x40] sm:$0x11]
    %v3626 = vpack.c.bf16 %v3616, %v3615
    %v3627 = vld [vmem:[#allocation20] sm:$0xff]
    %v3628 = vld [vmem:[#allocation20 + $0x8] sm:$0xff]
    %v3629 = vld [vmem:[#allocation20 + $0x10] sm:$0xff]
    %v3630 = vld [vmem:[#allocation20 + $0x18] sm:$0xff]
    %v3631 = vld [vmem:[#allocation20 + $0x20] sm:$0xff]
    %v3632 = vld [vmem:[#allocation20 + $0x28] sm:$0xff]
    %v3633 = vld [vmem:[#allocation20 + $0x30] sm:$0xff]
    %v3634 = vld [vmem:[#allocation20 + $0x38] sm:$0xff]
    %v3635 = vld [vmem:[#allocation20 + $0x40] sm:$0xff]
    %v3636 = vld [vmem:[#allocation20 + $0x48] sm:$0xff]
    %v3637 = vld [vmem:[#allocation20 + $0x50] sm:$0xff]
    %v3638 = vld [vmem:[#allocation20 + $0x58] sm:$0xff]
    %v3639 = vld [vmem:[#allocation20 + $0x60] sm:$0xff]
    %v3640 = vld [vmem:[#allocation20 + $0x68] sm:$0xff]
    %v3641 = vld [vmem:[#allocation20 + $0x70] sm:$0xff]
    %v3642 = vld [vmem:[#allocation20 + $0x78] sm:$0xff]
    %v3643 = vld [vmem:[#allocation20 + $0x80] sm:$0xff]
    %v3644 = vld [vmem:[#allocation20 + $0x88] sm:$0xff]
    %v3645 = vld [vmem:[#allocation20 + $0x90] sm:$0xff]
    %v3646 = vld [vmem:[#allocation20 + $0x98] sm:$0xff]
    %v3647 = vld [vmem:[#allocation20 + $0xa0] sm:$0xff]
    %v3648 = vld [vmem:[#allocation20 + $0xa8] sm:$0xff]
    %v3649 = vld [vmem:[#allocation20 + $0xb0] sm:$0xff]
    %v3650 = vld [vmem:[#allocation20 + $0xb8] sm:$0xff]
    %v3651 = vld [vmem:[#allocation20 + $0xc0] sm:$0xff]
    %v3652 = vld [vmem:[#allocation20 + $0xc8] sm:$0xff]
    %v3653 = vld [vmem:[#allocation20 + $0xd0] sm:$0xff]
    %v3654 = vld [vmem:[#allocation20 + $0xd8] sm:$0xff]
    %v3655 = vld [vmem:[#allocation20 + $0xe0] sm:$0xff]
    %v3656 = vld [vmem:[#allocation20 + $0xe8] sm:$0xff]
    %v3657 = vld [vmem:[#allocation20 + $0xf0] sm:$0xff]
    %v3658 = vld [vmem:[#allocation20 + $0xf8] sm:$0xff]
    %v3659 = vld [vmem:[#allocation20 + $0x100] sm:$0xff]
    %v3660 = vld [vmem:[#allocation20 + $0x108] sm:$0xff]
    %v3661 = vld [vmem:[#allocation20 + $0x110] sm:$0xff]
    %v3662 = vld [vmem:[#allocation20 + $0x118] sm:$0xff]
    %v3663 = vld [vmem:[#allocation20 + $0x120] sm:$0xff]
    %v3664 = vld [vmem:[#allocation20 + $0x128] sm:$0xff]
    %v3665 = vld [vmem:[#allocation20 + $0x130] sm:$0xff]
    %v3666 = vld [vmem:[#allocation20 + $0x138] sm:$0xff]
    %v3667 = vld [vmem:[#allocation20 + $0x140] sm:$0xff]
    %v3668 = vld [vmem:[#allocation20 + $0x148] sm:$0xff]
    %v3669 = vld [vmem:[#allocation20 + $0x150] sm:$0xff]
    %v3670 = vld [vmem:[#allocation20 + $0x158] sm:$0xff]
    %v3671 = vld [vmem:[#allocation20 + $0x160] sm:$0xff]
    %v3672 = vld [vmem:[#allocation20 + $0x168] sm:$0xff]
    %v3673 = vld [vmem:[#allocation20 + $0x170] sm:$0xff]
    %v3674 = vld [vmem:[#allocation20 + $0x178] sm:$0xff]
    %v3723 = vunpack.c.l.b16 %v3627
    %v3724 = vunpack.c.h.b16 %v3627
    %v3725 = vunpack.c.l.b16 %v3628
    %v3726 = vunpack.c.h.b16 %v3628
    %v3727 = vunpack.c.l.b16 %v3629
    %v3728 = vunpack.c.h.b16 %v3629
    %v3729 = vunpack.c.l.b16 %v3630
    %v3730 = vunpack.c.h.b16 %v3630
    %v3731 = vunpack.c.l.b16 %v3631
    %v3732 = vunpack.c.h.b16 %v3631
    %v3733 = vunpack.c.l.b16 %v3632
    %v3734 = vunpack.c.h.b16 %v3632
    %v3735 = vunpack.c.l.b16 %v3633
    %v3736 = vunpack.c.h.b16 %v3633
    %v3737 = vunpack.c.l.b16 %v3634
    %v3738 = vunpack.c.h.b16 %v3634
    %v3739 = vunpack.c.l.b16 %v3635
    %v3740 = vunpack.c.h.b16 %v3635
    %v3741 = vunpack.c.l.b16 %v3636
    %v3742 = vunpack.c.h.b16 %v3636
    %v3743 = vunpack.c.l.b16 %v3637
    %v3744 = vunpack.c.h.b16 %v3637
    %v3745 = vunpack.c.l.b16 %v3638
    %v3746 = vunpack.c.h.b16 %v3638
    %v3747 = vunpack.c.l.b16 %v3639
    %v3748 = vunpack.c.h.b16 %v3639
    %v3749 = vunpack.c.l.b16 %v3640
    %v3750 = vunpack.c.h.b16 %v3640
    %v3751 = vunpack.c.l.b16 %v3641
    %v3752 = vunpack.c.h.b16 %v3641
    %v3753 = vunpack.c.l.b16 %v3642
    %v3754 = vunpack.c.h.b16 %v3642
    %v3755 = vunpack.c.l.b16 %v3643
    %v3756 = vunpack.c.h.b16 %v3643
    %v3757 = vunpack.c.l.b16 %v3644
    %v3758 = vunpack.c.h.b16 %v3644
    %v3759 = vunpack.c.l.b16 %v3645
    %v3760 = vunpack.c.h.b16 %v3645
    %v3761 = vunpack.c.l.b16 %v3646
    %v3762 = vunpack.c.h.b16 %v3646
    %v3763 = vunpack.c.l.b16 %v3647
    %v3764 = vunpack.c.h.b16 %v3647
    %v3765 = vunpack.c.l.b16 %v3648
    %v3766 = vunpack.c.h.b16 %v3648
    %v3767 = vunpack.c.l.b16 %v3649
    %v3768 = vunpack.c.h.b16 %v3649
    %v3769 = vunpack.c.l.b16 %v3650
    %v3770 = vunpack.c.h.b16 %v3650
    %v3771 = vunpack.c.l.b16 %v3651
    %v3772 = vunpack.c.h.b16 %v3651
    %v3773 = vunpack.c.l.b16 %v3652
    %v3774 = vunpack.c.h.b16 %v3652
    %v3775 = vunpack.c.l.b16 %v3653
    %v3776 = vunpack.c.h.b16 %v3653
    %v3777 = vunpack.c.l.b16 %v3654
    %v3778 = vunpack.c.h.b16 %v3654
    %v3779 = vunpack.c.l.b16 %v3655
    %v3780 = vunpack.c.h.b16 %v3655
    %v3781 = vunpack.c.l.b16 %v3656
    %v3782 = vunpack.c.h.b16 %v3656
    %v3783 = vunpack.c.l.b16 %v3657
    %v3784 = vunpack.c.h.b16 %v3657
    %v3785 = vunpack.c.l.b16 %v3658
    %v3786 = vunpack.c.h.b16 %v3658
    %v3787 = vunpack.c.l.b16 %v3659
    %v3788 = vunpack.c.h.b16 %v3659
    %v3789 = vunpack.c.l.b16 %v3660
    %v3790 = vunpack.c.h.b16 %v3660
    %v3791 = vunpack.c.l.b16 %v3661
    %v3792 = vunpack.c.h.b16 %v3661
    %v3793 = vunpack.c.l.b16 %v3662
    %v3794 = vunpack.c.h.b16 %v3662
    %v3795 = vunpack.c.l.b16 %v3663
    %v3796 = vunpack.c.h.b16 %v3663
    %v3797 = vunpack.c.l.b16 %v3664
    %v3798 = vunpack.c.h.b16 %v3664
    %v3799 = vunpack.c.l.b16 %v3665
    %v3800 = vunpack.c.h.b16 %v3665
    %v3801 = vunpack.c.l.b16 %v3666
    %v3802 = vunpack.c.h.b16 %v3666
    %v3803 = vunpack.c.l.b16 %v3667
    %v3804 = vunpack.c.h.b16 %v3667
    %v3805 = vunpack.c.l.b16 %v3668
    %v3806 = vunpack.c.h.b16 %v3668
    %v3807 = vunpack.c.l.b16 %v3669
    %v3808 = vunpack.c.h.b16 %v3669
    %v3809 = vunpack.c.l.b16 %v3670
    %v3810 = vunpack.c.h.b16 %v3670
    %v3811 = vunpack.c.l.b16 %v3671
    %v3812 = vunpack.c.h.b16 %v3671
    %v3813 = vunpack.c.l.b16 %v3672
    %v3814 = vunpack.c.h.b16 %v3672
    %v3815 = vunpack.c.l.b16 %v3673
    %v3816 = vunpack.c.h.b16 %v3673
    %v3817 = vunpack.c.l.b16 %v3674
    %v3818 = vunpack.c.h.b16 %v3674
    %v3819 = vpack.c.b16 %v3729, %v3723
    %v3820 = vpack.c.b16 %v3730, %v3724
    %v3821 = vpack.c.b16 %v3731, %v3725
    %v3822 = vpack.c.b16 %v3732, %v3726
    %v3823 = vpack.c.b16 %v3733, %v3727
    %v3824 = vpack.c.b16 %v3734, %v3728
    %v3825 = vpack.c.b16 %v3741, %v3735
    %v3826 = vpack.c.b16 %v3742, %v3736
    %v3827 = vpack.c.b16 %v3743, %v3737
    %v3828 = vpack.c.b16 %v3744, %v3738
    %v3829 = vpack.c.b16 %v3745, %v3739
    %v3830 = vpack.c.b16 %v3746, %v3740
    %v3831 = vpack.c.b16 %v3753, %v3747
    %v3832 = vpack.c.b16 %v3754, %v3748
    %v3833 = vpack.c.b16 %v3755, %v3749
    %v3834 = vpack.c.b16 %v3756, %v3750
    %v3835 = vpack.c.b16 %v3757, %v3751
    %v3836 = vpack.c.b16 %v3758, %v3752
    %v3837 = vpack.c.b16 %v3765, %v3759
    %v3838 = vpack.c.b16 %v3766, %v3760
    %v3839 = vpack.c.b16 %v3767, %v3761
    %v3840 = vpack.c.b16 %v3768, %v3762
    %v3841 = vpack.c.b16 %v3769, %v3763
    %v3842 = vpack.c.b16 %v3770, %v3764
    %v3843 = vpack.c.b16 %v3777, %v3771
    %v3844 = vpack.c.b16 %v3778, %v3772
    %v3845 = vpack.c.b16 %v3779, %v3773
    %v3846 = vpack.c.b16 %v3780, %v3774
    %v3847 = vpack.c.b16 %v3781, %v3775
    %v3848 = vpack.c.b16 %v3782, %v3776
    %v3849 = vpack.c.b16 %v3789, %v3783
    %v3850 = vpack.c.b16 %v3790, %v3784
    %v3851 = vpack.c.b16 %v3791, %v3785
    %v3852 = vpack.c.b16 %v3792, %v3786
    %v3853 = vpack.c.b16 %v3793, %v3787
    %v3854 = vpack.c.b16 %v3794, %v3788
    %v3855 = vpack.c.b16 %v3801, %v3795
    %v3856 = vpack.c.b16 %v3802, %v3796
    %v3857 = vpack.c.b16 %v3803, %v3797
    %v3858 = vpack.c.b16 %v3804, %v3798
    %v3859 = vpack.c.b16 %v3805, %v3799
    %v3860 = vpack.c.b16 %v3806, %v3800
    %v3861 = vpack.c.b16 %v3813, %v3807
    %v3862 = vpack.c.b16 %v3814, %v3808
    %v3863 = vpack.c.b16 %v3815, %v3809
    %v3864 = vpack.c.b16 %v3816, %v3810
    %v3865 = vpack.c.b16 %v3817, %v3811
    %v3866 = vpack.c.b16 %v3818, %v3812
    %3915 = vmatprep.subr.bf16.mxu0 %v3862
    %3916 = vmatpush1.bf16.msra.mxu0 %v3861
    %3917 = vmatprep.subr.bf16.mxu0 %v3856
    %3918 = vmatpush1.bf16.msra.mxu0 %v3855
    %3919 = vmatprep.subr.bf16.mxu0 %v3850
    %3920 = vmatpush1.bf16.msra.mxu0 %v3849
    %3921 = vmatprep.subr.bf16.mxu0 %v3844
    %3922 = vmatpush1.bf16.msra.mxu0 %v3843
    %3923 = vmatprep.subr.bf16.mxu0 %v3838
    %3924 = vmatpush1.bf16.msra.mxu0 %v3837
    %3925 = vmatprep.subr.bf16.mxu0 %v3832
    %3926 = vmatpush1.bf16.msra.mxu0 %v3831
    %3927 = vmatprep.subr.bf16.mxu0 %v3826
    %3928 = vmatpush1.bf16.msra.mxu0 %v3825
    %3929 = vmatprep.subr.bf16.mxu0 %v3820
    %3930 = vmatpush1.bf16.msra.mxu0 %v3819
    %3931 = vmatprep.subr.bf16.mxu0 0
    %3932 = vmatpush2.bf16.msra.mxu0 0
    %3933 = vmatprep.subr.bf16.mxu0 0
    %3934 = vmatpush2.bf16.msra.mxu0 0
    %3935 = vmatprep.subr.bf16.mxu0 0
    %3936 = vmatpush2.bf16.msra.mxu0 0
    %3937 = vmatprep.subr.bf16.mxu0 0
    %3938 = vmatpush2.bf16.msra.mxu0 0
    %3939 = vmatprep.subr.bf16.mxu0 0
    %3940 = vmatpush2.bf16.msra.mxu0 0
    %3941 = vmatprep.subr.bf16.mxu0 0
    %3942 = vmatpush2.bf16.msra.mxu0 0
    %3943 = vmatprep.subr.bf16.mxu0 0
    %3944 = vmatpush2.bf16.msra.mxu0 0
    %3945 = vmatprep.subr.bf16.mxu0 0
    %3946 = vmatpush2.bf16.msra.mxu0 0
    %3947 = vmatprep.mubr.bf16.mxu0 0
    %3948 = vmatmul.mubr.bf16.gmra.mxu0 %v3626
    %v3949 = vpop.f32.mrf.mxu0
    %v3950 = vadd.f32 0.0, %v3949
    %v3951 = vpop.f32.mrf.mxu0
    %v3952 = vadd.f32 0.0, %v3951
    %v3953 = vpop.f32.mrf.mxu0
    %v3954 = vadd.f32 0.0, %v3953
    %v3955 = vpop.f32.mrf.mxu0
    %v3956 = vadd.f32 0.0, %v3955
    %3957 = vdwg.mxu0
    %3958 = vmatprep.subr.bf16.mxu0 %v3864
    %3959 = vmatpush1.bf16.msra.mxu0 %v3863
    %3960 = vmatprep.subr.bf16.mxu0 %v3858
    %3961 = vmatpush1.bf16.msra.mxu0 %v3857
    %3962 = vmatprep.subr.bf16.mxu0 %v3852
    %3963 = vmatpush1.bf16.msra.mxu0 %v3851
    %3964 = vmatprep.subr.bf16.mxu0 %v3846
    %3965 = vmatpush1.bf16.msra.mxu0 %v3845
    %3966 = vmatprep.subr.bf16.mxu0 %v3840
    %3967 = vmatpush1.bf16.msra.mxu0 %v3839
    %3968 = vmatprep.subr.bf16.mxu0 %v3834
    %3969 = vmatpush1.bf16.msra.mxu0 %v3833
    %3970 = vmatprep.subr.bf16.mxu0 %v3828
    %3971 = vmatpush1.bf16.msra.mxu0 %v3827
    %3972 = vmatprep.subr.bf16.mxu0 %v3822
    %3973 = vmatpush1.bf16.msra.mxu0 %v3821
    %3974 = vmatprep.subr.bf16.mxu0 0
    %3975 = vmatpush2.bf16.msra.mxu0 0
    %3976 = vmatprep.subr.bf16.mxu0 0
    %3977 = vmatpush2.bf16.msra.mxu0 0
    %3978 = vmatprep.subr.bf16.mxu0 0
    %3979 = vmatpush2.bf16.msra.mxu0 0
    %3980 = vmatprep.subr.bf16.mxu0 0
    %3981 = vmatpush2.bf16.msra.mxu0 0
    %3982 = vmatprep.subr.bf16.mxu0 0
    %3983 = vmatpush2.bf16.msra.mxu0 0
    %3984 = vmatprep.subr.bf16.mxu0 0
    %3985 = vmatpush2.bf16.msra.mxu0 0
    %3986 = vmatprep.subr.bf16.mxu0 0
    %3987 = vmatpush2.bf16.msra.mxu0 0
    %3988 = vmatprep.subr.bf16.mxu0 0
    %3989 = vmatpush2.bf16.msra.mxu0 0
    %3990 = vmatprep.mubr.bf16.mxu0 0
    %3991 = vmatmul.mubr.bf16.gmra.mxu0 %v3626
    %v3992 = vpop.f32.mrf.mxu0
    %v3993 = vadd.f32 0.0, %v3992
    %v3994 = vpop.f32.mrf.mxu0
    %v3995 = vadd.f32 0.0, %v3994
    %v3996 = vpop.f32.mrf.mxu0
    %v3997 = vadd.f32 0.0, %v3996
    %v3998 = vpop.f32.mrf.mxu0
    %v3999 = vadd.f32 0.0, %v3998
    %4000 = vdwg.mxu0
    %4001 = vmatprep.subr.bf16.mxu0 %v3866
    %4002 = vmatpush1.bf16.msra.mxu0 %v3865
    %4003 = vmatprep.subr.bf16.mxu0 %v3860
    %4004 = vmatpush1.bf16.msra.mxu0 %v3859
    %4005 = vmatprep.subr.bf16.mxu0 %v3854
    %4006 = vmatpush1.bf16.msra.mxu0 %v3853
    %4007 = vmatprep.subr.bf16.mxu0 %v3848
    %4008 = vmatpush1.bf16.msra.mxu0 %v3847
    %4009 = vmatprep.subr.bf16.mxu0 %v3842
    %4010 = vmatpush1.bf16.msra.mxu0 %v3841
    %4011 = vmatprep.subr.bf16.mxu0 %v3836
    %4012 = vmatpush1.bf16.msra.mxu0 %v3835
    %4013 = vmatprep.subr.bf16.mxu0 %v3830
    %4014 = vmatpush1.bf16.msra.mxu0 %v3829
    %4015 = vmatprep.subr.bf16.mxu0 %v3824
    %4016 = vmatpush1.bf16.msra.mxu0 %v3823
    %4017 = vmatprep.subr.bf16.mxu0 0
    %4018 = vmatpush2.bf16.msra.mxu0 0
    %4019 = vmatprep.subr.bf16.mxu0 0
    %4020 = vmatpush2.bf16.msra.mxu0 0
    %4021 = vmatprep.subr.bf16.mxu0 0
    %4022 = vmatpush2.bf16.msra.mxu0 0
    %4023 = vmatprep.subr.bf16.mxu0 0
    %4024 = vmatpush2.bf16.msra.mxu0 0
    %4025 = vmatprep.subr.bf16.mxu0 0
    %4026 = vmatpush2.bf16.msra.mxu0 0
    %4027 = vmatprep.subr.bf16.mxu0 0
    %4028 = vmatpush2.bf16.msra.mxu0 0
    %4029 = vmatprep.subr.bf16.mxu0 0
    %4030 = vmatpush2.bf16.msra.mxu0 0
    %4031 = vmatprep.subr.bf16.mxu0 0
    %4032 = vmatpush2.bf16.msra.mxu0 0
    %4033 = vmatprep.mubr.bf16.mxu0 0
    %4034 = vmatmul.mubr.bf16.gmra.mxu0 %v3626
    %v4035 = vpop.f32.mrf.mxu0
    %v4036 = vadd.f32 0.0, %v4035
    %v4037 = vpop.f32.mrf.mxu0
    %v4038 = vadd.f32 0.0, %v4037
    %v4039 = vpop.f32.mrf.mxu0
    %v4040 = vadd.f32 0.0, %v4039
    %v4041 = vpop.f32.mrf.mxu0
    %v4042 = vadd.f32 0.0, %v4041
    %4043 = vdwg.mxu0
    %v4053 = vunpack.c.l.b16 %v3617
    %v4054 = vunpack.c.h.b16 %v3617
    %v4055 = vunpack.c.l.b16 %v3618
    %v4056 = vunpack.c.h.b16 %v3618
    %v4057 = vunpack.c.l.b16 %v3619
    %v4058 = vunpack.c.h.b16 %v3619
    %v4059 = vunpack.c.l.b16 %v3620
    %v4060 = vunpack.c.h.b16 %v3620
    %v4061 = vunpack.c.l.b16 %v3621
    %v4062 = vunpack.c.h.b16 %v3621
    %v4063 = vunpack.c.l.b16 %v3622
    %v4064 = vunpack.c.h.b16 %v3622
    %v4065 = vunpack.c.l.b16 %v3623
    %v4066 = vunpack.c.h.b16 %v3623
    %v4067 = vunpack.c.l.b16 %v3624
    %v4068 = vunpack.c.h.b16 %v3624
    %v4069 = vunpack.c.l.b16 %v3625
    %v4070 = vunpack.c.h.b16 %v3625
    %v4071 = vpack.c.b16 %v4059, %v4053
    %v4072 = vpack.c.b16 %v4060, %v4054
    %v4073 = vpack.c.b16 %v4061, %v4055
    %v4074 = vpack.c.b16 %v4062, %v4056
    %v4075 = vpack.c.b16 %v4063, %v4057
    %v4076 = vpack.c.b16 %v4064, %v4058
    %v4077 = vpack.c.b16 %v4065, %v4065
    %v4078 = vpack.c.b16 %v4066, %v4066
    %v4079 = vpack.c.b16 %v4067, %v4067
    %v4080 = vpack.c.b16 %v4068, %v4068
    %v4081 = vpack.c.b16 %v4069, %v4069
    %v4082 = vpack.c.b16 %v4070, %v4070
    %v4090 = vand.u32 %v4077, %v513
    %v4093 = vand.u32 %v4078, %v513
    %v4096 = vand.u32 %v4079, %v513
    %v4099 = vand.u32 %v4080, %v513
    %v4102 = vand.u32 %v4081, %v513
    %v4105 = vand.u32 %v4082, %v513
    %4107 = vmatprep.subr.bf16.mxu0 0
    %4108 = vmatpush1.bf16.msra.mxu0 0
    %4109 = vmatprep.subr.bf16.mxu0 0
    %4110 = vmatpush1.bf16.msra.mxu0 0
    %4111 = vmatprep.subr.bf16.mxu0 0
    %4112 = vmatpush1.bf16.msra.mxu0 0
    %4113 = vmatprep.subr.bf16.mxu0 0
    %4114 = vmatpush1.bf16.msra.mxu0 0
    %4115 = vmatprep.subr.bf16.mxu0 0
    %4116 = vmatpush1.bf16.msra.mxu0 0
    %4117 = vmatprep.subr.bf16.mxu0 0
    %4118 = vmatpush1.bf16.msra.mxu0 0
    %4119 = vmatprep.subr.bf16.mxu0 %v4093
    %4120 = vmatpush1.bf16.msra.mxu0 %v4090
    %4121 = vmatprep.subr.bf16.mxu0 %v4072
    %4122 = vmatpush1.bf16.msra.mxu0 %v4071
    %4123 = vmatprep.subr.bf16.mxu0 0
    %4124 = vmatpush2.bf16.msra.mxu0 0
    %4125 = vmatprep.subr.bf16.mxu0 0
    %4126 = vmatpush2.bf16.msra.mxu0 0
    %4127 = vmatprep.subr.bf16.mxu0 0
    %4128 = vmatpush2.bf16.msra.mxu0 0
    %4129 = vmatprep.subr.bf16.mxu0 0
    %4130 = vmatpush2.bf16.msra.mxu0 0
    %4131 = vmatprep.subr.bf16.mxu0 0
    %4132 = vmatpush2.bf16.msra.mxu0 0
    %4133 = vmatprep.subr.bf16.mxu0 0
    %4134 = vmatpush2.bf16.msra.mxu0 0
    %4135 = vmatprep.subr.bf16.mxu0 0
    %4136 = vmatpush2.bf16.msra.mxu0 0
    %4137 = vmatprep.subr.bf16.mxu0 0
    %4138 = vmatpush2.bf16.msra.mxu0 0
    %4139 = vmatprep.mubr.bf16.mxu0 0
    %4140 = vmatmul.mubr.bf16.gmra.mxu0 %v509
    %v4141 = vpop.f32.mrf.mxu0
    %v4142 = vadd.f32 %v3950, %v4141
    %v4143 = vpop.f32.mrf.mxu0
    %v4144 = vadd.f32 %v3952, %v4143
    %v4145 = vpop.f32.mrf.mxu0
    %v4146 = vadd.f32 %v3954, %v4145
    %v4147 = vpop.f32.mrf.mxu0
    %v4148 = vadd.f32 %v3956, %v4147
    %4149 = vdwg.mxu0
    %4150 = vmatprep.subr.bf16.mxu0 0
    %4151 = vmatpush1.bf16.msra.mxu0 0
    %4152 = vmatprep.subr.bf16.mxu0 0
    %4153 = vmatpush1.bf16.msra.mxu0 0
    %4154 = vmatprep.subr.bf16.mxu0 0
    %4155 = vmatpush1.bf16.msra.mxu0 0
    %4156 = vmatprep.subr.bf16.mxu0 0
    %4157 = vmatpush1.bf16.msra.mxu0 0
    %4158 = vmatprep.subr.bf16.mxu0 0
    %4159 = vmatpush1.bf16.msra.mxu0 0
    %4160 = vmatprep.subr.bf16.mxu0 0
    %4161 = vmatpush1.bf16.msra.mxu0 0
    %4162 = vmatprep.subr.bf16.mxu0 %v4099
    %4163 = vmatpush1.bf16.msra.mxu0 %v4096
    %4164 = vmatprep.subr.bf16.mxu0 %v4074
    %4165 = vmatpush1.bf16.msra.mxu0 %v4073
    %4166 = vmatprep.subr.bf16.mxu0 0
    %4167 = vmatpush2.bf16.msra.mxu0 0
    %4168 = vmatprep.subr.bf16.mxu0 0
    %4169 = vmatpush2.bf16.msra.mxu0 0
    %4170 = vmatprep.subr.bf16.mxu0 0
    %4171 = vmatpush2.bf16.msra.mxu0 0
    %4172 = vmatprep.subr.bf16.mxu0 0
    %4173 = vmatpush2.bf16.msra.mxu0 0
    %4174 = vmatprep.subr.bf16.mxu0 0
    %4175 = vmatpush2.bf16.msra.mxu0 0
    %4176 = vmatprep.subr.bf16.mxu0 0
    %4177 = vmatpush2.bf16.msra.mxu0 0
    %4178 = vmatprep.subr.bf16.mxu0 0
    %4179 = vmatpush2.bf16.msra.mxu0 0
    %4180 = vmatprep.subr.bf16.mxu0 0
    %4181 = vmatpush2.bf16.msra.mxu0 0
    %4182 = vmatprep.mubr.bf16.mxu0 0
    %4183 = vmatmul.mubr.bf16.gmra.mxu0 %v509
    %v4184 = vpop.f32.mrf.mxu0
    %v4185 = vadd.f32 %v3993, %v4184
    %v4186 = vpop.f32.mrf.mxu0
    %v4187 = vadd.f32 %v3995, %v4186
    %v4188 = vpop.f32.mrf.mxu0
    %v4189 = vadd.f32 %v3997, %v4188
    %v4190 = vpop.f32.mrf.mxu0
    %v4191 = vadd.f32 %v3999, %v4190
    %4192 = vdwg.mxu0
    %4193 = vmatprep.subr.bf16.mxu0 0
    %4194 = vmatpush1.bf16.msra.mxu0 0
    %4195 = vmatprep.subr.bf16.mxu0 0
    %4196 = vmatpush1.bf16.msra.mxu0 0
    %4197 = vmatprep.subr.bf16.mxu0 0
    %4198 = vmatpush1.bf16.msra.mxu0 0
    %4199 = vmatprep.subr.bf16.mxu0 0
    %4200 = vmatpush1.bf16.msra.mxu0 0
    %4201 = vmatprep.subr.bf16.mxu0 0
    %4202 = vmatpush1.bf16.msra.mxu0 0
    %4203 = vmatprep.subr.bf16.mxu0 0
    %4204 = vmatpush1.bf16.msra.mxu0 0
    %4205 = vmatprep.subr.bf16.mxu0 %v4105
    %4206 = vmatpush1.bf16.msra.mxu0 %v4102
    %4207 = vmatprep.subr.bf16.mxu0 %v4076
    %4208 = vmatpush1.bf16.msra.mxu0 %v4075
    %4209 = vmatprep.subr.bf16.mxu0 0
    %4210 = vmatpush2.bf16.msra.mxu0 0
    %4211 = vmatprep.subr.bf16.mxu0 0
    %4212 = vmatpush2.bf16.msra.mxu0 0
    %4213 = vmatprep.subr.bf16.mxu0 0
    %4214 = vmatpush2.bf16.msra.mxu0 0
    %4215 = vmatprep.subr.bf16.mxu0 0
    %4216 = vmatpush2.bf16.msra.mxu0 0
    %4217 = vmatprep.subr.bf16.mxu0 0
    %4218 = vmatpush2.bf16.msra.mxu0 0
    %4219 = vmatprep.subr.bf16.mxu0 0
    %4220 = vmatpush2.bf16.msra.mxu0 0
    %4221 = vmatprep.subr.bf16.mxu0 0
    %4222 = vmatpush2.bf16.msra.mxu0 0
    %4223 = vmatprep.subr.bf16.mxu0 0
    %4224 = vmatpush2.bf16.msra.mxu0 0
    %4225 = vmatprep.mubr.bf16.mxu0 0
    %4226 = vmatmul.mubr.bf16.gmra.mxu0 %v509
    %v4227 = vpop.f32.mrf.mxu0
    %v4228 = vadd.f32 %v4036, %v4227
    %v4229 = vpop.f32.mrf.mxu0
    %v4230 = vadd.f32 %v4038, %v4229
    %v4231 = vpop.f32.mrf.mxu0
    %v4232 = vadd.f32 %v4040, %v4231
    %v4233 = vpop.f32.mrf.mxu0
    %v4234 = vadd.f32 %v4042, %v4233
    %4235 = vdwg.mxu0
    %v4236 = vld [vmem:[#allocation22] sm:$0x3f]
    %v4238 = vlaneseq
    %v4239 = vshrl.u32 %v4238, 7
    %v4240 = vsub.s32 0, %v4239
    %v4241 = vrot.slane %v4236, %v4240
    %v4242 = vlaneseq
    %v4243 = vshrl.u32 %v4242, 7
    %v4244 = vsub.s32 1, %v4243
    %v4245 = vrot.slane %v4236, %v4244
    %v4246 = vlaneseq
    %v4247 = vshrl.u32 %v4246, 7
    %v4248 = vsub.s32 2, %v4247
    %v4249 = vrot.slane %v4236, %v4248
    %v4250 = vlaneseq
    %v4251 = vshrl.u32 %v4250, 7
    %v4252 = vsub.s32 3, %v4251
    %v4253 = vrot.slane %v4236, %v4252
    %v4254 = vlaneseq
    %v4255 = vshrl.u32 %v4254, 7
    %v4256 = vsub.s32 4, %v4255
    %v4257 = vrot.slane %v4236, %v4256
    %v4258 = vlaneseq
    %v4259 = vshrl.u32 %v4258, 7
    %v4260 = vsub.s32 5, %v4259
    %v4261 = vrot.slane %v4236, %v4260
    %v4268 = vadd.f32 %v4142, %v4241
    %v4269 = vadd.f32 %v4144, %v4245
    %v4270 = vadd.f32 %v4185, %v4249
    %v4271 = vadd.f32 %v4187, %v4253
    %v4272 = vadd.f32 %v4228, %v4257
    %v4273 = vadd.f32 %v4230, %v4261
    %v4274 = vadd.f32 %v4146, %v4241
    %v4275 = vadd.f32 %v4148, %v4245
    %v4276 = vadd.f32 %v4189, %v4249
    %v4277 = vadd.f32 %v4191, %v4253
    %v4278 = vadd.f32 %v4232, %v4257
    %v4279 = vadd.f32 %v4234, %v4261
    %v4280 = vmax.f32 %v4268, 0.0
    %v4281 = vmax.f32 %v4269, 0.0
    %v4282 = vmax.f32 %v4270, 0.0
    %v4283 = vmax.f32 %v4271, 0.0
    %v4284 = vmax.f32 %v4272, 0.0
    %v4285 = vmax.f32 %v4273, 0.0
    %v4286 = vmax.f32 %v4274, 0.0
    %v4287 = vmax.f32 %v4275, 0.0
    %v4288 = vmax.f32 %v4276, 0.0
    %v4289 = vmax.f32 %v4277, 0.0
    %v4290 = vmax.f32 %v4278, 0.0
    %v4291 = vmax.f32 %v4279, 0.0
    %v4292 = vpack.c.bf16 %v4286, %v4280
    %v4293 = vpack.c.bf16 %v4287, %v4281
    %v4294 = vpack.c.bf16 %v4288, %v4282
    %v4295 = vpack.c.bf16 %v4289, %v4283
    %v4296 = vpack.c.bf16 %v4290, %v4284
    %v4297 = vpack.c.bf16 %v4291, %v4285
    %v4298 = vld [vmem:[#allocation23] sm:$0xff]
    %v4299 = vld [vmem:[#allocation23 + $0x8] sm:$0xff]
    %v4300 = vld [vmem:[#allocation23 + $0x10] sm:$0xff]
    %v4301 = vld [vmem:[#allocation23 + $0x18] sm:$0xff]
    %v4302 = vld [vmem:[#allocation23 + $0x20] sm:$0xff]
    %v4303 = vld [vmem:[#allocation23 + $0x28] sm:$0xff]
    %v4304 = vld [vmem:[#allocation23 + $0x30] sm:$0xff]
    %v4305 = vld [vmem:[#allocation23 + $0x38] sm:$0xff]
    %v4306 = vld [vmem:[#allocation23 + $0x40] sm:$0xff]
    %v4307 = vld [vmem:[#allocation23 + $0x48] sm:$0xff]
    %v4308 = vld [vmem:[#allocation23 + $0x50] sm:$0xff]
    %v4309 = vld [vmem:[#allocation23 + $0x58] sm:$0xff]
    %v4310 = vld [vmem:[#allocation23 + $0x60] sm:$0xff]
    %v4311 = vld [vmem:[#allocation23 + $0x68] sm:$0xff]
    %v4312 = vld [vmem:[#allocation23 + $0x70] sm:$0xff]
    %v4313 = vld [vmem:[#allocation23 + $0x78] sm:$0xff]
    %v4314 = vld [vmem:[#allocation23 + $0x80] sm:$0xff]
    %v4315 = vld [vmem:[#allocation23 + $0x88] sm:$0xff]
    %v4316 = vld [vmem:[#allocation23 + $0x90] sm:$0xff]
    %v4317 = vld [vmem:[#allocation23 + $0x98] sm:$0xff]
    %v4318 = vld [vmem:[#allocation23 + $0xa0] sm:$0xff]
    %v4319 = vld [vmem:[#allocation23 + $0xa8] sm:$0xff]
    %v4320 = vld [vmem:[#allocation23 + $0xb0] sm:$0xff]
    %v4321 = vld [vmem:[#allocation23 + $0xb8] sm:$0xff]
    %v4322 = vld [vmem:[#allocation23 + $0xc0] sm:$0xff]
    %v4323 = vld [vmem:[#allocation23 + $0xc8] sm:$0xff]
    %v4324 = vld [vmem:[#allocation23 + $0xd0] sm:$0xff]
    %v4325 = vld [vmem:[#allocation23 + $0xd8] sm:$0xff]
    %v4326 = vld [vmem:[#allocation23 + $0xe0] sm:$0xff]
    %v4327 = vld [vmem:[#allocation23 + $0xe8] sm:$0xff]
    %v4328 = vld [vmem:[#allocation23 + $0xf0] sm:$0xff]
    %v4329 = vld [vmem:[#allocation23 + $0xf8] sm:$0xff]
    %v4330 = vld [vmem:[#allocation23 + $0x100] sm:$0xff]
    %v4331 = vld [vmem:[#allocation23 + $0x108] sm:$0xff]
    %v4332 = vld [vmem:[#allocation23 + $0x110] sm:$0xff]
    %v4333 = vld [vmem:[#allocation23 + $0x118] sm:$0xff]
    %v4334 = vld [vmem:[#allocation23 + $0x120] sm:$0xff]
    %v4335 = vld [vmem:[#allocation23 + $0x128] sm:$0xff]
    %v4336 = vld [vmem:[#allocation23 + $0x130] sm:$0xff]
    %v4337 = vld [vmem:[#allocation23 + $0x138] sm:$0xff]
    %v4338 = vld [vmem:[#allocation23 + $0x140] sm:$0xff]
    %v4339 = vld [vmem:[#allocation23 + $0x148] sm:$0xff]
    %v4340 = vld [vmem:[#allocation23 + $0x150] sm:$0xff]
    %v4341 = vld [vmem:[#allocation23 + $0x158] sm:$0xff]
    %v4342 = vld [vmem:[#allocation23 + $0x160] sm:$0xff]
    %v4343 = vld [vmem:[#allocation23 + $0x168] sm:$0xff]
    %v4344 = vld [vmem:[#allocation23 + $0x170] sm:$0xff]
    %v4345 = vld [vmem:[#allocation23 + $0x178] sm:$0xff]
    %v4346 = vld [vmem:[#allocation23 + $0x180] sm:$0xff]
    %v4347 = vld [vmem:[#allocation23 + $0x188] sm:$0xff]
    %v4348 = vld [vmem:[#allocation23 + $0x190] sm:$0xff]
    %v4349 = vld [vmem:[#allocation23 + $0x198] sm:$0xff]
    %v4350 = vld [vmem:[#allocation23 + $0x1a0] sm:$0xff]
    %v4351 = vld [vmem:[#allocation23 + $0x1a8] sm:$0xff]
    %v4352 = vld [vmem:[#allocation23 + $0x1b0] sm:$0xff]
    %v4353 = vld [vmem:[#allocation23 + $0x1b8] sm:$0xff]
    %v4354 = vld [vmem:[#allocation23 + $0x1c0] sm:$0xff]
    %v4355 = vld [vmem:[#allocation23 + $0x1c8] sm:$0xff]
    %v4356 = vld [vmem:[#allocation23 + $0x1d0] sm:$0xff]
    %v4357 = vld [vmem:[#allocation23 + $0x1d8] sm:$0xff]
    %v4358 = vld [vmem:[#allocation23 + $0x1e0] sm:$0xff]
    %v4359 = vld [vmem:[#allocation23 + $0x1e8] sm:$0xff]
    %v4360 = vld [vmem:[#allocation23 + $0x1f0] sm:$0xff]
    %v4361 = vld [vmem:[#allocation23 + $0x1f8] sm:$0xff]
    %v4362 = vld [vmem:[#allocation23 + $0x200] sm:$0xff]
    %v4363 = vld [vmem:[#allocation23 + $0x208] sm:$0xff]
    %v4364 = vld [vmem:[#allocation23 + $0x210] sm:$0xff]
    %v4365 = vld [vmem:[#allocation23 + $0x218] sm:$0xff]
    %v4366 = vld [vmem:[#allocation23 + $0x220] sm:$0xff]
    %v4367 = vld [vmem:[#allocation23 + $0x228] sm:$0xff]
    %v4368 = vld [vmem:[#allocation23 + $0x230] sm:$0xff]
    %v4369 = vld [vmem:[#allocation23 + $0x238] sm:$0xff]
    %v4370 = vld [vmem:[#allocation23 + $0x240] sm:$0xff]
    %v4371 = vld [vmem:[#allocation23 + $0x248] sm:$0xff]
    %v4372 = vld [vmem:[#allocation23 + $0x250] sm:$0xff]
    %v4373 = vld [vmem:[#allocation23 + $0x258] sm:$0xff]
    %v4374 = vld [vmem:[#allocation23 + $0x260] sm:$0xff]
    %v4375 = vld [vmem:[#allocation23 + $0x268] sm:$0xff]
    %v4376 = vld [vmem:[#allocation23 + $0x270] sm:$0xff]
    %v4377 = vld [vmem:[#allocation23 + $0x278] sm:$0xff]
    %v4378 = vld [vmem:[#allocation23 + $0x280] sm:$0xff]
    %v4379 = vld [vmem:[#allocation23 + $0x288] sm:$0xff]
    %v4380 = vld [vmem:[#allocation23 + $0x290] sm:$0xff]
    %v4381 = vld [vmem:[#allocation23 + $0x298] sm:$0xff]
    %v4382 = vld [vmem:[#allocation23 + $0x2a0] sm:$0xff]
    %v4383 = vld [vmem:[#allocation23 + $0x2a8] sm:$0xff]
    %v4384 = vld [vmem:[#allocation23 + $0x2b0] sm:$0xff]
    %v4385 = vld [vmem:[#allocation23 + $0x2b8] sm:$0xff]
    %v4386 = vld [vmem:[#allocation23 + $0x2c0] sm:$0xff]
    %v4387 = vld [vmem:[#allocation23 + $0x2c8] sm:$0xff]
    %v4388 = vld [vmem:[#allocation23 + $0x2d0] sm:$0xff]
    %v4389 = vld [vmem:[#allocation23 + $0x2d8] sm:$0xff]
    %v4390 = vld [vmem:[#allocation23 + $0x2e0] sm:$0xff]
    %v4391 = vld [vmem:[#allocation23 + $0x2e8] sm:$0xff]
    %v4392 = vld [vmem:[#allocation23 + $0x2f0] sm:$0xff]
    %v4393 = vld [vmem:[#allocation23 + $0x2f8] sm:$0xff]
    %v4394 = vld [vmem:[#allocation23 + $0x300] sm:$0xff]
    %v4395 = vld [vmem:[#allocation23 + $0x308] sm:$0xff]
    %v4396 = vld [vmem:[#allocation23 + $0x310] sm:$0xff]
    %v4397 = vld [vmem:[#allocation23 + $0x318] sm:$0xff]
    %v4398 = vld [vmem:[#allocation23 + $0x320] sm:$0xff]
    %v4399 = vld [vmem:[#allocation23 + $0x328] sm:$0xff]
    %v4400 = vld [vmem:[#allocation23 + $0x330] sm:$0xff]
    %v4401 = vld [vmem:[#allocation23 + $0x338] sm:$0xff]
    %v4402 = vld [vmem:[#allocation23 + $0x340] sm:$0xff]
    %v4403 = vld [vmem:[#allocation23 + $0x348] sm:$0xff]
    %v4404 = vld [vmem:[#allocation23 + $0x350] sm:$0xff]
    %v4405 = vld [vmem:[#allocation23 + $0x358] sm:$0xff]
    %v4406 = vld [vmem:[#allocation23 + $0x360] sm:$0xff]
    %v4407 = vld [vmem:[#allocation23 + $0x368] sm:$0xff]
    %v4408 = vld [vmem:[#allocation23 + $0x370] sm:$0xff]
    %v4409 = vld [vmem:[#allocation23 + $0x378] sm:$0xff]
    %v4410 = vld [vmem:[#allocation23 + $0x380] sm:$0xff]
    %v4411 = vld [vmem:[#allocation23 + $0x388] sm:$0xff]
    %v4412 = vld [vmem:[#allocation23 + $0x390] sm:$0xff]
    %v4413 = vld [vmem:[#allocation23 + $0x398] sm:$0xff]
    %v4414 = vld [vmem:[#allocation23 + $0x3a0] sm:$0xff]
    %v4415 = vld [vmem:[#allocation23 + $0x3a8] sm:$0xff]
    %v4416 = vld [vmem:[#allocation23 + $0x3b0] sm:$0xff]
    %v4417 = vld [vmem:[#allocation23 + $0x3b8] sm:$0xff]
    %v4418 = vld [vmem:[#allocation23 + $0x3c0] sm:$0xff]
    %v4419 = vld [vmem:[#allocation23 + $0x3c8] sm:$0xff]
    %v4420 = vld [vmem:[#allocation23 + $0x3d0] sm:$0xff]
    %v4421 = vld [vmem:[#allocation23 + $0x3d8] sm:$0xff]
    %v4422 = vld [vmem:[#allocation23 + $0x3e0] sm:$0xff]
    %v4423 = vld [vmem:[#allocation23 + $0x3e8] sm:$0xff]
    %v4424 = vld [vmem:[#allocation23 + $0x3f0] sm:$0xff]
    %v4425 = vld [vmem:[#allocation23 + $0x3f8] sm:$0xff]
    %v4426 = vld [vmem:[#allocation23 + $0x400] sm:$0xff]
    %v4427 = vld [vmem:[#allocation23 + $0x408] sm:$0xff]
    %v4428 = vld [vmem:[#allocation23 + $0x410] sm:$0xff]
    %v4429 = vld [vmem:[#allocation23 + $0x418] sm:$0xff]
    %v4430 = vld [vmem:[#allocation23 + $0x420] sm:$0xff]
    %v4431 = vld [vmem:[#allocation23 + $0x428] sm:$0xff]
    %v4432 = vld [vmem:[#allocation23 + $0x430] sm:$0xff]
    %v4433 = vld [vmem:[#allocation23 + $0x438] sm:$0xff]
    %v4434 = vld [vmem:[#allocation23 + $0x440] sm:$0xff]
    %v4435 = vld [vmem:[#allocation23 + $0x448] sm:$0xff]
    %v4436 = vld [vmem:[#allocation23 + $0x450] sm:$0xff]
    %v4437 = vld [vmem:[#allocation23 + $0x458] sm:$0xff]
    %v4438 = vld [vmem:[#allocation23 + $0x460] sm:$0xff]
    %v4439 = vld [vmem:[#allocation23 + $0x468] sm:$0xff]
    %v4440 = vld [vmem:[#allocation23 + $0x470] sm:$0xff]
    %v4441 = vld [vmem:[#allocation23 + $0x478] sm:$0xff]
    %v4442 = vld [vmem:[#allocation23 + $0x480] sm:$0xff]
    %v4443 = vld [vmem:[#allocation23 + $0x488] sm:$0xff]
    %v4444 = vld [vmem:[#allocation23 + $0x490] sm:$0xff]
    %v4445 = vld [vmem:[#allocation23 + $0x498] sm:$0xff]
    %v4446 = vld [vmem:[#allocation23 + $0x4a0] sm:$0xff]
    %v4447 = vld [vmem:[#allocation23 + $0x4a8] sm:$0xff]
    %v4448 = vld [vmem:[#allocation23 + $0x4b0] sm:$0xff]
    %v4449 = vld [vmem:[#allocation23 + $0x4b8] sm:$0xff]
    %v4450 = vld [vmem:[#allocation23 + $0x4c0] sm:$0xff]
    %v4451 = vld [vmem:[#allocation23 + $0x4c8] sm:$0xff]
    %v4452 = vld [vmem:[#allocation23 + $0x4d0] sm:$0xff]
    %v4453 = vld [vmem:[#allocation23 + $0x4d8] sm:$0xff]
    %v4454 = vld [vmem:[#allocation23 + $0x4e0] sm:$0xff]
    %v4455 = vld [vmem:[#allocation23 + $0x4e8] sm:$0xff]
    %v4456 = vld [vmem:[#allocation23 + $0x4f0] sm:$0xff]
    %v4457 = vld [vmem:[#allocation23 + $0x4f8] sm:$0xff]
    %v4458 = vld [vmem:[#allocation23 + $0x500] sm:$0xff]
    %v4459 = vld [vmem:[#allocation23 + $0x508] sm:$0xff]
    %v4460 = vld [vmem:[#allocation23 + $0x510] sm:$0xff]
    %v4461 = vld [vmem:[#allocation23 + $0x518] sm:$0xff]
    %v4462 = vld [vmem:[#allocation23 + $0x520] sm:$0xff]
    %v4463 = vld [vmem:[#allocation23 + $0x528] sm:$0xff]
    %v4464 = vld [vmem:[#allocation23 + $0x530] sm:$0xff]
    %v4465 = vld [vmem:[#allocation23 + $0x538] sm:$0xff]
    %v4466 = vld [vmem:[#allocation23 + $0x540] sm:$0xff]
    %v4467 = vld [vmem:[#allocation23 + $0x548] sm:$0xff]
    %v4468 = vld [vmem:[#allocation23 + $0x550] sm:$0xff]
    %v4469 = vld [vmem:[#allocation23 + $0x558] sm:$0xff]
    %v4470 = vld [vmem:[#allocation23 + $0x560] sm:$0xff]
    %v4471 = vld [vmem:[#allocation23 + $0x568] sm:$0xff]
    %v4472 = vld [vmem:[#allocation23 + $0x570] sm:$0xff]
    %v4473 = vld [vmem:[#allocation23 + $0x578] sm:$0xff]
    %v4474 = vld [vmem:[#allocation23 + $0x580] sm:$0xff]
    %v4475 = vld [vmem:[#allocation23 + $0x588] sm:$0xff]
    %v4476 = vld [vmem:[#allocation23 + $0x590] sm:$0xff]
    %v4477 = vld [vmem:[#allocation23 + $0x598] sm:$0xff]
    %v4478 = vld [vmem:[#allocation23 + $0x5a0] sm:$0xff]
    %v4479 = vld [vmem:[#allocation23 + $0x5a8] sm:$0xff]
    %v4480 = vld [vmem:[#allocation23 + $0x5b0] sm:$0xff]
    %v4481 = vld [vmem:[#allocation23 + $0x5b8] sm:$0xff]
    %v4482 = vld [vmem:[#allocation23 + $0x5c0] sm:$0xff]
    %v4483 = vld [vmem:[#allocation23 + $0x5c8] sm:$0xff]
    %v4484 = vld [vmem:[#allocation23 + $0x5d0] sm:$0xff]
    %v4485 = vld [vmem:[#allocation23 + $0x5d8] sm:$0xff]
    %v4486 = vld [vmem:[#allocation23 + $0x5e0] sm:$0xff]
    %v4487 = vld [vmem:[#allocation23 + $0x5e8] sm:$0xff]
    %v4488 = vld [vmem:[#allocation23 + $0x5f0] sm:$0xff]
    %v4489 = vld [vmem:[#allocation23 + $0x5f8] sm:$0xff]
    %v4490 = vld [vmem:[#allocation23 + $0x600] sm:$0xff]
    %v4491 = vld [vmem:[#allocation23 + $0x608] sm:$0xff]
    %v4492 = vld [vmem:[#allocation23 + $0x610] sm:$0xff]
    %v4493 = vld [vmem:[#allocation23 + $0x618] sm:$0xff]
    %v4494 = vld [vmem:[#allocation23 + $0x620] sm:$0xff]
    %v4495 = vld [vmem:[#allocation23 + $0x628] sm:$0xff]
    %v4496 = vld [vmem:[#allocation23 + $0x630] sm:$0xff]
    %v4497 = vld [vmem:[#allocation23 + $0x638] sm:$0xff]
    %v4498 = vld [vmem:[#allocation23 + $0x640] sm:$0xff]
    %v4499 = vld [vmem:[#allocation23 + $0x648] sm:$0xff]
    %v4500 = vld [vmem:[#allocation23 + $0x650] sm:$0xff]
    %v4501 = vld [vmem:[#allocation23 + $0x658] sm:$0xff]
    %v4502 = vld [vmem:[#allocation23 + $0x660] sm:$0xff]
    %v4503 = vld [vmem:[#allocation23 + $0x668] sm:$0xff]
    %v4504 = vld [vmem:[#allocation23 + $0x670] sm:$0xff]
    %v4505 = vld [vmem:[#allocation23 + $0x678] sm:$0xff]
    %v4506 = vld [vmem:[#allocation23 + $0x680] sm:$0xff]
    %v4507 = vld [vmem:[#allocation23 + $0x688] sm:$0xff]
    %v4508 = vld [vmem:[#allocation23 + $0x690] sm:$0xff]
    %v4509 = vld [vmem:[#allocation23 + $0x698] sm:$0xff]
    %v4510 = vld [vmem:[#allocation23 + $0x6a0] sm:$0xff]
    %v4511 = vld [vmem:[#allocation23 + $0x6a8] sm:$0xff]
    %v4512 = vld [vmem:[#allocation23 + $0x6b0] sm:$0xff]
    %v4513 = vld [vmem:[#allocation23 + $0x6b8] sm:$0xff]
    %v4514 = vld [vmem:[#allocation23 + $0x6c0] sm:$0xff]
    %v4515 = vld [vmem:[#allocation23 + $0x6c8] sm:$0xff]
    %v4516 = vld [vmem:[#allocation23 + $0x6d0] sm:$0xff]
    %v4517 = vld [vmem:[#allocation23 + $0x6d8] sm:$0xff]
    %v4518 = vld [vmem:[#allocation23 + $0x6e0] sm:$0xff]
    %v4519 = vld [vmem:[#allocation23 + $0x6e8] sm:$0xff]
    %v4520 = vld [vmem:[#allocation23 + $0x6f0] sm:$0xff]
    %v4521 = vld [vmem:[#allocation23 + $0x6f8] sm:$0xff]
    %v4522 = vld [vmem:[#allocation23 + $0x700] sm:$0xff]
    %v4523 = vld [vmem:[#allocation23 + $0x708] sm:$0xff]
    %v4524 = vld [vmem:[#allocation23 + $0x710] sm:$0xff]
    %v4525 = vld [vmem:[#allocation23 + $0x718] sm:$0xff]
    %v4526 = vld [vmem:[#allocation23 + $0x720] sm:$0xff]
    %v4527 = vld [vmem:[#allocation23 + $0x728] sm:$0xff]
    %v4528 = vld [vmem:[#allocation23 + $0x730] sm:$0xff]
    %v4529 = vld [vmem:[#allocation23 + $0x738] sm:$0xff]
    %v4530 = vld [vmem:[#allocation23 + $0x740] sm:$0xff]
    %v4531 = vld [vmem:[#allocation23 + $0x748] sm:$0xff]
    %v4532 = vld [vmem:[#allocation23 + $0x750] sm:$0xff]
    %v4533 = vld [vmem:[#allocation23 + $0x758] sm:$0xff]
    %v4534 = vld [vmem:[#allocation23 + $0x760] sm:$0xff]
    %v4535 = vld [vmem:[#allocation23 + $0x768] sm:$0xff]
    %v4536 = vld [vmem:[#allocation23 + $0x770] sm:$0xff]
    %v4537 = vld [vmem:[#allocation23 + $0x778] sm:$0xff]
    %v4538 = vld [vmem:[#allocation23 + $0x780] sm:$0xff]
    %v4539 = vld [vmem:[#allocation23 + $0x788] sm:$0xff]
    %v4540 = vld [vmem:[#allocation23 + $0x790] sm:$0xff]
    %v4541 = vld [vmem:[#allocation23 + $0x798] sm:$0xff]
    %v4542 = vld [vmem:[#allocation23 + $0x7a0] sm:$0xff]
    %v4543 = vld [vmem:[#allocation23 + $0x7a8] sm:$0xff]
    %v4544 = vld [vmem:[#allocation23 + $0x7b0] sm:$0xff]
    %v4545 = vld [vmem:[#allocation23 + $0x7b8] sm:$0xff]
    %v4546 = vld [vmem:[#allocation23 + $0x7c0] sm:$0xff]
    %v4547 = vld [vmem:[#allocation23 + $0x7c8] sm:$0xff]
    %v4548 = vld [vmem:[#allocation23 + $0x7d0] sm:$0xff]
    %v4549 = vld [vmem:[#allocation23 + $0x7d8] sm:$0xff]
    %v4550 = vld [vmem:[#allocation23 + $0x7e0] sm:$0xff]
    %v4551 = vld [vmem:[#allocation23 + $0x7e8] sm:$0xff]
    %v4552 = vld [vmem:[#allocation23 + $0x7f0] sm:$0xff]
    %v4553 = vld [vmem:[#allocation23 + $0x7f8] sm:$0xff]
    %v4554 = vld [vmem:[#allocation23 + $0x800] sm:$0xff]
    %v4555 = vld [vmem:[#allocation23 + $0x808] sm:$0xff]
    %v4556 = vld [vmem:[#allocation23 + $0x810] sm:$0xff]
    %v4557 = vld [vmem:[#allocation23 + $0x818] sm:$0xff]
    %v4558 = vld [vmem:[#allocation23 + $0x820] sm:$0xff]
    %v4559 = vld [vmem:[#allocation23 + $0x828] sm:$0xff]
    %v4560 = vld [vmem:[#allocation23 + $0x830] sm:$0xff]
    %v4561 = vld [vmem:[#allocation23 + $0x838] sm:$0xff]
    %v4562 = vld [vmem:[#allocation23 + $0x840] sm:$0xff]
    %v4563 = vld [vmem:[#allocation23 + $0x848] sm:$0xff]
    %v4564 = vld [vmem:[#allocation23 + $0x850] sm:$0xff]
    %v4565 = vld [vmem:[#allocation23 + $0x858] sm:$0xff]
    %v4566 = vld [vmem:[#allocation23 + $0x860] sm:$0xff]
    %v4567 = vld [vmem:[#allocation23 + $0x868] sm:$0xff]
    %v4568 = vld [vmem:[#allocation23 + $0x870] sm:$0xff]
    %v4569 = vld [vmem:[#allocation23 + $0x878] sm:$0xff]
    %v4570 = vld [vmem:[#allocation23 + $0x880] sm:$0xff]
    %v4571 = vld [vmem:[#allocation23 + $0x888] sm:$0xff]
    %v4572 = vld [vmem:[#allocation23 + $0x890] sm:$0xff]
    %v4573 = vld [vmem:[#allocation23 + $0x898] sm:$0xff]
    %v4574 = vld [vmem:[#allocation23 + $0x8a0] sm:$0xff]
    %v4575 = vld [vmem:[#allocation23 + $0x8a8] sm:$0xff]
    %v4576 = vld [vmem:[#allocation23 + $0x8b0] sm:$0xff]
    %v4577 = vld [vmem:[#allocation23 + $0x8b8] sm:$0xff]
    %v4578 = vld [vmem:[#allocation23 + $0x8c0] sm:$0xff]
    %v4579 = vld [vmem:[#allocation23 + $0x8c8] sm:$0xff]
    %v4580 = vld [vmem:[#allocation23 + $0x8d0] sm:$0xff]
    %v4581 = vld [vmem:[#allocation23 + $0x8d8] sm:$0xff]
    %v4582 = vld [vmem:[#allocation23 + $0x8e0] sm:$0xff]
    %v4583 = vld [vmem:[#allocation23 + $0x8e8] sm:$0xff]
    %v4584 = vld [vmem:[#allocation23 + $0x8f0] sm:$0xff]
    %v4585 = vld [vmem:[#allocation23 + $0x8f8] sm:$0xff]
    %v4586 = vld [vmem:[#allocation25] sm:$0x3f]
    %v4588 = vlaneseq
    %v4589 = vshrl.u32 %v4588, 7
    %v4590 = vsub.s32 0, %v4589
    %v4591 = vrot.slane %v4586, %v4590
    %v4592 = vlaneseq
    %v4593 = vshrl.u32 %v4592, 7
    %v4594 = vsub.s32 1, %v4593
    %v4595 = vrot.slane %v4586, %v4594
    %v4596 = vlaneseq
    %v4597 = vshrl.u32 %v4596, 7
    %v4598 = vsub.s32 2, %v4597
    %v4599 = vrot.slane %v4586, %v4598
    %v4600 = vlaneseq
    %v4601 = vshrl.u32 %v4600, 7
    %v4602 = vsub.s32 3, %v4601
    %v4603 = vrot.slane %v4586, %v4602
    %v4604 = vlaneseq
    %v4605 = vshrl.u32 %v4604, 7
    %v4606 = vsub.s32 4, %v4605
    %v4607 = vrot.slane %v4586, %v4606
    %v4608 = vlaneseq
    %v4609 = vshrl.u32 %v4608, 7
    %v4610 = vsub.s32 5, %v4609
    %v4611 = vrot.slane %v4586, %v4610
    %v4906 = vunpack.c.l.b16 %v4298
    %v4907 = vunpack.c.h.b16 %v4298
    %v4908 = vunpack.c.l.b16 %v4299
    %v4909 = vunpack.c.h.b16 %v4299
    %v4910 = vunpack.c.l.b16 %v4300
    %v4911 = vunpack.c.h.b16 %v4300
    %v4912 = vunpack.c.l.b16 %v4301
    %v4913 = vunpack.c.h.b16 %v4301
    %v4914 = vunpack.c.l.b16 %v4302
    %v4915 = vunpack.c.h.b16 %v4302
    %v4916 = vunpack.c.l.b16 %v4303
    %v4917 = vunpack.c.h.b16 %v4303
    %v4918 = vunpack.c.l.b16 %v4304
    %v4919 = vunpack.c.h.b16 %v4304
    %v4920 = vunpack.c.l.b16 %v4305
    %v4921 = vunpack.c.h.b16 %v4305
    %v4922 = vunpack.c.l.b16 %v4306
    %v4923 = vunpack.c.h.b16 %v4306
    %v4924 = vunpack.c.l.b16 %v4307
    %v4925 = vunpack.c.h.b16 %v4307
    %v4926 = vunpack.c.l.b16 %v4308
    %v4927 = vunpack.c.h.b16 %v4308
    %v4928 = vunpack.c.l.b16 %v4309
    %v4929 = vunpack.c.h.b16 %v4309
    %v4930 = vunpack.c.l.b16 %v4310
    %v4931 = vunpack.c.h.b16 %v4310
    %v4932 = vunpack.c.l.b16 %v4311
    %v4933 = vunpack.c.h.b16 %v4311
    %v4934 = vunpack.c.l.b16 %v4312
    %v4935 = vunpack.c.h.b16 %v4312
    %v4936 = vunpack.c.l.b16 %v4313
    %v4937 = vunpack.c.h.b16 %v4313
    %v4938 = vunpack.c.l.b16 %v4314
    %v4939 = vunpack.c.h.b16 %v4314
    %v4940 = vunpack.c.l.b16 %v4315
    %v4941 = vunpack.c.h.b16 %v4315
    %v4942 = vunpack.c.l.b16 %v4316
    %v4943 = vunpack.c.h.b16 %v4316
    %v4944 = vunpack.c.l.b16 %v4317
    %v4945 = vunpack.c.h.b16 %v4317
    %v4946 = vunpack.c.l.b16 %v4318
    %v4947 = vunpack.c.h.b16 %v4318
    %v4948 = vunpack.c.l.b16 %v4319
    %v4949 = vunpack.c.h.b16 %v4319
    %v4950 = vunpack.c.l.b16 %v4320
    %v4951 = vunpack.c.h.b16 %v4320
    %v4952 = vunpack.c.l.b16 %v4321
    %v4953 = vunpack.c.h.b16 %v4321
    %v4954 = vunpack.c.l.b16 %v4322
    %v4955 = vunpack.c.h.b16 %v4322
    %v4956 = vunpack.c.l.b16 %v4323
    %v4957 = vunpack.c.h.b16 %v4323
    %v4958 = vunpack.c.l.b16 %v4324
    %v4959 = vunpack.c.h.b16 %v4324
    %v4960 = vunpack.c.l.b16 %v4325
    %v4961 = vunpack.c.h.b16 %v4325
    %v4962 = vunpack.c.l.b16 %v4326
    %v4963 = vunpack.c.h.b16 %v4326
    %v4964 = vunpack.c.l.b16 %v4327
    %v4965 = vunpack.c.h.b16 %v4327
    %v4966 = vunpack.c.l.b16 %v4328
    %v4967 = vunpack.c.h.b16 %v4328
    %v4968 = vunpack.c.l.b16 %v4329
    %v4969 = vunpack.c.h.b16 %v4329
    %v4970 = vunpack.c.l.b16 %v4330
    %v4971 = vunpack.c.h.b16 %v4330
    %v4972 = vunpack.c.l.b16 %v4331
    %v4973 = vunpack.c.h.b16 %v4331
    %v4974 = vunpack.c.l.b16 %v4332
    %v4975 = vunpack.c.h.b16 %v4332
    %v4976 = vunpack.c.l.b16 %v4333
    %v4977 = vunpack.c.h.b16 %v4333
    %v4978 = vunpack.c.l.b16 %v4334
    %v4979 = vunpack.c.h.b16 %v4334
    %v4980 = vunpack.c.l.b16 %v4335
    %v4981 = vunpack.c.h.b16 %v4335
    %v4982 = vunpack.c.l.b16 %v4336
    %v4983 = vunpack.c.h.b16 %v4336
    %v4984 = vunpack.c.l.b16 %v4337
    %v4985 = vunpack.c.h.b16 %v4337
    %v4986 = vunpack.c.l.b16 %v4338
    %v4987 = vunpack.c.h.b16 %v4338
    %v4988 = vunpack.c.l.b16 %v4339
    %v4989 = vunpack.c.h.b16 %v4339
    %v4990 = vunpack.c.l.b16 %v4340
    %v4991 = vunpack.c.h.b16 %v4340
    %v4992 = vunpack.c.l.b16 %v4341
    %v4993 = vunpack.c.h.b16 %v4341
    %v4994 = vunpack.c.l.b16 %v4342
    %v4995 = vunpack.c.h.b16 %v4342
    %v4996 = vunpack.c.l.b16 %v4343
    %v4997 = vunpack.c.h.b16 %v4343
    %v4998 = vunpack.c.l.b16 %v4344
    %v4999 = vunpack.c.h.b16 %v4344
    %v5000 = vunpack.c.l.b16 %v4345
    %v5001 = vunpack.c.h.b16 %v4345
    %v5002 = vunpack.c.l.b16 %v4346
    %v5003 = vunpack.c.h.b16 %v4346
    %v5004 = vunpack.c.l.b16 %v4347
    %v5005 = vunpack.c.h.b16 %v4347
    %v5006 = vunpack.c.l.b16 %v4348
    %v5007 = vunpack.c.h.b16 %v4348
    %v5008 = vunpack.c.l.b16 %v4349
    %v5009 = vunpack.c.h.b16 %v4349
    %v5010 = vunpack.c.l.b16 %v4350
    %v5011 = vunpack.c.h.b16 %v4350
    %v5012 = vunpack.c.l.b16 %v4351
    %v5013 = vunpack.c.h.b16 %v4351
    %v5014 = vunpack.c.l.b16 %v4352
    %v5015 = vunpack.c.h.b16 %v4352
    %v5016 = vunpack.c.l.b16 %v4353
    %v5017 = vunpack.c.h.b16 %v4353
    %v5018 = vunpack.c.l.b16 %v4354
    %v5019 = vunpack.c.h.b16 %v4354
    %v5020 = vunpack.c.l.b16 %v4355
    %v5021 = vunpack.c.h.b16 %v4355
    %v5022 = vunpack.c.l.b16 %v4356
    %v5023 = vunpack.c.h.b16 %v4356
    %v5024 = vunpack.c.l.b16 %v4357
    %v5025 = vunpack.c.h.b16 %v4357
    %v5026 = vunpack.c.l.b16 %v4358
    %v5027 = vunpack.c.h.b16 %v4358
    %v5028 = vunpack.c.l.b16 %v4359
    %v5029 = vunpack.c.h.b16 %v4359
    %v5030 = vunpack.c.l.b16 %v4360
    %v5031 = vunpack.c.h.b16 %v4360
    %v5032 = vunpack.c.l.b16 %v4361
    %v5033 = vunpack.c.h.b16 %v4361
    %v5034 = vunpack.c.l.b16 %v4362
    %v5035 = vunpack.c.h.b16 %v4362
    %v5036 = vunpack.c.l.b16 %v4363
    %v5037 = vunpack.c.h.b16 %v4363
    %v5038 = vunpack.c.l.b16 %v4364
    %v5039 = vunpack.c.h.b16 %v4364
    %v5040 = vunpack.c.l.b16 %v4365
    %v5041 = vunpack.c.h.b16 %v4365
    %v5042 = vunpack.c.l.b16 %v4366
    %v5043 = vunpack.c.h.b16 %v4366
    %v5044 = vunpack.c.l.b16 %v4367
    %v5045 = vunpack.c.h.b16 %v4367
    %v5046 = vunpack.c.l.b16 %v4368
    %v5047 = vunpack.c.h.b16 %v4368
    %v5048 = vunpack.c.l.b16 %v4369
    %v5049 = vunpack.c.h.b16 %v4369
    %v5050 = vunpack.c.l.b16 %v4370
    %v5051 = vunpack.c.h.b16 %v4370
    %v5052 = vunpack.c.l.b16 %v4371
    %v5053 = vunpack.c.h.b16 %v4371
    %v5054 = vunpack.c.l.b16 %v4372
    %v5055 = vunpack.c.h.b16 %v4372
    %v5056 = vunpack.c.l.b16 %v4373
    %v5057 = vunpack.c.h.b16 %v4373
    %v5058 = vunpack.c.l.b16 %v4374
    %v5059 = vunpack.c.h.b16 %v4374
    %v5060 = vunpack.c.l.b16 %v4375
    %v5061 = vunpack.c.h.b16 %v4375
    %v5062 = vunpack.c.l.b16 %v4376
    %v5063 = vunpack.c.h.b16 %v4376
    %v5064 = vunpack.c.l.b16 %v4377
    %v5065 = vunpack.c.h.b16 %v4377
    %v5066 = vunpack.c.l.b16 %v4378
    %v5067 = vunpack.c.h.b16 %v4378
    %v5068 = vunpack.c.l.b16 %v4379
    %v5069 = vunpack.c.h.b16 %v4379
    %v5070 = vunpack.c.l.b16 %v4380
    %v5071 = vunpack.c.h.b16 %v4380
    %v5072 = vunpack.c.l.b16 %v4381
    %v5073 = vunpack.c.h.b16 %v4381
    %v5074 = vunpack.c.l.b16 %v4382
    %v5075 = vunpack.c.h.b16 %v4382
    %v5076 = vunpack.c.l.b16 %v4383
    %v5077 = vunpack.c.h.b16 %v4383
    %v5078 = vunpack.c.l.b16 %v4384
    %v5079 = vunpack.c.h.b16 %v4384
    %v5080 = vunpack.c.l.b16 %v4385
    %v5081 = vunpack.c.h.b16 %v4385
    %v5082 = vunpack.c.l.b16 %v4386
    %v5083 = vunpack.c.h.b16 %v4386
    %v5084 = vunpack.c.l.b16 %v4387
    %v5085 = vunpack.c.h.b16 %v4387
    %v5086 = vunpack.c.l.b16 %v4388
    %v5087 = vunpack.c.h.b16 %v4388
    %v5088 = vunpack.c.l.b16 %v4389
    %v5089 = vunpack.c.h.b16 %v4389
    %v5090 = vunpack.c.l.b16 %v4390
    %v5091 = vunpack.c.h.b16 %v4390
    %v5092 = vunpack.c.l.b16 %v4391
    %v5093 = vunpack.c.h.b16 %v4391
    %v5094 = vunpack.c.l.b16 %v4392
    %v5095 = vunpack.c.h.b16 %v4392
    %v5096 = vunpack.c.l.b16 %v4393
    %v5097 = vunpack.c.h.b16 %v4393
    %v5098 = vunpack.c.l.b16 %v4394
    %v5099 = vunpack.c.h.b16 %v4394
    %v5100 = vunpack.c.l.b16 %v4395
    %v5101 = vunpack.c.h.b16 %v4395
    %v5102 = vunpack.c.l.b16 %v4396
    %v5103 = vunpack.c.h.b16 %v4396
    %v5104 = vunpack.c.l.b16 %v4397
    %v5105 = vunpack.c.h.b16 %v4397
    %v5106 = vunpack.c.l.b16 %v4398
    %v5107 = vunpack.c.h.b16 %v4398
    %v5108 = vunpack.c.l.b16 %v4399
    %v5109 = vunpack.c.h.b16 %v4399
    %v5110 = vunpack.c.l.b16 %v4400
    %v5111 = vunpack.c.h.b16 %v4400
    %v5112 = vunpack.c.l.b16 %v4401
    %v5113 = vunpack.c.h.b16 %v4401
    %v5114 = vunpack.c.l.b16 %v4402
    %v5115 = vunpack.c.h.b16 %v4402
    %v5116 = vunpack.c.l.b16 %v4403
    %v5117 = vunpack.c.h.b16 %v4403
    %v5118 = vunpack.c.l.b16 %v4404
    %v5119 = vunpack.c.h.b16 %v4404
    %v5120 = vunpack.c.l.b16 %v4405
    %v5121 = vunpack.c.h.b16 %v4405
    %v5122 = vunpack.c.l.b16 %v4406
    %v5123 = vunpack.c.h.b16 %v4406
    %v5124 = vunpack.c.l.b16 %v4407
    %v5125 = vunpack.c.h.b16 %v4407
    %v5126 = vunpack.c.l.b16 %v4408
    %v5127 = vunpack.c.h.b16 %v4408
    %v5128 = vunpack.c.l.b16 %v4409
    %v5129 = vunpack.c.h.b16 %v4409
    %v5130 = vunpack.c.l.b16 %v4410
    %v5131 = vunpack.c.h.b16 %v4410
    %v5132 = vunpack.c.l.b16 %v4411
    %v5133 = vunpack.c.h.b16 %v4411
    %v5134 = vunpack.c.l.b16 %v4412
    %v5135 = vunpack.c.h.b16 %v4412
    %v5136 = vunpack.c.l.b16 %v4413
    %v5137 = vunpack.c.h.b16 %v4413
    %v5138 = vunpack.c.l.b16 %v4414
    %v5139 = vunpack.c.h.b16 %v4414
    %v5140 = vunpack.c.l.b16 %v4415
    %v5141 = vunpack.c.h.b16 %v4415
    %v5142 = vunpack.c.l.b16 %v4416
    %v5143 = vunpack.c.h.b16 %v4416
    %v5144 = vunpack.c.l.b16 %v4417
    %v5145 = vunpack.c.h.b16 %v4417
    %v5146 = vunpack.c.l.b16 %v4418
    %v5147 = vunpack.c.h.b16 %v4418
    %v5148 = vunpack.c.l.b16 %v4419
    %v5149 = vunpack.c.h.b16 %v4419
    %v5150 = vunpack.c.l.b16 %v4420
    %v5151 = vunpack.c.h.b16 %v4420
    %v5152 = vunpack.c.l.b16 %v4421
    %v5153 = vunpack.c.h.b16 %v4421
    %v5154 = vunpack.c.l.b16 %v4422
    %v5155 = vunpack.c.h.b16 %v4422
    %v5156 = vunpack.c.l.b16 %v4423
    %v5157 = vunpack.c.h.b16 %v4423
    %v5158 = vunpack.c.l.b16 %v4424
    %v5159 = vunpack.c.h.b16 %v4424
    %v5160 = vunpack.c.l.b16 %v4425
    %v5161 = vunpack.c.h.b16 %v4425
    %v5162 = vunpack.c.l.b16 %v4426
    %v5163 = vunpack.c.h.b16 %v4426
    %v5164 = vunpack.c.l.b16 %v4427
    %v5165 = vunpack.c.h.b16 %v4427
    %v5166 = vunpack.c.l.b16 %v4428
    %v5167 = vunpack.c.h.b16 %v4428
    %v5168 = vunpack.c.l.b16 %v4429
    %v5169 = vunpack.c.h.b16 %v4429
    %v5170 = vunpack.c.l.b16 %v4430
    %v5171 = vunpack.c.h.b16 %v4430
    %v5172 = vunpack.c.l.b16 %v4431
    %v5173 = vunpack.c.h.b16 %v4431
    %v5174 = vunpack.c.l.b16 %v4432
    %v5175 = vunpack.c.h.b16 %v4432
    %v5176 = vunpack.c.l.b16 %v4433
    %v5177 = vunpack.c.h.b16 %v4433
    %v5178 = vunpack.c.l.b16 %v4434
    %v5179 = vunpack.c.h.b16 %v4434
    %v5180 = vunpack.c.l.b16 %v4435
    %v5181 = vunpack.c.h.b16 %v4435
    %v5182 = vunpack.c.l.b16 %v4436
    %v5183 = vunpack.c.h.b16 %v4436
    %v5184 = vunpack.c.l.b16 %v4437
    %v5185 = vunpack.c.h.b16 %v4437
    %v5186 = vunpack.c.l.b16 %v4438
    %v5187 = vunpack.c.h.b16 %v4438
    %v5188 = vunpack.c.l.b16 %v4439
    %v5189 = vunpack.c.h.b16 %v4439
    %v5190 = vunpack.c.l.b16 %v4440
    %v5191 = vunpack.c.h.b16 %v4440
    %v5192 = vunpack.c.l.b16 %v4441
    %v5193 = vunpack.c.h.b16 %v4441
    %v5194 = vunpack.c.l.b16 %v4442
    %v5195 = vunpack.c.h.b16 %v4442
    %v5196 = vunpack.c.l.b16 %v4443
    %v5197 = vunpack.c.h.b16 %v4443
    %v5198 = vunpack.c.l.b16 %v4444
    %v5199 = vunpack.c.h.b16 %v4444
    %v5200 = vunpack.c.l.b16 %v4445
    %v5201 = vunpack.c.h.b16 %v4445
    %v5202 = vunpack.c.l.b16 %v4446
    %v5203 = vunpack.c.h.b16 %v4446
    %v5204 = vunpack.c.l.b16 %v4447
    %v5205 = vunpack.c.h.b16 %v4447
    %v5206 = vunpack.c.l.b16 %v4448
    %v5207 = vunpack.c.h.b16 %v4448
    %v5208 = vunpack.c.l.b16 %v4449
    %v5209 = vunpack.c.h.b16 %v4449
    %v5210 = vunpack.c.l.b16 %v4450
    %v5211 = vunpack.c.h.b16 %v4450
    %v5212 = vunpack.c.l.b16 %v4451
    %v5213 = vunpack.c.h.b16 %v4451
    %v5214 = vunpack.c.l.b16 %v4452
    %v5215 = vunpack.c.h.b16 %v4452
    %v5216 = vunpack.c.l.b16 %v4453
    %v5217 = vunpack.c.h.b16 %v4453
    %v5218 = vunpack.c.l.b16 %v4454
    %v5219 = vunpack.c.h.b16 %v4454
    %v5220 = vunpack.c.l.b16 %v4455
    %v5221 = vunpack.c.h.b16 %v4455
    %v5222 = vunpack.c.l.b16 %v4456
    %v5223 = vunpack.c.h.b16 %v4456
    %v5224 = vunpack.c.l.b16 %v4457
    %v5225 = vunpack.c.h.b16 %v4457
    %v5226 = vunpack.c.l.b16 %v4458
    %v5227 = vunpack.c.h.b16 %v4458
    %v5228 = vunpack.c.l.b16 %v4459
    %v5229 = vunpack.c.h.b16 %v4459
    %v5230 = vunpack.c.l.b16 %v4460
    %v5231 = vunpack.c.h.b16 %v4460
    %v5232 = vunpack.c.l.b16 %v4461
    %v5233 = vunpack.c.h.b16 %v4461
    %v5234 = vunpack.c.l.b16 %v4462
    %v5235 = vunpack.c.h.b16 %v4462
    %v5236 = vunpack.c.l.b16 %v4463
    %v5237 = vunpack.c.h.b16 %v4463
    %v5238 = vunpack.c.l.b16 %v4464
    %v5239 = vunpack.c.h.b16 %v4464
    %v5240 = vunpack.c.l.b16 %v4465
    %v5241 = vunpack.c.h.b16 %v4465
    %v5242 = vunpack.c.l.b16 %v4466
    %v5243 = vunpack.c.h.b16 %v4466
    %v5244 = vunpack.c.l.b16 %v4467
    %v5245 = vunpack.c.h.b16 %v4467
    %v5246 = vunpack.c.l.b16 %v4468
    %v5247 = vunpack.c.h.b16 %v4468
    %v5248 = vunpack.c.l.b16 %v4469
    %v5249 = vunpack.c.h.b16 %v4469
    %v5250 = vunpack.c.l.b16 %v4470
    %v5251 = vunpack.c.h.b16 %v4470
    %v5252 = vunpack.c.l.b16 %v4471
    %v5253 = vunpack.c.h.b16 %v4471
    %v5254 = vunpack.c.l.b16 %v4472
    %v5255 = vunpack.c.h.b16 %v4472
    %v5256 = vunpack.c.l.b16 %v4473
    %v5257 = vunpack.c.h.b16 %v4473
    %v5258 = vunpack.c.l.b16 %v4474
    %v5259 = vunpack.c.h.b16 %v4474
    %v5260 = vunpack.c.l.b16 %v4475
    %v5261 = vunpack.c.h.b16 %v4475
    %v5262 = vunpack.c.l.b16 %v4476
    %v5263 = vunpack.c.h.b16 %v4476
    %v5264 = vunpack.c.l.b16 %v4477
    %v5265 = vunpack.c.h.b16 %v4477
    %v5266 = vunpack.c.l.b16 %v4478
    %v5267 = vunpack.c.h.b16 %v4478
    %v5268 = vunpack.c.l.b16 %v4479
    %v5269 = vunpack.c.h.b16 %v4479
    %v5270 = vunpack.c.l.b16 %v4480
    %v5271 = vunpack.c.h.b16 %v4480
    %v5272 = vunpack.c.l.b16 %v4481
    %v5273 = vunpack.c.h.b16 %v4481
    %v5274 = vunpack.c.l.b16 %v4482
    %v5275 = vunpack.c.h.b16 %v4482
    %v5276 = vunpack.c.l.b16 %v4483
    %v5277 = vunpack.c.h.b16 %v4483
    %v5278 = vunpack.c.l.b16 %v4484
    %v5279 = vunpack.c.h.b16 %v4484
    %v5280 = vunpack.c.l.b16 %v4485
    %v5281 = vunpack.c.h.b16 %v4485
    %v5282 = vunpack.c.l.b16 %v4486
    %v5283 = vunpack.c.h.b16 %v4486
    %v5284 = vunpack.c.l.b16 %v4487
    %v5285 = vunpack.c.h.b16 %v4487
    %v5286 = vunpack.c.l.b16 %v4488
    %v5287 = vunpack.c.h.b16 %v4488
    %v5288 = vunpack.c.l.b16 %v4489
    %v5289 = vunpack.c.h.b16 %v4489
    %v5290 = vunpack.c.l.b16 %v4490
    %v5291 = vunpack.c.h.b16 %v4490
    %v5292 = vunpack.c.l.b16 %v4491
    %v5293 = vunpack.c.h.b16 %v4491
    %v5294 = vunpack.c.l.b16 %v4492
    %v5295 = vunpack.c.h.b16 %v4492
    %v5296 = vunpack.c.l.b16 %v4493
    %v5297 = vunpack.c.h.b16 %v4493
    %v5298 = vunpack.c.l.b16 %v4494
    %v5299 = vunpack.c.h.b16 %v4494
    %v5300 = vunpack.c.l.b16 %v4495
    %v5301 = vunpack.c.h.b16 %v4495
    %v5302 = vunpack.c.l.b16 %v4496
    %v5303 = vunpack.c.h.b16 %v4496
    %v5304 = vunpack.c.l.b16 %v4497
    %v5305 = vunpack.c.h.b16 %v4497
    %v5306 = vunpack.c.l.b16 %v4498
    %v5307 = vunpack.c.h.b16 %v4498
    %v5308 = vunpack.c.l.b16 %v4499
    %v5309 = vunpack.c.h.b16 %v4499
    %v5310 = vunpack.c.l.b16 %v4500
    %v5311 = vunpack.c.h.b16 %v4500
    %v5312 = vunpack.c.l.b16 %v4501
    %v5313 = vunpack.c.h.b16 %v4501
    %v5314 = vunpack.c.l.b16 %v4502
    %v5315 = vunpack.c.h.b16 %v4502
    %v5316 = vunpack.c.l.b16 %v4503
    %v5317 = vunpack.c.h.b16 %v4503
    %v5318 = vunpack.c.l.b16 %v4504
    %v5319 = vunpack.c.h.b16 %v4504
    %v5320 = vunpack.c.l.b16 %v4505
    %v5321 = vunpack.c.h.b16 %v4505
    %v5322 = vunpack.c.l.b16 %v4506
    %v5323 = vunpack.c.h.b16 %v4506
    %v5324 = vunpack.c.l.b16 %v4507
    %v5325 = vunpack.c.h.b16 %v4507
    %v5326 = vunpack.c.l.b16 %v4508
    %v5327 = vunpack.c.h.b16 %v4508
    %v5328 = vunpack.c.l.b16 %v4509
    %v5329 = vunpack.c.h.b16 %v4509
    %v5330 = vunpack.c.l.b16 %v4510
    %v5331 = vunpack.c.h.b16 %v4510
    %v5332 = vunpack.c.l.b16 %v4511
    %v5333 = vunpack.c.h.b16 %v4511
    %v5334 = vunpack.c.l.b16 %v4512
    %v5335 = vunpack.c.h.b16 %v4512
    %v5336 = vunpack.c.l.b16 %v4513
    %v5337 = vunpack.c.h.b16 %v4513
    %v5338 = vunpack.c.l.b16 %v4514
    %v5339 = vunpack.c.h.b16 %v4514
    %v5340 = vunpack.c.l.b16 %v4515
    %v5341 = vunpack.c.h.b16 %v4515
    %v5342 = vunpack.c.l.b16 %v4516
    %v5343 = vunpack.c.h.b16 %v4516
    %v5344 = vunpack.c.l.b16 %v4517
    %v5345 = vunpack.c.h.b16 %v4517
    %v5346 = vunpack.c.l.b16 %v4518
    %v5347 = vunpack.c.h.b16 %v4518
    %v5348 = vunpack.c.l.b16 %v4519
    %v5349 = vunpack.c.h.b16 %v4519
    %v5350 = vunpack.c.l.b16 %v4520
    %v5351 = vunpack.c.h.b16 %v4520
    %v5352 = vunpack.c.l.b16 %v4521
    %v5353 = vunpack.c.h.b16 %v4521
    %v5354 = vunpack.c.l.b16 %v4522
    %v5355 = vunpack.c.h.b16 %v4522
    %v5356 = vunpack.c.l.b16 %v4523
    %v5357 = vunpack.c.h.b16 %v4523
    %v5358 = vunpack.c.l.b16 %v4524
    %v5359 = vunpack.c.h.b16 %v4524
    %v5360 = vunpack.c.l.b16 %v4525
    %v5361 = vunpack.c.h.b16 %v4525
    %v5362 = vunpack.c.l.b16 %v4526
    %v5363 = vunpack.c.h.b16 %v4526
    %v5364 = vunpack.c.l.b16 %v4527
    %v5365 = vunpack.c.h.b16 %v4527
    %v5366 = vunpack.c.l.b16 %v4528
    %v5367 = vunpack.c.h.b16 %v4528
    %v5368 = vunpack.c.l.b16 %v4529
    %v5369 = vunpack.c.h.b16 %v4529
    %v5370 = vunpack.c.l.b16 %v4530
    %v5371 = vunpack.c.h.b16 %v4530
    %v5372 = vunpack.c.l.b16 %v4531
    %v5373 = vunpack.c.h.b16 %v4531
    %v5374 = vunpack.c.l.b16 %v4532
    %v5375 = vunpack.c.h.b16 %v4532
    %v5376 = vunpack.c.l.b16 %v4533
    %v5377 = vunpack.c.h.b16 %v4533
    %v5378 = vunpack.c.l.b16 %v4534
    %v5379 = vunpack.c.h.b16 %v4534
    %v5380 = vunpack.c.l.b16 %v4535
    %v5381 = vunpack.c.h.b16 %v4535
    %v5382 = vunpack.c.l.b16 %v4536
    %v5383 = vunpack.c.h.b16 %v4536
    %v5384 = vunpack.c.l.b16 %v4537
    %v5385 = vunpack.c.h.b16 %v4537
    %v5386 = vunpack.c.l.b16 %v4538
    %v5387 = vunpack.c.h.b16 %v4538
    %v5388 = vunpack.c.l.b16 %v4539
    %v5389 = vunpack.c.h.b16 %v4539
    %v5390 = vunpack.c.l.b16 %v4540
    %v5391 = vunpack.c.h.b16 %v4540
    %v5392 = vunpack.c.l.b16 %v4541
    %v5393 = vunpack.c.h.b16 %v4541
    %v5394 = vunpack.c.l.b16 %v4542
    %v5395 = vunpack.c.h.b16 %v4542
    %v5396 = vunpack.c.l.b16 %v4543
    %v5397 = vunpack.c.h.b16 %v4543
    %v5398 = vunpack.c.l.b16 %v4544
    %v5399 = vunpack.c.h.b16 %v4544
    %v5400 = vunpack.c.l.b16 %v4545
    %v5401 = vunpack.c.h.b16 %v4545
    %v5402 = vunpack.c.l.b16 %v4546
    %v5403 = vunpack.c.h.b16 %v4546
    %v5404 = vunpack.c.l.b16 %v4547
    %v5405 = vunpack.c.h.b16 %v4547
    %v5406 = vunpack.c.l.b16 %v4548
    %v5407 = vunpack.c.h.b16 %v4548
    %v5408 = vunpack.c.l.b16 %v4549
    %v5409 = vunpack.c.h.b16 %v4549
    %v5410 = vunpack.c.l.b16 %v4550
    %v5411 = vunpack.c.h.b16 %v4550
    %v5412 = vunpack.c.l.b16 %v4551
    %v5413 = vunpack.c.h.b16 %v4551
    %v5414 = vunpack.c.l.b16 %v4552
    %v5415 = vunpack.c.h.b16 %v4552
    %v5416 = vunpack.c.l.b16 %v4553
    %v5417 = vunpack.c.h.b16 %v4553
    %v5418 = vunpack.c.l.b16 %v4554
    %v5419 = vunpack.c.h.b16 %v4554
    %v5420 = vunpack.c.l.b16 %v4555
    %v5421 = vunpack.c.h.b16 %v4555
    %v5422 = vunpack.c.l.b16 %v4556
    %v5423 = vunpack.c.h.b16 %v4556
    %v5424 = vunpack.c.l.b16 %v4557
    %v5425 = vunpack.c.h.b16 %v4557
    %v5426 = vunpack.c.l.b16 %v4558
    %v5427 = vunpack.c.h.b16 %v4558
    %v5428 = vunpack.c.l.b16 %v4559
    %v5429 = vunpack.c.h.b16 %v4559
    %v5430 = vunpack.c.l.b16 %v4560
    %v5431 = vunpack.c.h.b16 %v4560
    %v5432 = vunpack.c.l.b16 %v4561
    %v5433 = vunpack.c.h.b16 %v4561
    %v5434 = vunpack.c.l.b16 %v4562
    %v5435 = vunpack.c.h.b16 %v4562
    %v5436 = vunpack.c.l.b16 %v4563
    %v5437 = vunpack.c.h.b16 %v4563
    %v5438 = vunpack.c.l.b16 %v4564
    %v5439 = vunpack.c.h.b16 %v4564
    %v5440 = vunpack.c.l.b16 %v4565
    %v5441 = vunpack.c.h.b16 %v4565
    %v5442 = vunpack.c.l.b16 %v4566
    %v5443 = vunpack.c.h.b16 %v4566
    %v5444 = vunpack.c.l.b16 %v4567
    %v5445 = vunpack.c.h.b16 %v4567
    %v5446 = vunpack.c.l.b16 %v4568
    %v5447 = vunpack.c.h.b16 %v4568
    %v5448 = vunpack.c.l.b16 %v4569
    %v5449 = vunpack.c.h.b16 %v4569
    %v5450 = vunpack.c.l.b16 %v4570
    %v5451 = vunpack.c.h.b16 %v4570
    %v5452 = vunpack.c.l.b16 %v4571
    %v5453 = vunpack.c.h.b16 %v4571
    %v5454 = vunpack.c.l.b16 %v4572
    %v5455 = vunpack.c.h.b16 %v4572
    %v5456 = vunpack.c.l.b16 %v4573
    %v5457 = vunpack.c.h.b16 %v4573
    %v5458 = vunpack.c.l.b16 %v4574
    %v5459 = vunpack.c.h.b16 %v4574
    %v5460 = vunpack.c.l.b16 %v4575
    %v5461 = vunpack.c.h.b16 %v4575
    %v5462 = vunpack.c.l.b16 %v4576
    %v5463 = vunpack.c.h.b16 %v4576
    %v5464 = vunpack.c.l.b16 %v4577
    %v5465 = vunpack.c.h.b16 %v4577
    %v5466 = vunpack.c.l.b16 %v4578
    %v5467 = vunpack.c.h.b16 %v4578
    %v5468 = vunpack.c.l.b16 %v4579
    %v5469 = vunpack.c.h.b16 %v4579
    %v5470 = vunpack.c.l.b16 %v4580
    %v5471 = vunpack.c.h.b16 %v4580
    %v5472 = vunpack.c.l.b16 %v4581
    %v5473 = vunpack.c.h.b16 %v4581
    %v5474 = vunpack.c.l.b16 %v4582
    %v5475 = vunpack.c.h.b16 %v4582
    %v5476 = vunpack.c.l.b16 %v4583
    %v5477 = vunpack.c.h.b16 %v4583
    %v5478 = vunpack.c.l.b16 %v4584
    %v5479 = vunpack.c.h.b16 %v4584
    %v5480 = vunpack.c.l.b16 %v4585
    %v5481 = vunpack.c.h.b16 %v4585
    %v5482 = vpack.c.b16 %v4912, %v4906
    %v5483 = vpack.c.b16 %v4913, %v4907
    %v5484 = vpack.c.b16 %v4914, %v4908
    %v5485 = vpack.c.b16 %v4915, %v4909
    %v5486 = vpack.c.b16 %v4916, %v4910
    %v5487 = vpack.c.b16 %v4917, %v4911
    %v5488 = vpack.c.b16 %v4924, %v4918
    %v5489 = vpack.c.b16 %v4925, %v4919
    %v5490 = vpack.c.b16 %v4926, %v4920
    %v5491 = vpack.c.b16 %v4927, %v4921
    %v5492 = vpack.c.b16 %v4928, %v4922
    %v5493 = vpack.c.b16 %v4929, %v4923
    %v5494 = vpack.c.b16 %v4936, %v4930
    %v5495 = vpack.c.b16 %v4937, %v4931
    %v5496 = vpack.c.b16 %v4938, %v4932
    %v5497 = vpack.c.b16 %v4939, %v4933
    %v5498 = vpack.c.b16 %v4940, %v4934
    %v5499 = vpack.c.b16 %v4941, %v4935
    %v5500 = vpack.c.b16 %v4948, %v4942
    %v5501 = vpack.c.b16 %v4949, %v4943
    %v5502 = vpack.c.b16 %v4950, %v4944
    %v5503 = vpack.c.b16 %v4951, %v4945
    %v5504 = vpack.c.b16 %v4952, %v4946
    %v5505 = vpack.c.b16 %v4953, %v4947
    %v5506 = vpack.c.b16 %v4960, %v4954
    %v5507 = vpack.c.b16 %v4961, %v4955
    %v5508 = vpack.c.b16 %v4962, %v4956
    %v5509 = vpack.c.b16 %v4963, %v4957
    %v5510 = vpack.c.b16 %v4964, %v4958
    %v5511 = vpack.c.b16 %v4965, %v4959
    %v5512 = vpack.c.b16 %v4972, %v4966
    %v5513 = vpack.c.b16 %v4973, %v4967
    %v5514 = vpack.c.b16 %v4974, %v4968
    %v5515 = vpack.c.b16 %v4975, %v4969
    %v5516 = vpack.c.b16 %v4976, %v4970
    %v5517 = vpack.c.b16 %v4977, %v4971
    %v5518 = vpack.c.b16 %v4984, %v4978
    %v5519 = vpack.c.b16 %v4985, %v4979
    %v5520 = vpack.c.b16 %v4986, %v4980
    %v5521 = vpack.c.b16 %v4987, %v4981
    %v5522 = vpack.c.b16 %v4988, %v4982
    %v5523 = vpack.c.b16 %v4989, %v4983
    %v5524 = vpack.c.b16 %v4996, %v4990
    %v5525 = vpack.c.b16 %v4997, %v4991
    %v5526 = vpack.c.b16 %v4998, %v4992
    %v5527 = vpack.c.b16 %v4999, %v4993
    %v5528 = vpack.c.b16 %v5000, %v4994
    %v5529 = vpack.c.b16 %v5001, %v4995
    %v5530 = vpack.c.b16 %v5008, %v5002
    %v5531 = vpack.c.b16 %v5009, %v5003
    %v5532 = vpack.c.b16 %v5010, %v5004
    %v5533 = vpack.c.b16 %v5011, %v5005
    %v5534 = vpack.c.b16 %v5012, %v5006
    %v5535 = vpack.c.b16 %v5013, %v5007
    %v5536 = vpack.c.b16 %v5020, %v5014
    %v5537 = vpack.c.b16 %v5021, %v5015
    %v5538 = vpack.c.b16 %v5022, %v5016
    %v5539 = vpack.c.b16 %v5023, %v5017
    %v5540 = vpack.c.b16 %v5024, %v5018
    %v5541 = vpack.c.b16 %v5025, %v5019
    %v5542 = vpack.c.b16 %v5032, %v5026
    %v5543 = vpack.c.b16 %v5033, %v5027
    %v5544 = vpack.c.b16 %v5034, %v5028
    %v5545 = vpack.c.b16 %v5035, %v5029
    %v5546 = vpack.c.b16 %v5036, %v5030
    %v5547 = vpack.c.b16 %v5037, %v5031
    %v5548 = vpack.c.b16 %v5044, %v5038
    %v5549 = vpack.c.b16 %v5045, %v5039
    %v5550 = vpack.c.b16 %v5046, %v5040
    %v5551 = vpack.c.b16 %v5047, %v5041
    %v5552 = vpack.c.b16 %v5048, %v5042
    %v5553 = vpack.c.b16 %v5049, %v5043
    %v5554 = vpack.c.b16 %v5056, %v5050
    %v5555 = vpack.c.b16 %v5057, %v5051
    %v5556 = vpack.c.b16 %v5058, %v5052
    %v5557 = vpack.c.b16 %v5059, %v5053
    %v5558 = vpack.c.b16 %v5060, %v5054
    %v5559 = vpack.c.b16 %v5061, %v5055
    %v5560 = vpack.c.b16 %v5068, %v5062
    %v5561 = vpack.c.b16 %v5069, %v5063
    %v5562 = vpack.c.b16 %v5070, %v5064
    %v5563 = vpack.c.b16 %v5071, %v5065
    %v5564 = vpack.c.b16 %v5072, %v5066
    %v5565 = vpack.c.b16 %v5073, %v5067
    %v5566 = vpack.c.b16 %v5080, %v5074
    %v5567 = vpack.c.b16 %v5081, %v5075
    %v5568 = vpack.c.b16 %v5082, %v5076
    %v5569 = vpack.c.b16 %v5083, %v5077
    %v5570 = vpack.c.b16 %v5084, %v5078
    %v5571 = vpack.c.b16 %v5085, %v5079
    %v5572 = vpack.c.b16 %v5092, %v5086
    %v5573 = vpack.c.b16 %v5093, %v5087
    %v5574 = vpack.c.b16 %v5094, %v5088
    %v5575 = vpack.c.b16 %v5095, %v5089
    %v5576 = vpack.c.b16 %v5096, %v5090
    %v5577 = vpack.c.b16 %v5097, %v5091
    %v5578 = vpack.c.b16 %v5104, %v5098
    %v5579 = vpack.c.b16 %v5105, %v5099
    %v5580 = vpack.c.b16 %v5106, %v5100
    %v5581 = vpack.c.b16 %v5107, %v5101
    %v5582 = vpack.c.b16 %v5108, %v5102
    %v5583 = vpack.c.b16 %v5109, %v5103
    %v5584 = vpack.c.b16 %v5116, %v5110
    %v5585 = vpack.c.b16 %v5117, %v5111
    %v5586 = vpack.c.b16 %v5118, %v5112
    %v5587 = vpack.c.b16 %v5119, %v5113
    %v5588 = vpack.c.b16 %v5120, %v5114
    %v5589 = vpack.c.b16 %v5121, %v5115
    %v5590 = vpack.c.b16 %v5128, %v5122
    %v5591 = vpack.c.b16 %v5129, %v5123
    %v5592 = vpack.c.b16 %v5130, %v5124
    %v5593 = vpack.c.b16 %v5131, %v5125
    %v5594 = vpack.c.b16 %v5132, %v5126
    %v5595 = vpack.c.b16 %v5133, %v5127
    %v5596 = vpack.c.b16 %v5140, %v5134
    %v5597 = vpack.c.b16 %v5141, %v5135
    %v5598 = vpack.c.b16 %v5142, %v5136
    %v5599 = vpack.c.b16 %v5143, %v5137
    %v5600 = vpack.c.b16 %v5144, %v5138
    %v5601 = vpack.c.b16 %v5145, %v5139
    %v5602 = vpack.c.b16 %v5152, %v5146
    %v5603 = vpack.c.b16 %v5153, %v5147
    %v5604 = vpack.c.b16 %v5154, %v5148
    %v5605 = vpack.c.b16 %v5155, %v5149
    %v5606 = vpack.c.b16 %v5156, %v5150
    %v5607 = vpack.c.b16 %v5157, %v5151
    %v5608 = vpack.c.b16 %v5164, %v5158
    %v5609 = vpack.c.b16 %v5165, %v5159
    %v5610 = vpack.c.b16 %v5166, %v5160
    %v5611 = vpack.c.b16 %v5167, %v5161
    %v5612 = vpack.c.b16 %v5168, %v5162
    %v5613 = vpack.c.b16 %v5169, %v5163
    %v5614 = vpack.c.b16 %v5176, %v5170
    %v5615 = vpack.c.b16 %v5177, %v5171
    %v5616 = vpack.c.b16 %v5178, %v5172
    %v5617 = vpack.c.b16 %v5179, %v5173
    %v5618 = vpack.c.b16 %v5180, %v5174
    %v5619 = vpack.c.b16 %v5181, %v5175
    %v5620 = vpack.c.b16 %v5188, %v5182
    %v5621 = vpack.c.b16 %v5189, %v5183
    %v5622 = vpack.c.b16 %v5190, %v5184
    %v5623 = vpack.c.b16 %v5191, %v5185
    %v5624 = vpack.c.b16 %v5192, %v5186
    %v5625 = vpack.c.b16 %v5193, %v5187
    %v5626 = vpack.c.b16 %v5200, %v5194
    %v5627 = vpack.c.b16 %v5201, %v5195
    %v5628 = vpack.c.b16 %v5202, %v5196
    %v5629 = vpack.c.b16 %v5203, %v5197
    %v5630 = vpack.c.b16 %v5204, %v5198
    %v5631 = vpack.c.b16 %v5205, %v5199
    %v5632 = vpack.c.b16 %v5212, %v5206
    %v5633 = vpack.c.b16 %v5213, %v5207
    %v5634 = vpack.c.b16 %v5214, %v5208
    %v5635 = vpack.c.b16 %v5215, %v5209
    %v5636 = vpack.c.b16 %v5216, %v5210
    %v5637 = vpack.c.b16 %v5217, %v5211
    %v5638 = vpack.c.b16 %v5224, %v5218
    %v5639 = vpack.c.b16 %v5225, %v5219
    %v5640 = vpack.c.b16 %v5226, %v5220
    %v5641 = vpack.c.b16 %v5227, %v5221
    %v5642 = vpack.c.b16 %v5228, %v5222
    %v5643 = vpack.c.b16 %v5229, %v5223
    %v5644 = vpack.c.b16 %v5236, %v5230
    %v5645 = vpack.c.b16 %v5237, %v5231
    %v5646 = vpack.c.b16 %v5238, %v5232
    %v5647 = vpack.c.b16 %v5239, %v5233
    %v5648 = vpack.c.b16 %v5240, %v5234
    %v5649 = vpack.c.b16 %v5241, %v5235
    %v5650 = vpack.c.b16 %v5248, %v5242
    %v5651 = vpack.c.b16 %v5249, %v5243
    %v5652 = vpack.c.b16 %v5250, %v5244
    %v5653 = vpack.c.b16 %v5251, %v5245
    %v5654 = vpack.c.b16 %v5252, %v5246
    %v5655 = vpack.c.b16 %v5253, %v5247
    %v5656 = vpack.c.b16 %v5260, %v5254
    %v5657 = vpack.c.b16 %v5261, %v5255
    %v5658 = vpack.c.b16 %v5262, %v5256
    %v5659 = vpack.c.b16 %v5263, %v5257
    %v5660 = vpack.c.b16 %v5264, %v5258
    %v5661 = vpack.c.b16 %v5265, %v5259
    %v5662 = vpack.c.b16 %v5272, %v5266
    %v5663 = vpack.c.b16 %v5273, %v5267
    %v5664 = vpack.c.b16 %v5274, %v5268
    %v5665 = vpack.c.b16 %v5275, %v5269
    %v5666 = vpack.c.b16 %v5276, %v5270
    %v5667 = vpack.c.b16 %v5277, %v5271
    %v5668 = vpack.c.b16 %v5284, %v5278
    %v5669 = vpack.c.b16 %v5285, %v5279
    %v5670 = vpack.c.b16 %v5286, %v5280
    %v5671 = vpack.c.b16 %v5287, %v5281
    %v5672 = vpack.c.b16 %v5288, %v5282
    %v5673 = vpack.c.b16 %v5289, %v5283
    %v5674 = vpack.c.b16 %v5296, %v5290
    %v5675 = vpack.c.b16 %v5297, %v5291
    %v5676 = vpack.c.b16 %v5298, %v5292
    %v5677 = vpack.c.b16 %v5299, %v5293
    %v5678 = vpack.c.b16 %v5300, %v5294
    %v5679 = vpack.c.b16 %v5301, %v5295
    %v5680 = vpack.c.b16 %v5308, %v5302
    %v5681 = vpack.c.b16 %v5309, %v5303
    %v5682 = vpack.c.b16 %v5310, %v5304
    %v5683 = vpack.c.b16 %v5311, %v5305
    %v5684 = vpack.c.b16 %v5312, %v5306
    %v5685 = vpack.c.b16 %v5313, %v5307
    %v5686 = vpack.c.b16 %v5320, %v5314
    %v5687 = vpack.c.b16 %v5321, %v5315
    %v5688 = vpack.c.b16 %v5322, %v5316
    %v5689 = vpack.c.b16 %v5323, %v5317
    %v5690 = vpack.c.b16 %v5324, %v5318
    %v5691 = vpack.c.b16 %v5325, %v5319
    %v5692 = vpack.c.b16 %v5332, %v5326
    %v5693 = vpack.c.b16 %v5333, %v5327
    %v5694 = vpack.c.b16 %v5334, %v5328
    %v5695 = vpack.c.b16 %v5335, %v5329
    %v5696 = vpack.c.b16 %v5336, %v5330
    %v5697 = vpack.c.b16 %v5337, %v5331
    %v5698 = vpack.c.b16 %v5344, %v5338
    %v5699 = vpack.c.b16 %v5345, %v5339
    %v5700 = vpack.c.b16 %v5346, %v5340
    %v5701 = vpack.c.b16 %v5347, %v5341
    %v5702 = vpack.c.b16 %v5348, %v5342
    %v5703 = vpack.c.b16 %v5349, %v5343
    %v5704 = vpack.c.b16 %v5356, %v5350
    %v5705 = vpack.c.b16 %v5357, %v5351
    %v5706 = vpack.c.b16 %v5358, %v5352
    %v5707 = vpack.c.b16 %v5359, %v5353
    %v5708 = vpack.c.b16 %v5360, %v5354
    %v5709 = vpack.c.b16 %v5361, %v5355
    %v5710 = vpack.c.b16 %v5368, %v5362
    %v5711 = vpack.c.b16 %v5369, %v5363
    %v5712 = vpack.c.b16 %v5370, %v5364
    %v5713 = vpack.c.b16 %v5371, %v5365
    %v5714 = vpack.c.b16 %v5372, %v5366
    %v5715 = vpack.c.b16 %v5373, %v5367
    %v5716 = vpack.c.b16 %v5380, %v5374
    %v5717 = vpack.c.b16 %v5381, %v5375
    %v5718 = vpack.c.b16 %v5382, %v5376
    %v5719 = vpack.c.b16 %v5383, %v5377
    %v5720 = vpack.c.b16 %v5384, %v5378
    %v5721 = vpack.c.b16 %v5385, %v5379
    %v5722 = vpack.c.b16 %v5392, %v5386
    %v5723 = vpack.c.b16 %v5393, %v5387
    %v5724 = vpack.c.b16 %v5394, %v5388
    %v5725 = vpack.c.b16 %v5395, %v5389
    %v5726 = vpack.c.b16 %v5396, %v5390
    %v5727 = vpack.c.b16 %v5397, %v5391
    %v5728 = vpack.c.b16 %v5404, %v5398
    %v5729 = vpack.c.b16 %v5405, %v5399
    %v5730 = vpack.c.b16 %v5406, %v5400
    %v5731 = vpack.c.b16 %v5407, %v5401
    %v5732 = vpack.c.b16 %v5408, %v5402
    %v5733 = vpack.c.b16 %v5409, %v5403
    %v5734 = vpack.c.b16 %v5416, %v5410
    %v5735 = vpack.c.b16 %v5417, %v5411
    %v5736 = vpack.c.b16 %v5418, %v5412
    %v5737 = vpack.c.b16 %v5419, %v5413
    %v5738 = vpack.c.b16 %v5420, %v5414
    %v5739 = vpack.c.b16 %v5421, %v5415
    %v5740 = vpack.c.b16 %v5428, %v5422
    %v5741 = vpack.c.b16 %v5429, %v5423
    %v5742 = vpack.c.b16 %v5430, %v5424
    %v5743 = vpack.c.b16 %v5431, %v5425
    %v5744 = vpack.c.b16 %v5432, %v5426
    %v5745 = vpack.c.b16 %v5433, %v5427
    %v5746 = vpack.c.b16 %v5440, %v5434
    %v5747 = vpack.c.b16 %v5441, %v5435
    %v5748 = vpack.c.b16 %v5442, %v5436
    %v5749 = vpack.c.b16 %v5443, %v5437
    %v5750 = vpack.c.b16 %v5444, %v5438
    %v5751 = vpack.c.b16 %v5445, %v5439
    %v5752 = vpack.c.b16 %v5452, %v5446
    %v5753 = vpack.c.b16 %v5453, %v5447
    %v5754 = vpack.c.b16 %v5454, %v5448
    %v5755 = vpack.c.b16 %v5455, %v5449
    %v5756 = vpack.c.b16 %v5456, %v5450
    %v5757 = vpack.c.b16 %v5457, %v5451
    %v5758 = vpack.c.b16 %v5464, %v5458
    %v5759 = vpack.c.b16 %v5465, %v5459
    %v5760 = vpack.c.b16 %v5466, %v5460
    %v5761 = vpack.c.b16 %v5467, %v5461
    %v5762 = vpack.c.b16 %v5468, %v5462
    %v5763 = vpack.c.b16 %v5469, %v5463
    %v5764 = vpack.c.b16 %v5476, %v5470
    %v5765 = vpack.c.b16 %v5477, %v5471
    %v5766 = vpack.c.b16 %v5478, %v5472
    %v5767 = vpack.c.b16 %v5479, %v5473
    %v5768 = vpack.c.b16 %v5480, %v5474
    %v5769 = vpack.c.b16 %v5481, %v5475
    %6058 = vmatprep.subr.bf16.mxu0 %v5525
    %6059 = vmatpush1.bf16.msra.mxu0 %v5524
    %6060 = vmatprep.subr.bf16.mxu0 %v5519
    %6061 = vmatpush1.bf16.msra.mxu0 %v5518
    %6062 = vmatprep.subr.bf16.mxu0 %v5513
    %6063 = vmatpush1.bf16.msra.mxu0 %v5512
    %6064 = vmatprep.subr.bf16.mxu0 %v5507
    %6065 = vmatpush1.bf16.msra.mxu0 %v5506
    %6066 = vmatprep.subr.bf16.mxu0 %v5501
    %6067 = vmatpush1.bf16.msra.mxu0 %v5500
    %6068 = vmatprep.subr.bf16.mxu0 %v5495
    %6069 = vmatpush1.bf16.msra.mxu0 %v5494
    %6070 = vmatprep.subr.bf16.mxu0 %v5489
    %6071 = vmatpush1.bf16.msra.mxu0 %v5488
    %6072 = vmatprep.subr.bf16.mxu0 %v5483
    %6073 = vmatpush1.bf16.msra.mxu0 %v5482
    %6074 = vmatprep.subr.bf16.mxu0 %v5573
    %6075 = vmatpush2.bf16.msra.mxu0 %v5572
    %6076 = vmatprep.subr.bf16.mxu0 %v5567
    %6077 = vmatpush2.bf16.msra.mxu0 %v5566
    %6078 = vmatprep.subr.bf16.mxu0 %v5561
    %6079 = vmatpush2.bf16.msra.mxu0 %v5560
    %6080 = vmatprep.subr.bf16.mxu0 %v5555
    %6081 = vmatpush2.bf16.msra.mxu0 %v5554
    %6082 = vmatprep.subr.bf16.mxu0 %v5549
    %6083 = vmatpush2.bf16.msra.mxu0 %v5548
    %6084 = vmatprep.subr.bf16.mxu0 %v5543
    %6085 = vmatpush2.bf16.msra.mxu0 %v5542
    %6086 = vmatprep.subr.bf16.mxu0 %v5537
    %6087 = vmatpush2.bf16.msra.mxu0 %v5536
    %6088 = vmatprep.subr.bf16.mxu0 %v5531
    %6089 = vmatpush2.bf16.msra.mxu0 %v5530
    %6090 = vmatprep.mubr.bf16.mxu0 %v4293
    %6091 = vmatmul.mubr.bf16.gmra.mxu0 %v4292
    %v6092 = vpop.f32.mrf.mxu0
    %v6093 = vadd.f32 %v4591, %v6092
    %v6094 = vpop.f32.mrf.mxu0
    %v6095 = vadd.f32 %v4595, %v6094
    %v6096 = vpop.f32.mrf.mxu0
    %v6097 = vadd.f32 %v4591, %v6096
    %v6098 = vpop.f32.mrf.mxu0
    %v6099 = vadd.f32 %v4595, %v6098
    %6100 = vdwg.mxu0
    %6101 = vmatprep.subr.bf16.mxu0 %v5621
    %6102 = vmatpush1.bf16.msra.mxu0 %v5620
    %6103 = vmatprep.subr.bf16.mxu0 %v5615
    %6104 = vmatpush1.bf16.msra.mxu0 %v5614
    %6105 = vmatprep.subr.bf16.mxu0 %v5609
    %6106 = vmatpush1.bf16.msra.mxu0 %v5608
    %6107 = vmatprep.subr.bf16.mxu0 %v5603
    %6108 = vmatpush1.bf16.msra.mxu0 %v5602
    %6109 = vmatprep.subr.bf16.mxu0 %v5597
    %6110 = vmatpush1.bf16.msra.mxu0 %v5596
    %6111 = vmatprep.subr.bf16.mxu0 %v5591
    %6112 = vmatpush1.bf16.msra.mxu0 %v5590
    %6113 = vmatprep.subr.bf16.mxu0 %v5585
    %6114 = vmatpush1.bf16.msra.mxu0 %v5584
    %6115 = vmatprep.subr.bf16.mxu0 %v5579
    %6116 = vmatpush1.bf16.msra.mxu0 %v5578
    %6117 = vmatprep.subr.bf16.mxu0 %v5669
    %6118 = vmatpush2.bf16.msra.mxu0 %v5668
    %6119 = vmatprep.subr.bf16.mxu0 %v5663
    %6120 = vmatpush2.bf16.msra.mxu0 %v5662
    %6121 = vmatprep.subr.bf16.mxu0 %v5657
    %6122 = vmatpush2.bf16.msra.mxu0 %v5656
    %6123 = vmatprep.subr.bf16.mxu0 %v5651
    %6124 = vmatpush2.bf16.msra.mxu0 %v5650
    %6125 = vmatprep.subr.bf16.mxu0 %v5645
    %6126 = vmatpush2.bf16.msra.mxu0 %v5644
    %6127 = vmatprep.subr.bf16.mxu0 %v5639
    %6128 = vmatpush2.bf16.msra.mxu0 %v5638
    %6129 = vmatprep.subr.bf16.mxu0 %v5633
    %6130 = vmatpush2.bf16.msra.mxu0 %v5632
    %6131 = vmatprep.subr.bf16.mxu0 %v5627
    %6132 = vmatpush2.bf16.msra.mxu0 %v5626
    %6133 = vmatprep.mubr.bf16.mxu0 %v4295
    %6134 = vmatmul.mubr.bf16.gmra.mxu0 %v4294
    %v6135 = vpop.f32.mrf.mxu0
    %v6136 = vadd.f32 %v6093, %v6135
    %v6137 = vpop.f32.mrf.mxu0
    %v6138 = vadd.f32 %v6095, %v6137
    %v6139 = vpop.f32.mrf.mxu0
    %v6140 = vadd.f32 %v6097, %v6139
    %v6141 = vpop.f32.mrf.mxu0
    %v6142 = vadd.f32 %v6099, %v6141
    %6143 = vdwg.mxu0
    %6144 = vmatprep.subr.bf16.mxu0 %v5717
    %6145 = vmatpush1.bf16.msra.mxu0 %v5716
    %6146 = vmatprep.subr.bf16.mxu0 %v5711
    %6147 = vmatpush1.bf16.msra.mxu0 %v5710
    %6148 = vmatprep.subr.bf16.mxu0 %v5705
    %6149 = vmatpush1.bf16.msra.mxu0 %v5704
    %6150 = vmatprep.subr.bf16.mxu0 %v5699
    %6151 = vmatpush1.bf16.msra.mxu0 %v5698
    %6152 = vmatprep.subr.bf16.mxu0 %v5693
    %6153 = vmatpush1.bf16.msra.mxu0 %v5692
    %6154 = vmatprep.subr.bf16.mxu0 %v5687
    %6155 = vmatpush1.bf16.msra.mxu0 %v5686
    %6156 = vmatprep.subr.bf16.mxu0 %v5681
    %6157 = vmatpush1.bf16.msra.mxu0 %v5680
    %6158 = vmatprep.subr.bf16.mxu0 %v5675
    %6159 = vmatpush1.bf16.msra.mxu0 %v5674
    %6160 = vmatprep.subr.bf16.mxu0 %v5765
    %6161 = vmatpush2.bf16.msra.mxu0 %v5764
    %6162 = vmatprep.subr.bf16.mxu0 %v5759
    %6163 = vmatpush2.bf16.msra.mxu0 %v5758
    %6164 = vmatprep.subr.bf16.mxu0 %v5753
    %6165 = vmatpush2.bf16.msra.mxu0 %v5752
    %6166 = vmatprep.subr.bf16.mxu0 %v5747
    %6167 = vmatpush2.bf16.msra.mxu0 %v5746
    %6168 = vmatprep.subr.bf16.mxu0 %v5741
    %6169 = vmatpush2.bf16.msra.mxu0 %v5740
    %6170 = vmatprep.subr.bf16.mxu0 %v5735
    %6171 = vmatpush2.bf16.msra.mxu0 %v5734
    %6172 = vmatprep.subr.bf16.mxu0 %v5729
    %6173 = vmatpush2.bf16.msra.mxu0 %v5728
    %6174 = vmatprep.subr.bf16.mxu0 %v5723
    %6175 = vmatpush2.bf16.msra.mxu0 %v5722
    %6176 = vmatprep.mubr.bf16.mxu0 %v4297
    %6177 = vmatmul.mubr.bf16.gmra.mxu0 %v4296
    %v6178 = vpop.f32.mrf.mxu0
    %v6179 = vadd.f32 %v6136, %v6178
    %v6180 = vpop.f32.mrf.mxu0
    %v6181 = vadd.f32 %v6138, %v6180
    %v6182 = vpop.f32.mrf.mxu0
    %v6183 = vadd.f32 %v6140, %v6182
    %v6184 = vpop.f32.mrf.mxu0
    %v6185 = vadd.f32 %v6142, %v6184
    %6186 = vdwg.mxu0
    %6187 = vmatprep.subr.bf16.mxu0 %v5527
    %6188 = vmatpush1.bf16.msra.mxu0 %v5526
    %6189 = vmatprep.subr.bf16.mxu0 %v5521
    %6190 = vmatpush1.bf16.msra.mxu0 %v5520
    %6191 = vmatprep.subr.bf16.mxu0 %v5515
    %6192 = vmatpush1.bf16.msra.mxu0 %v5514
    %6193 = vmatprep.subr.bf16.mxu0 %v5509
    %6194 = vmatpush1.bf16.msra.mxu0 %v5508
    %6195 = vmatprep.subr.bf16.mxu0 %v5503
    %6196 = vmatpush1.bf16.msra.mxu0 %v5502
    %6197 = vmatprep.subr.bf16.mxu0 %v5497
    %6198 = vmatpush1.bf16.msra.mxu0 %v5496
    %6199 = vmatprep.subr.bf16.mxu0 %v5491
    %6200 = vmatpush1.bf16.msra.mxu0 %v5490
    %6201 = vmatprep.subr.bf16.mxu0 %v5485
    %6202 = vmatpush1.bf16.msra.mxu0 %v5484
    %6203 = vmatprep.subr.bf16.mxu0 %v5575
    %6204 = vmatpush2.bf16.msra.mxu0 %v5574
    %6205 = vmatprep.subr.bf16.mxu0 %v5569
    %6206 = vmatpush2.bf16.msra.mxu0 %v5568
    %6207 = vmatprep.subr.bf16.mxu0 %v5563
    %6208 = vmatpush2.bf16.msra.mxu0 %v5562
    %6209 = vmatprep.subr.bf16.mxu0 %v5557
    %6210 = vmatpush2.bf16.msra.mxu0 %v5556
    %6211 = vmatprep.subr.bf16.mxu0 %v5551
    %6212 = vmatpush2.bf16.msra.mxu0 %v5550
    %6213 = vmatprep.subr.bf16.mxu0 %v5545
    %6214 = vmatpush2.bf16.msra.mxu0 %v5544
    %6215 = vmatprep.subr.bf16.mxu0 %v5539
    %6216 = vmatpush2.bf16.msra.mxu0 %v5538
    %6217 = vmatprep.subr.bf16.mxu0 %v5533
    %6218 = vmatpush2.bf16.msra.mxu0 %v5532
    %6219 = vmatprep.mubr.bf16.mxu0 %v4293
    %6220 = vmatmul.mubr.bf16.gmra.mxu0 %v4292
    %v6221 = vpop.f32.mrf.mxu0
    %v6222 = vadd.f32 %v4599, %v6221
    %v6223 = vpop.f32.mrf.mxu0
    %v6224 = vadd.f32 %v4603, %v6223
    %v6225 = vpop.f32.mrf.mxu0
    %v6226 = vadd.f32 %v4599, %v6225
    %v6227 = vpop.f32.mrf.mxu0
    %v6228 = vadd.f32 %v4603, %v6227
    %6229 = vdwg.mxu0
    %6230 = vmatprep.subr.bf16.mxu0 %v5623
    %6231 = vmatpush1.bf16.msra.mxu0 %v5622
    %6232 = vmatprep.subr.bf16.mxu0 %v5617
    %6233 = vmatpush1.bf16.msra.mxu0 %v5616
    %6234 = vmatprep.subr.bf16.mxu0 %v5611
    %6235 = vmatpush1.bf16.msra.mxu0 %v5610
    %6236 = vmatprep.subr.bf16.mxu0 %v5605
    %6237 = vmatpush1.bf16.msra.mxu0 %v5604
    %6238 = vmatprep.subr.bf16.mxu0 %v5599
    %6239 = vmatpush1.bf16.msra.mxu0 %v5598
    %6240 = vmatprep.subr.bf16.mxu0 %v5593
    %6241 = vmatpush1.bf16.msra.mxu0 %v5592
    %6242 = vmatprep.subr.bf16.mxu0 %v5587
    %6243 = vmatpush1.bf16.msra.mxu0 %v5586
    %6244 = vmatprep.subr.bf16.mxu0 %v5581
    %6245 = vmatpush1.bf16.msra.mxu0 %v5580
    %6246 = vmatprep.subr.bf16.mxu0 %v5671
    %6247 = vmatpush2.bf16.msra.mxu0 %v5670
    %6248 = vmatprep.subr.bf16.mxu0 %v5665
    %6249 = vmatpush2.bf16.msra.mxu0 %v5664
    %6250 = vmatprep.subr.bf16.mxu0 %v5659
    %6251 = vmatpush2.bf16.msra.mxu0 %v5658
    %6252 = vmatprep.subr.bf16.mxu0 %v5653
    %6253 = vmatpush2.bf16.msra.mxu0 %v5652
    %6254 = vmatprep.subr.bf16.mxu0 %v5647
    %6255 = vmatpush2.bf16.msra.mxu0 %v5646
    %6256 = vmatprep.subr.bf16.mxu0 %v5641
    %6257 = vmatpush2.bf16.msra.mxu0 %v5640
    %6258 = vmatprep.subr.bf16.mxu0 %v5635
    %6259 = vmatpush2.bf16.msra.mxu0 %v5634
    %6260 = vmatprep.subr.bf16.mxu0 %v5629
    %6261 = vmatpush2.bf16.msra.mxu0 %v5628
    %6262 = vmatprep.mubr.bf16.mxu0 %v4295
    %6263 = vmatmul.mubr.bf16.gmra.mxu0 %v4294
    %v6264 = vpop.f32.mrf.mxu0
    %v6265 = vadd.f32 %v6222, %v6264
    %v6266 = vpop.f32.mrf.mxu0
    %v6267 = vadd.f32 %v6224, %v6266
    %v6268 = vpop.f32.mrf.mxu0
    %v6269 = vadd.f32 %v6226, %v6268
    %v6270 = vpop.f32.mrf.mxu0
    %v6271 = vadd.f32 %v6228, %v6270
    %6272 = vdwg.mxu0
    %6273 = vmatprep.subr.bf16.mxu0 %v5719
    %6274 = vmatpush1.bf16.msra.mxu0 %v5718
    %6275 = vmatprep.subr.bf16.mxu0 %v5713
    %6276 = vmatpush1.bf16.msra.mxu0 %v5712
    %6277 = vmatprep.subr.bf16.mxu0 %v5707
    %6278 = vmatpush1.bf16.msra.mxu0 %v5706
    %6279 = vmatprep.subr.bf16.mxu0 %v5701
    %6280 = vmatpush1.bf16.msra.mxu0 %v5700
    %6281 = vmatprep.subr.bf16.mxu0 %v5695
    %6282 = vmatpush1.bf16.msra.mxu0 %v5694
    %6283 = vmatprep.subr.bf16.mxu0 %v5689
    %6284 = vmatpush1.bf16.msra.mxu0 %v5688
    %6285 = vmatprep.subr.bf16.mxu0 %v5683
    %6286 = vmatpush1.bf16.msra.mxu0 %v5682
    %6287 = vmatprep.subr.bf16.mxu0 %v5677
    %6288 = vmatpush1.bf16.msra.mxu0 %v5676
    %6289 = vmatprep.subr.bf16.mxu0 %v5767
    %6290 = vmatpush2.bf16.msra.mxu0 %v5766
    %6291 = vmatprep.subr.bf16.mxu0 %v5761
    %6292 = vmatpush2.bf16.msra.mxu0 %v5760
    %6293 = vmatprep.subr.bf16.mxu0 %v5755
    %6294 = vmatpush2.bf16.msra.mxu0 %v5754
    %6295 = vmatprep.subr.bf16.mxu0 %v5749
    %6296 = vmatpush2.bf16.msra.mxu0 %v5748
    %6297 = vmatprep.subr.bf16.mxu0 %v5743
    %6298 = vmatpush2.bf16.msra.mxu0 %v5742
    %6299 = vmatprep.subr.bf16.mxu0 %v5737
    %6300 = vmatpush2.bf16.msra.mxu0 %v5736
    %6301 = vmatprep.subr.bf16.mxu0 %v5731
    %6302 = vmatpush2.bf16.msra.mxu0 %v5730
    %6303 = vmatprep.subr.bf16.mxu0 %v5725
    %6304 = vmatpush2.bf16.msra.mxu0 %v5724
    %6305 = vmatprep.mubr.bf16.mxu0 %v4297
    %6306 = vmatmul.mubr.bf16.gmra.mxu0 %v4296
    %v6307 = vpop.f32.mrf.mxu0
    %v6308 = vadd.f32 %v6265, %v6307
    %v6309 = vpop.f32.mrf.mxu0
    %v6310 = vadd.f32 %v6267, %v6309
    %v6311 = vpop.f32.mrf.mxu0
    %v6312 = vadd.f32 %v6269, %v6311
    %v6313 = vpop.f32.mrf.mxu0
    %v6314 = vadd.f32 %v6271, %v6313
    %6315 = vdwg.mxu0
    %6316 = vmatprep.subr.bf16.mxu0 %v5529
    %6317 = vmatpush1.bf16.msra.mxu0 %v5528
    %6318 = vmatprep.subr.bf16.mxu0 %v5523
    %6319 = vmatpush1.bf16.msra.mxu0 %v5522
    %6320 = vmatprep.subr.bf16.mxu0 %v5517
    %6321 = vmatpush1.bf16.msra.mxu0 %v5516
    %6322 = vmatprep.subr.bf16.mxu0 %v5511
    %6323 = vmatpush1.bf16.msra.mxu0 %v5510
    %6324 = vmatprep.subr.bf16.mxu0 %v5505
    %6325 = vmatpush1.bf16.msra.mxu0 %v5504
    %6326 = vmatprep.subr.bf16.mxu0 %v5499
    %6327 = vmatpush1.bf16.msra.mxu0 %v5498
    %6328 = vmatprep.subr.bf16.mxu0 %v5493
    %6329 = vmatpush1.bf16.msra.mxu0 %v5492
    %6330 = vmatprep.subr.bf16.mxu0 %v5487
    %6331 = vmatpush1.bf16.msra.mxu0 %v5486
    %6332 = vmatprep.subr.bf16.mxu0 %v5577
    %6333 = vmatpush2.bf16.msra.mxu0 %v5576
    %6334 = vmatprep.subr.bf16.mxu0 %v5571
    %6335 = vmatpush2.bf16.msra.mxu0 %v5570
    %6336 = vmatprep.subr.bf16.mxu0 %v5565
    %6337 = vmatpush2.bf16.msra.mxu0 %v5564
    %6338 = vmatprep.subr.bf16.mxu0 %v5559
    %6339 = vmatpush2.bf16.msra.mxu0 %v5558
    %6340 = vmatprep.subr.bf16.mxu0 %v5553
    %6341 = vmatpush2.bf16.msra.mxu0 %v5552
    %6342 = vmatprep.subr.bf16.mxu0 %v5547
    %6343 = vmatpush2.bf16.msra.mxu0 %v5546
    %6344 = vmatprep.subr.bf16.mxu0 %v5541
    %6345 = vmatpush2.bf16.msra.mxu0 %v5540
    %6346 = vmatprep.subr.bf16.mxu0 %v5535
    %6347 = vmatpush2.bf16.msra.mxu0 %v5534
    %6348 = vmatprep.mubr.bf16.mxu0 %v4293
    %6349 = vmatmul.mubr.bf16.gmra.mxu0 %v4292
    %v6350 = vpop.f32.mrf.mxu0
    %v6351 = vadd.f32 %v4607, %v6350
    %v6352 = vpop.f32.mrf.mxu0
    %v6353 = vadd.f32 %v4611, %v6352
    %v6354 = vpop.f32.mrf.mxu0
    %v6355 = vadd.f32 %v4607, %v6354
    %v6356 = vpop.f32.mrf.mxu0
    %v6357 = vadd.f32 %v4611, %v6356
    %6358 = vdwg.mxu0
    %6359 = vmatprep.subr.bf16.mxu0 %v5625
    %6360 = vmatpush1.bf16.msra.mxu0 %v5624
    %6361 = vmatprep.subr.bf16.mxu0 %v5619
    %6362 = vmatpush1.bf16.msra.mxu0 %v5618
    %6363 = vmatprep.subr.bf16.mxu0 %v5613
    %6364 = vmatpush1.bf16.msra.mxu0 %v5612
    %6365 = vmatprep.subr.bf16.mxu0 %v5607
    %6366 = vmatpush1.bf16.msra.mxu0 %v5606
    %6367 = vmatprep.subr.bf16.mxu0 %v5601
    %6368 = vmatpush1.bf16.msra.mxu0 %v5600
    %6369 = vmatprep.subr.bf16.mxu0 %v5595
    %6370 = vmatpush1.bf16.msra.mxu0 %v5594
    %6371 = vmatprep.subr.bf16.mxu0 %v5589
    %6372 = vmatpush1.bf16.msra.mxu0 %v5588
    %6373 = vmatprep.subr.bf16.mxu0 %v5583
    %6374 = vmatpush1.bf16.msra.mxu0 %v5582
    %6375 = vmatprep.subr.bf16.mxu0 %v5673
    %6376 = vmatpush2.bf16.msra.mxu0 %v5672
    %6377 = vmatprep.subr.bf16.mxu0 %v5667
    %6378 = vmatpush2.bf16.msra.mxu0 %v5666
    %6379 = vmatprep.subr.bf16.mxu0 %v5661
    %6380 = vmatpush2.bf16.msra.mxu0 %v5660
    %6381 = vmatprep.subr.bf16.mxu0 %v5655
    %6382 = vmatpush2.bf16.msra.mxu0 %v5654
    %6383 = vmatprep.subr.bf16.mxu0 %v5649
    %6384 = vmatpush2.bf16.msra.mxu0 %v5648
    %6385 = vmatprep.subr.bf16.mxu0 %v5643
    %6386 = vmatpush2.bf16.msra.mxu0 %v5642
    %6387 = vmatprep.subr.bf16.mxu0 %v5637
    %6388 = vmatpush2.bf16.msra.mxu0 %v5636
    %6389 = vmatprep.subr.bf16.mxu0 %v5631
    %6390 = vmatpush2.bf16.msra.mxu0 %v5630
    %6391 = vmatprep.mubr.bf16.mxu0 %v4295
    %6392 = vmatmul.mubr.bf16.gmra.mxu0 %v4294
    %v6393 = vpop.f32.mrf.mxu0
    %v6394 = vadd.f32 %v6351, %v6393
    %v6395 = vpop.f32.mrf.mxu0
    %v6396 = vadd.f32 %v6353, %v6395
    %v6397 = vpop.f32.mrf.mxu0
    %v6398 = vadd.f32 %v6355, %v6397
    %v6399 = vpop.f32.mrf.mxu0
    %v6400 = vadd.f32 %v6357, %v6399
    %6401 = vdwg.mxu0
    %6402 = vmatprep.subr.bf16.mxu0 %v5721
    %6403 = vmatpush1.bf16.msra.mxu0 %v5720
    %6404 = vmatprep.subr.bf16.mxu0 %v5715
    %6405 = vmatpush1.bf16.msra.mxu0 %v5714
    %6406 = vmatprep.subr.bf16.mxu0 %v5709
    %6407 = vmatpush1.bf16.msra.mxu0 %v5708
    %6408 = vmatprep.subr.bf16.mxu0 %v5703
    %6409 = vmatpush1.bf16.msra.mxu0 %v5702
    %6410 = vmatprep.subr.bf16.mxu0 %v5697
    %6411 = vmatpush1.bf16.msra.mxu0 %v5696
    %6412 = vmatprep.subr.bf16.mxu0 %v5691
    %6413 = vmatpush1.bf16.msra.mxu0 %v5690
    %6414 = vmatprep.subr.bf16.mxu0 %v5685
    %6415 = vmatpush1.bf16.msra.mxu0 %v5684
    %6416 = vmatprep.subr.bf16.mxu0 %v5679
    %6417 = vmatpush1.bf16.msra.mxu0 %v5678
    %6418 = vmatprep.subr.bf16.mxu0 %v5769
    %6419 = vmatpush2.bf16.msra.mxu0 %v5768
    %6420 = vmatprep.subr.bf16.mxu0 %v5763
    %6421 = vmatpush2.bf16.msra.mxu0 %v5762
    %6422 = vmatprep.subr.bf16.mxu0 %v5757
    %6423 = vmatpush2.bf16.msra.mxu0 %v5756
    %6424 = vmatprep.subr.bf16.mxu0 %v5751
    %6425 = vmatpush2.bf16.msra.mxu0 %v5750
    %6426 = vmatprep.subr.bf16.mxu0 %v5745
    %6427 = vmatpush2.bf16.msra.mxu0 %v5744
    %6428 = vmatprep.subr.bf16.mxu0 %v5739
    %6429 = vmatpush2.bf16.msra.mxu0 %v5738
    %6430 = vmatprep.subr.bf16.mxu0 %v5733
    %6431 = vmatpush2.bf16.msra.mxu0 %v5732
    %6432 = vmatprep.subr.bf16.mxu0 %v5727
    %6433 = vmatpush2.bf16.msra.mxu0 %v5726
    %6434 = vmatprep.mubr.bf16.mxu0 %v4297
    %6435 = vmatmul.mubr.bf16.gmra.mxu0 %v4296
    %v6436 = vpop.f32.mrf.mxu0
    %v6437 = vadd.f32 %v6394, %v6436
    %v6438 = vpop.f32.mrf.mxu0
    %v6439 = vadd.f32 %v6396, %v6438
    %v6440 = vpop.f32.mrf.mxu0
    %v6441 = vadd.f32 %v6398, %v6440
    %v6442 = vpop.f32.mrf.mxu0
    %v6443 = vadd.f32 %v6400, %v6442
    %6444 = vdwg.mxu0
    %v6445 = vmax.f32 %v6179, 0.0
    %v6446 = vmax.f32 %v6181, 0.0
    %v6447 = vmax.f32 %v6308, 0.0
    %v6448 = vmax.f32 %v6310, 0.0
    %v6449 = vmax.f32 %v6437, 0.0
    %v6450 = vmax.f32 %v6439, 0.0
    %v6451 = vmax.f32 %v6183, 0.0
    %v6452 = vmax.f32 %v6185, 0.0
    %v6453 = vmax.f32 %v6312, 0.0
    %v6454 = vmax.f32 %v6314, 0.0
    %v6455 = vmax.f32 %v6441, 0.0
    %v6456 = vmax.f32 %v6443, 0.0
    %v6457 = vpack.c.bf16 %v6451, %v6445
    %v6458 = vpack.c.bf16 %v6452, %v6446
    %v6459 = vpack.c.bf16 %v6453, %v6447
    %v6460 = vpack.c.bf16 %v6454, %v6448
    %v6461 = vpack.c.bf16 %v6455, %v6449
    %v6462 = vpack.c.bf16 %v6456, %v6450
    %v6463 = vld [vmem:[#allocation26] sm:$0xf]
    %v6464 = vld [vmem:[#allocation26 + $0x4] sm:$0xf]
    %v6465 = vld [vmem:[#allocation26 + $0x8] sm:$0xf]
    %v6466 = vld [vmem:[#allocation26 + $0xc] sm:$0xf]
    %v6467 = vld [vmem:[#allocation26 + $0x10] sm:$0xf]
    %v6468 = vld [vmem:[#allocation26 + $0x14] sm:$0xf]
    %v6469 = vld [vmem:[#allocation26 + $0x18] sm:$0xf]
    %v6470 = vld [vmem:[#allocation26 + $0x1c] sm:$0xf]
    %v6471 = vld [vmem:[#allocation26 + $0x20] sm:$0xf]
    %v6472 = vld [vmem:[#allocation26 + $0x24] sm:$0xf]
    %v6473 = vld [vmem:[#allocation26 + $0x28] sm:$0xf]
    %v6474 = vld [vmem:[#allocation26 + $0x2c] sm:$0xf]
    %v6475 = vld [vmem:[#allocation26 + $0x30] sm:$0xf]
    %v6476 = vld [vmem:[#allocation26 + $0x34] sm:$0xf]
    %v6477 = vld [vmem:[#allocation26 + $0x38] sm:$0xf]
    %v6478 = vld [vmem:[#allocation26 + $0x3c] sm:$0xf]
    %v6479 = vld [vmem:[#allocation26 + $0x40] sm:$0xf]
    %v6480 = vld [vmem:[#allocation26 + $0x44] sm:$0xf]
    %v6481 = vld [vmem:[#allocation26 + $0x48] sm:$0xf]
    %v6482 = vld [vmem:[#allocation26 + $0x4c] sm:$0xf]
    %v6483 = vld [vmem:[#allocation26 + $0x50] sm:$0xf]
    %v6484 = vld [vmem:[#allocation26 + $0x54] sm:$0xf]
    %v6485 = vld [vmem:[#allocation26 + $0x58] sm:$0xf]
    %v6486 = vld [vmem:[#allocation26 + $0x5c] sm:$0xf]
    %v6487 = vld [vmem:[#allocation26 + $0x60] sm:$0xf]
    %v6488 = vld [vmem:[#allocation26 + $0x64] sm:$0xf]
    %v6489 = vld [vmem:[#allocation26 + $0x68] sm:$0xf]
    %v6490 = vld [vmem:[#allocation26 + $0x6c] sm:$0xf]
    %v6491 = vld [vmem:[#allocation26 + $0x70] sm:$0xf]
    %v6492 = vld [vmem:[#allocation26 + $0x74] sm:$0xf]
    %v6493 = vld [vmem:[#allocation26 + $0x78] sm:$0xf]
    %v6494 = vld [vmem:[#allocation26 + $0x7c] sm:$0xf]
    %v6495 = vld [vmem:[#allocation26 + $0x80] sm:$0xf]
    %v6496 = vld [vmem:[#allocation26 + $0x84] sm:$0xf]
    %v6497 = vld [vmem:[#allocation26 + $0x88] sm:$0xf]
    %v6498 = vld [vmem:[#allocation26 + $0x8c] sm:$0xf]
    %v6499 = vld [vmem:[#allocation26 + $0x90] sm:$0xf]
    %v6500 = vld [vmem:[#allocation26 + $0x94] sm:$0xf]
    %v6501 = vld [vmem:[#allocation26 + $0x98] sm:$0xf]
    %v6502 = vld [vmem:[#allocation26 + $0x9c] sm:$0xf]
    %v6503 = vld [vmem:[#allocation26 + $0xa0] sm:$0xf]
    %v6504 = vld [vmem:[#allocation26 + $0xa4] sm:$0xf]
    %v6505 = vld [vmem:[#allocation26 + $0xa8] sm:$0xf]
    %v6506 = vld [vmem:[#allocation26 + $0xac] sm:$0xf]
    %v6507 = vld [vmem:[#allocation26 + $0xb0] sm:$0xf]
    %v6508 = vld [vmem:[#allocation26 + $0xb4] sm:$0xf]
    %v6509 = vld [vmem:[#allocation26 + $0xb8] sm:$0xf]
    %v6510 = vld [vmem:[#allocation26 + $0xbc] sm:$0xf]
    %v6511 = vld [vmem:[#allocation26 + $0xc0] sm:$0xf]
    %v6512 = vld [vmem:[#allocation26 + $0xc4] sm:$0xf]
    %v6513 = vld [vmem:[#allocation26 + $0xc8] sm:$0xf]
    %v6514 = vld [vmem:[#allocation26 + $0xcc] sm:$0xf]
    %v6515 = vld [vmem:[#allocation26 + $0xd0] sm:$0xf]
    %v6516 = vld [vmem:[#allocation26 + $0xd4] sm:$0xf]
    %v6517 = vld [vmem:[#allocation26 + $0xd8] sm:$0xf]
    %v6518 = vld [vmem:[#allocation26 + $0xdc] sm:$0xf]
    %v6519 = vld [vmem:[#allocation26 + $0xe0] sm:$0xf]
    %v6520 = vld [vmem:[#allocation26 + $0xe4] sm:$0xf]
    %v6521 = vld [vmem:[#allocation26 + $0xe8] sm:$0xf]
    %v6522 = vld [vmem:[#allocation26 + $0xec] sm:$0xf]
    %v6523 = vld [vmem:[#allocation26 + $0xf0] sm:$0xf]
    %v6524 = vld [vmem:[#allocation26 + $0xf4] sm:$0xf]
    %v6525 = vld [vmem:[#allocation26 + $0xf8] sm:$0xf]
    %v6526 = vld [vmem:[#allocation26 + $0xfc] sm:$0xf]
    %v6527 = vld [vmem:[#allocation26 + $0x100] sm:$0xf]
    %v6528 = vld [vmem:[#allocation26 + $0x104] sm:$0xf]
    %v6529 = vld [vmem:[#allocation26 + $0x108] sm:$0xf]
    %v6530 = vld [vmem:[#allocation26 + $0x10c] sm:$0xf]
    %v6531 = vld [vmem:[#allocation26 + $0x110] sm:$0xf]
    %v6532 = vld [vmem:[#allocation26 + $0x114] sm:$0xf]
    %v6533 = vld [vmem:[#allocation26 + $0x118] sm:$0xf]
    %v6534 = vld [vmem:[#allocation26 + $0x11c] sm:$0xf]
    %v6535 = vld [vmem:[#allocation26 + $0x120] sm:$0xf]
    %v6536 = vld [vmem:[#allocation26 + $0x124] sm:$0xf]
    %v6537 = vld [vmem:[#allocation26 + $0x128] sm:$0xf]
    %v6538 = vld [vmem:[#allocation26 + $0x12c] sm:$0xf]
    %v6539 = vld [vmem:[#allocation26 + $0x130] sm:$0xf]
    %v6540 = vld [vmem:[#allocation26 + $0x134] sm:$0xf]
    %v6541 = vld [vmem:[#allocation26 + $0x138] sm:$0xf]
    %v6542 = vld [vmem:[#allocation26 + $0x13c] sm:$0xf]
    %v6543 = vld [vmem:[#allocation26 + $0x140] sm:$0xf]
    %v6544 = vld [vmem:[#allocation26 + $0x144] sm:$0xf]
    %v6545 = vld [vmem:[#allocation26 + $0x148] sm:$0xf]
    %v6546 = vld [vmem:[#allocation26 + $0x14c] sm:$0xf]
    %v6547 = vld [vmem:[#allocation26 + $0x150] sm:$0xf]
    %v6548 = vld [vmem:[#allocation26 + $0x154] sm:$0xf]
    %v6549 = vld [vmem:[#allocation26 + $0x158] sm:$0xf]
    %v6550 = vld [vmem:[#allocation26 + $0x15c] sm:$0xf]
    %v6551 = vld [vmem:[#allocation26 + $0x160] sm:$0xf]
    %v6552 = vld [vmem:[#allocation26 + $0x164] sm:$0xf]
    %v6553 = vld [vmem:[#allocation26 + $0x168] sm:$0xf]
    %v6554 = vld [vmem:[#allocation26 + $0x16c] sm:$0xf]
    %v6555 = vld [vmem:[#allocation26 + $0x170] sm:$0xf]
    %v6556 = vld [vmem:[#allocation26 + $0x174] sm:$0xf]
    %v6557 = vld [vmem:[#allocation26 + $0x178] sm:$0xf]
    %v6558 = vld [vmem:[#allocation26 + $0x17c] sm:$0xf]
    %v6559 = vld [vmem:[#allocation28] sm:$0x1]
    %v6561 = vlaneseq
    %v6562 = vshrl.u32 %v6561, 7
    %v6563 = vsub.s32 0, %v6562
    %v6564 = vrot.slane %v6559, %v6563
    %v6662 = vunpack.c.l.b16 %v6463
    %v6663 = vunpack.c.l.b16 %v6464
    %v6664 = vunpack.c.l.b16 %v6465
    %v6665 = vunpack.c.l.b16 %v6466
    %v6666 = vunpack.c.l.b16 %v6467
    %v6667 = vunpack.c.l.b16 %v6468
    %v6668 = vunpack.c.l.b16 %v6469
    %v6669 = vunpack.c.l.b16 %v6470
    %v6670 = vunpack.c.l.b16 %v6471
    %v6671 = vunpack.c.l.b16 %v6472
    %v6672 = vunpack.c.l.b16 %v6473
    %v6673 = vunpack.c.l.b16 %v6474
    %v6674 = vunpack.c.l.b16 %v6475
    %v6675 = vunpack.c.l.b16 %v6476
    %v6676 = vunpack.c.l.b16 %v6477
    %v6677 = vunpack.c.l.b16 %v6478
    %v6678 = vunpack.c.l.b16 %v6479
    %v6679 = vunpack.c.l.b16 %v6480
    %v6680 = vunpack.c.l.b16 %v6481
    %v6681 = vunpack.c.l.b16 %v6482
    %v6682 = vunpack.c.l.b16 %v6483
    %v6683 = vunpack.c.l.b16 %v6484
    %v6684 = vunpack.c.l.b16 %v6485
    %v6685 = vunpack.c.l.b16 %v6486
    %v6686 = vunpack.c.l.b16 %v6487
    %v6687 = vunpack.c.l.b16 %v6488
    %v6688 = vunpack.c.l.b16 %v6489
    %v6689 = vunpack.c.l.b16 %v6490
    %v6690 = vunpack.c.l.b16 %v6491
    %v6691 = vunpack.c.l.b16 %v6492
    %v6692 = vunpack.c.l.b16 %v6493
    %v6693 = vunpack.c.l.b16 %v6494
    %v6694 = vunpack.c.l.b16 %v6495
    %v6695 = vunpack.c.l.b16 %v6496
    %v6696 = vunpack.c.l.b16 %v6497
    %v6697 = vunpack.c.l.b16 %v6498
    %v6698 = vunpack.c.l.b16 %v6499
    %v6699 = vunpack.c.l.b16 %v6500
    %v6700 = vunpack.c.l.b16 %v6501
    %v6701 = vunpack.c.l.b16 %v6502
    %v6702 = vunpack.c.l.b16 %v6503
    %v6703 = vunpack.c.l.b16 %v6504
    %v6704 = vunpack.c.l.b16 %v6505
    %v6705 = vunpack.c.l.b16 %v6506
    %v6706 = vunpack.c.l.b16 %v6507
    %v6707 = vunpack.c.l.b16 %v6508
    %v6708 = vunpack.c.l.b16 %v6509
    %v6709 = vunpack.c.l.b16 %v6510
    %v6710 = vunpack.c.l.b16 %v6511
    %v6711 = vunpack.c.l.b16 %v6512
    %v6712 = vunpack.c.l.b16 %v6513
    %v6713 = vunpack.c.l.b16 %v6514
    %v6714 = vunpack.c.l.b16 %v6515
    %v6715 = vunpack.c.l.b16 %v6516
    %v6716 = vunpack.c.l.b16 %v6517
    %v6717 = vunpack.c.l.b16 %v6518
    %v6718 = vunpack.c.l.b16 %v6519
    %v6719 = vunpack.c.l.b16 %v6520
    %v6720 = vunpack.c.l.b16 %v6521
    %v6721 = vunpack.c.l.b16 %v6522
    %v6722 = vunpack.c.l.b16 %v6523
    %v6723 = vunpack.c.l.b16 %v6524
    %v6724 = vunpack.c.l.b16 %v6525
    %v6725 = vunpack.c.l.b16 %v6526
    %v6726 = vunpack.c.l.b16 %v6527
    %v6727 = vunpack.c.l.b16 %v6528
    %v6728 = vunpack.c.l.b16 %v6529
    %v6729 = vunpack.c.l.b16 %v6530
    %v6730 = vunpack.c.l.b16 %v6531
    %v6731 = vunpack.c.l.b16 %v6532
    %v6732 = vunpack.c.l.b16 %v6533
    %v6733 = vunpack.c.l.b16 %v6534
    %v6734 = vunpack.c.l.b16 %v6535
    %v6735 = vunpack.c.l.b16 %v6536
    %v6736 = vunpack.c.l.b16 %v6537
    %v6737 = vunpack.c.l.b16 %v6538
    %v6738 = vunpack.c.l.b16 %v6539
    %v6739 = vunpack.c.l.b16 %v6540
    %v6740 = vunpack.c.l.b16 %v6541
    %v6741 = vunpack.c.l.b16 %v6542
    %v6742 = vunpack.c.l.b16 %v6543
    %v6743 = vunpack.c.l.b16 %v6544
    %v6744 = vunpack.c.l.b16 %v6545
    %v6745 = vunpack.c.l.b16 %v6546
    %v6746 = vunpack.c.l.b16 %v6547
    %v6747 = vunpack.c.l.b16 %v6548
    %v6748 = vunpack.c.l.b16 %v6549
    %v6749 = vunpack.c.l.b16 %v6550
    %v6750 = vunpack.c.l.b16 %v6551
    %v6751 = vunpack.c.l.b16 %v6552
    %v6752 = vunpack.c.l.b16 %v6553
    %v6753 = vunpack.c.l.b16 %v6554
    %v6754 = vunpack.c.l.b16 %v6555
    %v6755 = vunpack.c.l.b16 %v6556
    %v6756 = vunpack.c.l.b16 %v6557
    %v6757 = vunpack.c.l.b16 %v6558
    %v6758 = vpack.c.b16 %v6663, %v6662
    %v6759 = vpack.c.b16 %v6665, %v6664
    %v6760 = vpack.c.b16 %v6667, %v6666
    %v6761 = vpack.c.b16 %v6669, %v6668
    %v6762 = vpack.c.b16 %v6671, %v6670
    %v6763 = vpack.c.b16 %v6673, %v6672
    %v6764 = vpack.c.b16 %v6675, %v6674
    %v6765 = vpack.c.b16 %v6677, %v6676
    %v6766 = vpack.c.b16 %v6679, %v6678
    %v6767 = vpack.c.b16 %v6681, %v6680
    %v6768 = vpack.c.b16 %v6683, %v6682
    %v6769 = vpack.c.b16 %v6685, %v6684
    %v6770 = vpack.c.b16 %v6687, %v6686
    %v6771 = vpack.c.b16 %v6689, %v6688
    %v6772 = vpack.c.b16 %v6691, %v6690
    %v6773 = vpack.c.b16 %v6693, %v6692
    %v6774 = vpack.c.b16 %v6695, %v6694
    %v6775 = vpack.c.b16 %v6697, %v6696
    %v6776 = vpack.c.b16 %v6699, %v6698
    %v6777 = vpack.c.b16 %v6701, %v6700
    %v6778 = vpack.c.b16 %v6703, %v6702
    %v6779 = vpack.c.b16 %v6705, %v6704
    %v6780 = vpack.c.b16 %v6707, %v6706
    %v6781 = vpack.c.b16 %v6709, %v6708
    %v6782 = vpack.c.b16 %v6711, %v6710
    %v6783 = vpack.c.b16 %v6713, %v6712
    %v6784 = vpack.c.b16 %v6715, %v6714
    %v6785 = vpack.c.b16 %v6717, %v6716
    %v6786 = vpack.c.b16 %v6719, %v6718
    %v6787 = vpack.c.b16 %v6721, %v6720
    %v6788 = vpack.c.b16 %v6723, %v6722
    %v6789 = vpack.c.b16 %v6725, %v6724
    %v6790 = vpack.c.b16 %v6727, %v6726
    %v6791 = vpack.c.b16 %v6729, %v6728
    %v6792 = vpack.c.b16 %v6731, %v6730
    %v6793 = vpack.c.b16 %v6733, %v6732
    %v6794 = vpack.c.b16 %v6735, %v6734
    %v6795 = vpack.c.b16 %v6737, %v6736
    %v6796 = vpack.c.b16 %v6739, %v6738
    %v6797 = vpack.c.b16 %v6741, %v6740
    %v6798 = vpack.c.b16 %v6743, %v6742
    %v6799 = vpack.c.b16 %v6745, %v6744
    %v6800 = vpack.c.b16 %v6747, %v6746
    %v6801 = vpack.c.b16 %v6749, %v6748
    %v6802 = vpack.c.b16 %v6751, %v6750
    %v6803 = vpack.c.b16 %v6753, %v6752
    %v6804 = vpack.c.b16 %v6755, %v6754
    %v6805 = vpack.c.b16 %v6757, %v6756
    %6854 = vmatprep.subr.bf16.mxu0 0
    %6855 = vmatpush1.bf16.msra.mxu0 %v6765
    %6856 = vmatprep.subr.bf16.mxu0 0
    %6857 = vmatpush1.bf16.msra.mxu0 %v6764
    %6858 = vmatprep.subr.bf16.mxu0 0
    %6859 = vmatpush1.bf16.msra.mxu0 %v6763
    %6860 = vmatprep.subr.bf16.mxu0 0
    %6861 = vmatpush1.bf16.msra.mxu0 %v6762
    %6862 = vmatprep.subr.bf16.mxu0 0
    %6863 = vmatpush1.bf16.msra.mxu0 %v6761
    %6864 = vmatprep.subr.bf16.mxu0 0
    %6865 = vmatpush1.bf16.msra.mxu0 %v6760
    %6866 = vmatprep.subr.bf16.mxu0 0
    %6867 = vmatpush1.bf16.msra.mxu0 %v6759
    %6868 = vmatprep.subr.bf16.mxu0 0
    %6869 = vmatpush1.bf16.msra.mxu0 %v6758
    %6870 = vmatprep.subr.bf16.mxu0 0
    %6871 = vmatpush2.bf16.msra.mxu0 %v6773
    %6872 = vmatprep.subr.bf16.mxu0 0
    %6873 = vmatpush2.bf16.msra.mxu0 %v6772
    %6874 = vmatprep.subr.bf16.mxu0 0
    %6875 = vmatpush2.bf16.msra.mxu0 %v6771
    %6876 = vmatprep.subr.bf16.mxu0 0
    %6877 = vmatpush2.bf16.msra.mxu0 %v6770
    %6878 = vmatprep.subr.bf16.mxu0 0
    %6879 = vmatpush2.bf16.msra.mxu0 %v6769
    %6880 = vmatprep.subr.bf16.mxu0 0
    %6881 = vmatpush2.bf16.msra.mxu0 %v6768
    %6882 = vmatprep.subr.bf16.mxu0 0
    %6883 = vmatpush2.bf16.msra.mxu0 %v6767
    %6884 = vmatprep.subr.bf16.mxu0 0
    %6885 = vmatpush2.bf16.msra.mxu0 %v6766
    %6886 = vmatprep.mubr.bf16.mxu0 %v6458
    %6887 = vmatmul.mubr.bf16.gmra.mxu0 %v6457
    %v6888 = vpop.f32.mrf.mxu0
    %v6889 = vadd.f32 %v6564, %v6888
    %v6890 = vpop.f32.mrf.mxu0
    %v6891 = vpop.f32.mrf.mxu0
    %v6892 = vadd.f32 %v6564, %v6891
    %v6893 = vpop.f32.mrf.mxu0
    %6894 = vdwg.mxu0
    %6895 = vmatprep.subr.bf16.mxu0 0
    %6896 = vmatpush1.bf16.msra.mxu0 %v6781
    %6897 = vmatprep.subr.bf16.mxu0 0
    %6898 = vmatpush1.bf16.msra.mxu0 %v6780
    %6899 = vmatprep.subr.bf16.mxu0 0
    %6900 = vmatpush1.bf16.msra.mxu0 %v6779
    %6901 = vmatprep.subr.bf16.mxu0 0
    %6902 = vmatpush1.bf16.msra.mxu0 %v6778
    %6903 = vmatprep.subr.bf16.mxu0 0
    %6904 = vmatpush1.bf16.msra.mxu0 %v6777
    %6905 = vmatprep.subr.bf16.mxu0 0
    %6906 = vmatpush1.bf16.msra.mxu0 %v6776
    %6907 = vmatprep.subr.bf16.mxu0 0
    %6908 = vmatpush1.bf16.msra.mxu0 %v6775
    %6909 = vmatprep.subr.bf16.mxu0 0
    %6910 = vmatpush1.bf16.msra.mxu0 %v6774
    %6911 = vmatprep.subr.bf16.mxu0 0
    %6912 = vmatpush2.bf16.msra.mxu0 %v6789
    %6913 = vmatprep.subr.bf16.mxu0 0
    %6914 = vmatpush2.bf16.msra.mxu0 %v6788
    %6915 = vmatprep.subr.bf16.mxu0 0
    %6916 = vmatpush2.bf16.msra.mxu0 %v6787
    %6917 = vmatprep.subr.bf16.mxu0 0
    %6918 = vmatpush2.bf16.msra.mxu0 %v6786
    %6919 = vmatprep.subr.bf16.mxu0 0
    %6920 = vmatpush2.bf16.msra.mxu0 %v6785
    %6921 = vmatprep.subr.bf16.mxu0 0
    %6922 = vmatpush2.bf16.msra.mxu0 %v6784
    %6923 = vmatprep.subr.bf16.mxu0 0
    %6924 = vmatpush2.bf16.msra.mxu0 %v6783
    %6925 = vmatprep.subr.bf16.mxu0 0
    %6926 = vmatpush2.bf16.msra.mxu0 %v6782
    %6927 = vmatprep.mubr.bf16.mxu0 %v6460
    %6928 = vmatmul.mubr.bf16.gmra.mxu0 %v6459
    %v6929 = vpop.f32.mrf.mxu0
    %v6930 = vadd.f32 %v6889, %v6929
    %v6931 = vpop.f32.mrf.mxu0
    %v6932 = vpop.f32.mrf.mxu0
    %v6933 = vadd.f32 %v6892, %v6932
    %v6934 = vpop.f32.mrf.mxu0
    %6935 = vdwg.mxu0
    %6936 = vmatprep.subr.bf16.mxu0 0
    %6937 = vmatpush1.bf16.msra.mxu0 %v6797
    %6938 = vmatprep.subr.bf16.mxu0 0
    %6939 = vmatpush1.bf16.msra.mxu0 %v6796
    %6940 = vmatprep.subr.bf16.mxu0 0
    %6941 = vmatpush1.bf16.msra.mxu0 %v6795
    %6942 = vmatprep.subr.bf16.mxu0 0
    %6943 = vmatpush1.bf16.msra.mxu0 %v6794
    %6944 = vmatprep.subr.bf16.mxu0 0
    %6945 = vmatpush1.bf16.msra.mxu0 %v6793
    %6946 = vmatprep.subr.bf16.mxu0 0
    %6947 = vmatpush1.bf16.msra.mxu0 %v6792
    %6948 = vmatprep.subr.bf16.mxu0 0
    %6949 = vmatpush1.bf16.msra.mxu0 %v6791
    %6950 = vmatprep.subr.bf16.mxu0 0
    %6951 = vmatpush1.bf16.msra.mxu0 %v6790
    %6952 = vmatprep.subr.bf16.mxu0 0
    %6953 = vmatpush2.bf16.msra.mxu0 %v6805
    %6954 = vmatprep.subr.bf16.mxu0 0
    %6955 = vmatpush2.bf16.msra.mxu0 %v6804
    %6956 = vmatprep.subr.bf16.mxu0 0
    %6957 = vmatpush2.bf16.msra.mxu0 %v6803
    %6958 = vmatprep.subr.bf16.mxu0 0
    %6959 = vmatpush2.bf16.msra.mxu0 %v6802
    %6960 = vmatprep.subr.bf16.mxu0 0
    %6961 = vmatpush2.bf16.msra.mxu0 %v6801
    %6962 = vmatprep.subr.bf16.mxu0 0
    %6963 = vmatpush2.bf16.msra.mxu0 %v6800
    %6964 = vmatprep.subr.bf16.mxu0 0
    %6965 = vmatpush2.bf16.msra.mxu0 %v6799
    %6966 = vmatprep.subr.bf16.mxu0 0
    %6967 = vmatpush2.bf16.msra.mxu0 %v6798
    %6968 = vmatprep.mubr.bf16.mxu0 %v6462
    %6969 = vmatmul.mubr.bf16.gmra.mxu0 %v6461
    %v6970 = vpop.f32.mrf.mxu0
    %v6971 = vadd.f32 %v6930, %v6970
    %v6972 = vpop.f32.mrf.mxu0
    %v6973 = vpop.f32.mrf.mxu0
    %v6974 = vadd.f32 %v6933, %v6973
    %v6975 = vpop.f32.mrf.mxu0
    %6976 = vdwg.mxu0
    %v6977 = vld [vmem:[#allocation7] sm:$0x1]
    %v6978 = vtanh.pop %v6971
    %v6979 = vtanh.pop %v6974
    %v6981 = vlaneseq
    %v6982 = vshrl.u32 %v6981, 7
    %v6983 = vsub.s32 0, %v6982
    %v6984 = vrot.slane %v6977, %v6983
    %v6986 = vmul.f32 %v6984, %v6978
    %v6987 = vmul.f32 %v6984, %v6979
    %6988 = vst [vmem:[#allocation29] sm:$0xff] %v6986
    %6989 = vst [vmem:[#allocation29 + $0x8] sm:$0xff] %v3597
    %6990 = vst [vmem:[#allocation29 + $0x10] sm:$0xff] %v3610
    %6991 = vst [vmem:[#allocation29 + $0x18] sm:$0xff] %v6987
    %6992 = vst [vmem:[#allocation29 + $0x20] sm:$0xff] %v3601
    %6993 = vst [vmem:[#allocation29 + $0x28] sm:$0xff] %v3612
    // Predicated region
    $region142: #{tpu_custom_call.1} parent=1 // pred_check
      _
    $region143: #{tpu_custom_call.1} parent=1 // pred_check_branch
      %6995 = sbr.rel (0) target = $region145
    $region144: #{tpu_custom_call.1} parent=1 // pred_region
      %s6997 = ssub.s32 768, 768
      %6998 = vsyncadd [#allocation4], %s6997
      %s6999 = sshll.u32 [#allocation29], 4
      %s7000 = int_to_ptr.vmem [resolvable:$true] %s6999
      %7005 = dma.vmem_to_hbm [thread:$0]  %s7000, 768, %s18, [#allocation4], 384, 384, 24
    $region145: #{tpu_custom_call.1} parent=1 // pred_fallthru
      _
    // Predicated region
    $region146: #{tpu_custom_call.1} parent=1 // pred_check
      _
    $region147: #{tpu_custom_call.1} parent=1 // pred_check_branch
      %7007 = sbr.rel (0) target = $region149
    $region148: #{tpu_custom_call.1} parent=1 // pred_region
      %7008 = dma.done [#allocation4], 768
    $region149: #{tpu_custom_call.1} parent=1 // pred_fallthru
      _
    %7009 = vsyncpa [#allocation3], 1
    %7010 = vsyncpa [#allocation6], 1
    %7011 = vsyncpa [#allocation9], 1
    %7012 = vsyncpa [#allocation12], 1
    %7013 = vsyncpa [#allocation15], 1
    %7014 = vsyncpa [#allocation18], 1
    %7015 = vsyncpa [#allocation21], 1
    %7016 = vsyncpa [#allocation24], 1
    %7017 = vsyncpa [#allocation27], 1
    %7018 = vsyncpa [#allocation4], 1

</llo_original>
